<compile_context>
chip_gen: v7x
topology: tpu7x:2x2x1
jax: 0.10.0
libtpu: 0.0.40
codegen_flags: <defaults>
</compile_context>

<pallas_src>
import functools

import jax
import jax.numpy as jnp
from jax import lax
from jax.experimental import pallas as pl
from jax.experimental.pallas import tpu as pltpu

EPS = 1e-5


# ---------------------------------------------------------------------------
# Fused conv (+ input BN/ReLU) Pallas kernel
# ---------------------------------------------------------------------------
def conv_bn_fused_kernel(x_ref, w_ref, b_ref, sc_ref, sh_ref,
                         y_ref, psum_ref, pssq_ref, xp_ref,
                         *, ksize, pad, apply_input_bnrelu, apply_bias):
    """One image per grid step (grid axis = batch, 'parallel').

    x_ref    : (1, H, W, Cin)         bf16  raw previous conv output / model input
    w_ref    : (K, K, Cin, Cout)      bf16
    b_ref    : (1, Cout)              f32   conv bias (used only when apply_bias)
    sc_ref   : (1, Cin)               f32   fused input-BN scale = gamma / sqrt(var+eps)
    sh_ref   : (1, Cin)               f32   fused input-BN shift = beta - mean * scale
    y_ref    : (1, H*W, Cout)         bf16  raw conv output (pre-BN)
    psum_ref : (1, 1, Cout)           f32   per-image sum over H*W     (BN stats)
    pssq_ref : (1, 1, Cout)           f32   per-image sum of squares   (BN stats)
    xp_ref   : VMEM (H+2p, W+2p, Cin) f32   zero-padded activation scratch
    """
    H, W, Cin = x_ref.shape[1], x_ref.shape[2], x_ref.shape[3]
    Cout = w_ref.shape[3]

    # --- fused BN(train-stats) + ReLU of the *previous* layer ---------------
    x = x_ref[0].astype(jnp.float32)                       # (H, W, Cin)
    if apply_input_bnrelu:
        x = jnp.maximum(x * sc_ref[...] + sh_ref[...], 0.0)

    # --- zero-padded activation held in VMEM (no im2col through HBM) --------
    xp_ref[...] = jnp.zeros(xp_ref.shape, xp_ref.dtype)
    xp_ref[pad:pad + H, pad:pad + W, :] = x.astype(xp_ref.dtype)

    # --- conv = K*K shifted-slice matmuls, bf16 MXU, f32 accumulation -------
    acc = jnp.zeros((H * W, Cout), jnp.float32)
    for kh in range(ksize):
        for kw in range(ksize):
            lhs = xp_ref[kh:kh + H, kw:kw + W, :].reshape(H * W, Cin)
            acc = acc + jnp.dot(lhs.astype(jnp.bfloat16), w_ref[kh, kw],
                                preferred_element_type=jnp.float32)
    if apply_bias:
        acc = acc + b_ref[...]

    # --- per-image BN partial statistics (reduced across N in the wrapper) --
    psum_ref[0] = jnp.sum(acc, axis=0, keepdims=True)
    pssq_ref[0] = jnp.sum(acc * acc, axis=0, keepdims=True)

    y_ref[0] = acc.astype(y_ref.dtype)


# ---------------------------------------------------------------------------
# Pallas wrapper for one conv layer
# ---------------------------------------------------------------------------
# TODO(synk): for production-size images, tile H*W (and Cout / the K*K taps)
#             so one block stays under v7x's 64 MiB VMEM; whole-image blocks
#             are fine at these toy shapes.
def pallas_conv_layer(x_nhwc, w, b, in_scale, in_shift, *, ksize,
                      apply_input_bnrelu, apply_bias):
    N, H, W, Cin = x_nhwc.shape
    Cout = w.shape[-1]
    pad = (ksize - 1) // 2
    Hp, Wp = H + 2 * pad, W + 2 * pad

    kernel = functools.partial(
        conv_bn_fused_kernel, ksize=ksize, pad=pad,
        apply_input_bnrelu=apply_input_bnrelu, apply_bias=apply_bias)

    y, psum, pssq = pl.pallas_call(
        kernel,
        out_shape=(
            jax.ShapeDtypeStruct((N, H * W, Cout), jnp.bfloat16),
            jax.ShapeDtypeStruct((N, 1, Cout), jnp.float32),
            jax.ShapeDtypeStruct((N, 1, Cout), jnp.float32),
        ),
        grid_spec=pltpu.PrefetchScalarGridSpec(
            num_scalar_prefetch=0,
            grid=(N,),
            in_specs=[
                pl.BlockSpec((1, H, W, Cin), lambda n: (n, 0, 0, 0)),
                pl.BlockSpec((ksize, ksize, Cin, Cout), lambda n: (0, 0, 0, 0)),
                pl.BlockSpec((1, Cout), lambda n: (0, 0)),
                pl.BlockSpec((1, Cin), lambda n: (0, 0)),
                pl.BlockSpec((1, Cin), lambda n: (0, 0)),
            ],
            out_specs=[
                pl.BlockSpec((1, H * W, Cout), lambda n: (n, 0, 0)),
                pl.BlockSpec((1, 1, Cout), lambda n: (n, 0, 0)),
                pl.BlockSpec((1, 1, Cout), lambda n: (n, 0, 0)),
            ],
            scratch_shapes=[pltpu.VMEM((Hp, Wp, Cin), jnp.float32)],
        ),
        compiler_params=pltpu.CompilerParams(
            dimension_semantics=("parallel",)),
    )(
        x_nhwc.astype(jnp.bfloat16),
        w.astype(jnp.bfloat16),
        b.reshape(1, Cout).astype(jnp.float32),
        in_scale.reshape(1, Cin).astype(jnp.float32),
        in_shift.reshape(1, Cin).astype(jnp.float32),
    )
    return y, psum, pssq


# ---------------------------------------------------------------------------
# Full model forward (Pallas)
# ---------------------------------------------------------------------------
def mlp_forward_pallas(x_nchw, layers):
    x = jnp.transpose(x_nchw, (0, 2, 3, 1)).astype(jnp.bfloat16)   # NCHW -> NHWC
    N = x.shape[0]
    in_scale = jnp.ones((x.shape[-1],), jnp.float32)
    in_shift = jnp.zeros((x.shape[-1],), jnp.float32)
    apply_in_bnrelu = False

    for layer in layers:
        ksize = layer["ksize"]
        H, W = x.shape[1], x.shape[2]
        Cout = layer["w"].shape[-1]

        y_flat, psum, pssq = pallas_conv_layer(
            x, layer["w"], layer["b"], in_scale, in_shift,
            ksize=ksize, apply_input_bnrelu=apply_in_bnrelu,
            apply_bias=not layer["bn"])

        if layer["bn"]:
            # Training-mode batch statistics from the per-image partial sums.
            count = N * H * W
            s = jnp.sum(psum, axis=(0, 1))                  # (Cout,)
            ss = jnp.sum(pssq, axis=(0, 1))
            mean = s / count
            var = jnp.maximum(ss / count - mean * mean, 0.0)  # biased (PyTorch train)
            in_scale = layer["gamma"] / jnp.sqrt(var + EPS)
            in_shift = layer["beta"] - mean * in_scale
            apply_in_bnrelu = True                          # fused into next conv
        else:
            in_scale = jnp.ones((Cout,), jnp.float32)
            in_shift = jnp.zeros((Cout,), jnp.float32)
            apply_in_bnrelu = False

        x = y_flat.reshape(N, H, W, Cout)

    return jnp.transpose(x, (0, 3, 1, 2)).astype(jnp.float32)      # -> NCHW f32


# ---------------------------------------------------------------------------
# Pure-JAX reference (mirrors PyTorch semantics, training-mode BatchNorm)
# ---------------------------------------------------------------------------
def mlp_forward_ref(x_nchw, layers):
    x = jnp.transpose(x_nchw, (0, 2, 3, 1)).astype(jnp.float32)
    for layer in layers:
        ksize = layer["ksize"]
        pad = (ksize - 1) // 2
        x = lax.conv_general_dilated(
            x, layer["w"], (1, 1), [(pad, pad), (pad, pad)],
            dimension_numbers=("NHWC", "HWIO", "NHWC")) + layer["b"]
        if layer["bn"]:
            mean = jnp.mean(x, axis=(0, 1, 2))
            var = jnp.mean((x - mean) ** 2, axis=(0, 1, 2))
            x = (x - mean) / jnp.sqrt(var + EPS) * layer["gamma"] + layer["beta"]
            x = jnp.maximum(x, 0.0)
    return jnp.transpose(x, (0, 3, 1, 2))


# ---------------------------------------------------------------------------
# Deterministic parameter construction
# ---------------------------------------------------------------------------
def make_params(key, input_dim, output_dim, hidden_dim, n_layers, kernel_size):
    layers = []

    def conv_params(key, k, cin, cout):
        kw_, kb_ = jax.random.split(key)
        scale = 1.0 / jnp.sqrt(k * k * cin)
        w = jax.random.normal(kw_, (k, k, cin, cout), jnp.float32) * scale
        b = jax.random.normal(kb_, (cout,), jnp.float32) * scale
        return w, b

    def bn_params(key, c):
        kg, kb = jax.random.split(key)
        gamma = 1.0 + 0.1 * jax.random.normal(kg, (c,), jnp.float32)
        beta = 0.1 * jax.random.normal(kb, (c,), jnp.float32)
        return gamma, beta

    keys = jax.random.split(key, 2 * (n_layers + 2))
    ki = iter(keys)

    # first conv + BN + ReLU  (uses kernel_size)
    w, b = conv_params(next(ki), kernel_size, input_dim, hidden_dim)
    g, be = bn_params(next(ki), hidden_dim)
    layers.append(dict(ksize=kernel_size, w=w, b=b, bn=True, gamma=g, beta=be))

    # hidden conv_layer blocks (always kernel 3, pad 1)
    for _ in range(n_layers):
        w, b = conv_params(next(ki), 3, hidden_dim, hidden_dim)
        g, be = bn_params(next(ki), hidden_dim)
        layers.append(dict(ksize=3, w=w, b=b, bn=True, gamma=g, beta=be))

    # final conv (no BN / ReLU)
    w, b = conv_params(next(ki), kernel_size, hidden_dim, output_dim)
    layers.append(dict(ksize=kernel_size, w=w, b=b, bn=False, gamma=None, beta=None))
    return layers


# ---------------------------------------------------------------------------
if __name__ == "__main__":
    # Small shapes consistent with the module's forward (batch x channels x H x W)
    batch, input_dim, output_dim, hidden_dim = 2, 4, 8, 32
    n_layers, kernel_size = 2, 3
    H = W = 16

    key = jax.random.PRNGKey(0)
    kx, kp = jax.random.split(key)
    x = jax.random.normal(kx, (batch, input_dim, H, W), jnp.float32)
    layers = make_params(kp, input_dim, output_dim, hidden_dim, n_layers, kernel_size)

    out = mlp_forward_pallas(x, layers)
    out = jax.block_until_ready(out)

    ref = mlp_forward_ref(x, layers)
    assert out.shape == (batch, output_dim, H, W), out.shape
    max_err = float(jnp.max(jnp.abs(out - ref)))
    ref_scale = float(jnp.max(jnp.abs(ref)))
    # bf16 activations/weights with f32 accumulation -> small relative error.
    assert max_err <= 5e-2 * (ref_scale + 1.0), (
        f"mismatch vs reference: max_err={max_err}, ref_scale={ref_scale}")

    print("KERNEL_OK")
</pallas_src>

<mosaic_0001>
module attributes {stable_mosaic.version = 11 : i64} {
  func.func @conv_bn_fused_kernel(%arg0: i32, %arg1: memref<1x16x16x4xbf16, #tpu.memory_space<vmem>>, %arg2: memref<3x3x4x32xbf16, #tpu.memory_space<vmem>>, %arg3: memref<1x32xf32, #tpu.memory_space<vmem>>, %arg4: memref<1x4xf32, #tpu.memory_space<vmem>>, %arg5: memref<1x4xf32, #tpu.memory_space<vmem>>, %arg6: memref<1x256x32xbf16, #tpu.memory_space<vmem>>, %arg7: memref<1x1x32xf32, #tpu.memory_space<vmem>>, %arg8: memref<1x1x32xf32, #tpu.memory_space<vmem>>, %arg9: memref<18x18x4xf32, #tpu.memory_space<vmem>>) attributes {dimension_semantics = [#tpu.dimension_semantics<parallel>], iteration_bounds = array<i64: 2>, scalar_prefetch = 0 : i64, scratch_operands = 1 : i64, tpu.core_type = #tpu.core_type<tc>, window_params = [{transform_indices = @transform_0, window_bounds = array<i64: 1, 16, 16, 4>}, {pipeline_mode = #tpu.pipeline_mode<synchronous>, transform_indices = @transform_1, window_bounds = array<i64: 3, 3, 4, 32>}, {pipeline_mode = #tpu.pipeline_mode<synchronous>, transform_indices = @transform_2, window_bounds = array<i64: 1, 32>}, {pipeline_mode = #tpu.pipeline_mode<synchronous>, transform_indices = @transform_3, window_bounds = array<i64: 1, 4>}, {pipeline_mode = #tpu.pipeline_mode<synchronous>, transform_indices = @transform_4, window_bounds = array<i64: 1, 4>}, {transform_indices = @transform_5, window_bounds = array<i64: 1, 256, 32>}, {transform_indices = @transform_6, window_bounds = array<i64: 1, 1, 32>}, {transform_indices = @transform_7, window_bounds = array<i64: 1, 1, 32>}]} {
    %c0 = arith.constant 0 : index
    %c0_0 = arith.constant 0 : index
    %c0_1 = arith.constant 0 : index
    %c0_2 = arith.constant 0 : index
    %0 = vector.load %arg1[%c0, %c0_0, %c0_1, %c0_2] : memref<1x16x16x4xbf16, #tpu.memory_space<vmem>>, vector<1x16x16x4xbf16>
    %1 = vector.shape_cast %0 : vector<1x16x16x4xbf16> to vector<16x16x4xbf16>
    %2 = arith.extf %1 : vector<16x16x4xbf16> to vector<16x16x4xf32>
    %cst = arith.constant 0.000000e+00 : f32
    %3 = vector.broadcast %cst : f32 to vector<18x18x4xf32>
    %c0_3 = arith.constant 0 : index
    %c0_4 = arith.constant 0 : index
    %c0_5 = arith.constant 0 : index
    %4 = vector.load %arg9[%c0_3, %c0_4, %c0_5] : memref<18x18x4xf32, #tpu.memory_space<vmem>>, vector<18x18x4xf32>
    tpu.vector_store %arg9[%c0_3, %c0_4, %c0_5], %3 {strides = array<i32>} : memref<18x18x4xf32, #tpu.memory_space<vmem>>, vector<18x18x4xf32>,
    %c1 = arith.constant 1 : index
    %c1_6 = arith.constant 1 : index
    %c0_7 = arith.constant 0 : index
    %5 = vector.load %arg9[%c1, %c1_6, %c0_7] : memref<18x18x4xf32, #tpu.memory_space<vmem>>, vector<16x16x4xf32>
    tpu.vector_store %arg9[%c1, %c1_6, %c0_7], %2 {strides = array<i32>} : memref<18x18x4xf32, #tpu.memory_space<vmem>>, vector<16x16x4xf32>,
    %cst_8 = arith.constant 0.000000e+00 : f32
    %6 = vector.broadcast %cst_8 : f32 to vector<256x32xf32>
    %c0_9 = arith.constant 0 : index
    %c0_10 = arith.constant 0 : index
    %c0_11 = arith.constant 0 : index
    %7 = vector.load %arg9[%c0_9, %c0_10, %c0_11] : memref<18x18x4xf32, #tpu.memory_space<vmem>>, vector<16x16x4xf32>
    %8 = vector.shape_cast %7 : vector<16x16x4xf32> to vector<256x4xf32>
    %9 = arith.truncf %8 : vector<256x4xf32> to vector<256x4xbf16>
    %c0_12 = arith.constant 0 : index
    %c0_13 = arith.constant 0 : index
    %c0_14 = arith.constant 0 : index
    %c0_15 = arith.constant 0 : index
    %10 = vector.load %arg2[%c0_12, %c0_13, %c0_14, %c0_15] : memref<3x3x4x32xbf16, #tpu.memory_space<vmem>>, vector<1x1x4x32xbf16>
    %11 = vector.shape_cast %10 : vector<1x1x4x32xbf16> to vector<4x32xbf16>
    %cst_16 = arith.constant dense<0.000000e+00> : vector<256x32xf32>
    %12 = tpu.matmul %9, %11, %cst_16 {dimension_numbers = #tpu.dot_dimension_numbers<[1], [0], [0], [1], [0, 0, 1, 1], [], []>} : vector<256x4xbf16>, vector<4x32xbf16>, vector<256x32xf32> -> vector<256x32xf32>
    %13 = arith.addf %6, %12 : vector<256x32xf32>
    %c0_17 = arith.constant 0 : index
    %c1_18 = arith.constant 1 : index
    %c0_19 = arith.constant 0 : index
    %14 = vector.load %arg9[%c0_17, %c1_18, %c0_19] : memref<18x18x4xf32, #tpu.memory_space<vmem>>, vector<16x16x4xf32>
    %15 = vector.shape_cast %14 : vector<16x16x4xf32> to vector<256x4xf32>
    %16 = arith.truncf %15 : vector<256x4xf32> to vector<256x4xbf16>
    %c0_20 = arith.constant 0 : index
    %c1_21 = arith.constant 1 : index
    %c0_22 = arith.constant 0 : index
    %c0_23 = arith.constant 0 : index
    %17 = vector.load %arg2[%c0_20, %c1_21, %c0_22, %c0_23] : memref<3x3x4x32xbf16, #tpu.memory_space<vmem>>, vector<1x1x4x32xbf16>
    %18 = vector.shape_cast %17 : vector<1x1x4x32xbf16> to vector<4x32xbf16>
    %cst_24 = arith.constant dense<0.000000e+00> : vector<256x32xf32>
    %19 = tpu.matmul %16, %18, %cst_24 {dimension_numbers = #tpu.dot_dimension_numbers<[1], [0], [0], [1], [0, 0, 1, 1], [], []>} : vector<256x4xbf16>, vector<4x32xbf16>, vector<256x32xf32> -> vector<256x32xf32>
    %20 = arith.addf %13, %19 : vector<256x32xf32>
    %c0_25 = arith.constant 0 : index
    %c2 = arith.constant 2 : index
    %c0_26 = arith.constant 0 : index
    %21 = vector.load %arg9[%c0_25, %c2, %c0_26] : memref<18x18x4xf32, #tpu.memory_space<vmem>>, vector<16x16x4xf32>
    %22 = vector.shape_cast %21 : vector<16x16x4xf32> to vector<256x4xf32>
    %23 = arith.truncf %22 : vector<256x4xf32> to vector<256x4xbf16>
    %c0_27 = arith.constant 0 : index
    %c2_28 = arith.constant 2 : index
    %c0_29 = arith.constant 0 : index
    %c0_30 = arith.constant 0 : index
    %24 = vector.load %arg2[%c0_27, %c2_28, %c0_29, %c0_30] : memref<3x3x4x32xbf16, #tpu.memory_space<vmem>>, vector<1x1x4x32xbf16>
    %25 = vector.shape_cast %24 : vector<1x1x4x32xbf16> to vector<4x32xbf16>
    %cst_31 = arith.constant dense<0.000000e+00> : vector<256x32xf32>
    %26 = tpu.matmul %23, %25, %cst_31 {dimension_numbers = #tpu.dot_dimension_numbers<[1], [0], [0], [1], [0, 0, 1, 1], [], []>} : vector<256x4xbf16>, vector<4x32xbf16>, vector<256x32xf32> -> vector<256x32xf32>
    %27 = arith.addf %20, %26 : vector<256x32xf32>
    %c1_32 = arith.constant 1 : index
    %c0_33 = arith.constant 0 : index
    %c0_34 = arith.constant 0 : index
    %28 = vector.load %arg9[%c1_32, %c0_33, %c0_34] : memref<18x18x4xf32, #tpu.memory_space<vmem>>, vector<16x16x4xf32>
    %29 = vector.shape_cast %28 : vector<16x16x4xf32> to vector<256x4xf32>
    %30 = arith.truncf %29 : vector<256x4xf32> to vector<256x4xbf16>
    %c1_35 = arith.constant 1 : index
    %c0_36 = arith.constant 0 : index
    %c0_37 = arith.constant 0 : index
    %c0_38 = arith.constant 0 : index
    %31 = vector.load %arg2[%c1_35, %c0_36, %c0_37, %c0_38] : memref<3x3x4x32xbf16, #tpu.memory_space<vmem>>, vector<1x1x4x32xbf16>
    %32 = vector.shape_cast %31 : vector<1x1x4x32xbf16> to vector<4x32xbf16>
    %cst_39 = arith.constant dense<0.000000e+00> : vector<256x32xf32>
    %33 = tpu.matmul %30, %32, %cst_39 {dimension_numbers = #tpu.dot_dimension_numbers<[1], [0], [0], [1], [0, 0, 1, 1], [], []>} : vector<256x4xbf16>, vector<4x32xbf16>, vector<256x32xf32> -> vector<256x32xf32>
    %34 = arith.addf %27, %33 : vector<256x32xf32>
    %c1_40 = arith.constant 1 : index
    %c1_41 = arith.constant 1 : index
    %c0_42 = arith.constant 0 : index
    %35 = vector.load %arg9[%c1_40, %c1_41, %c0_42] : memref<18x18x4xf32, #tpu.memory_space<vmem>>, vector<16x16x4xf32>
    %36 = vector.shape_cast %35 : vector<16x16x4xf32> to vector<256x4xf32>
    %37 = arith.truncf %36 : vector<256x4xf32> to vector<256x4xbf16>
    %c1_43 = arith.constant 1 : index
    %c1_44 = arith.constant 1 : index
    %c0_45 = arith.constant 0 : index
    %c0_46 = arith.constant 0 : index
    %38 = vector.load %arg2[%c1_43, %c1_44, %c0_45, %c0_46] : memref<3x3x4x32xbf16, #tpu.memory_space<vmem>>, vector<1x1x4x32xbf16>
    %39 = vector.shape_cast %38 : vector<1x1x4x32xbf16> to vector<4x32xbf16>
    %cst_47 = arith.constant dense<0.000000e+00> : vector<256x32xf32>
    %40 = tpu.matmul %37, %39, %cst_47 {dimension_numbers = #tpu.dot_dimension_numbers<[1], [0], [0], [1], [0, 0, 1, 1], [], []>} : vector<256x4xbf16>, vector<4x32xbf16>, vector<256x32xf32> -> vector<256x32xf32>
    %41 = arith.addf %34, %40 : vector<256x32xf32>
    %c1_48 = arith.constant 1 : index
    %c2_49 = arith.constant 2 : index
    %c0_50 = arith.constant 0 : index
    %42 = vector.load %arg9[%c1_48, %c2_49, %c0_50] : memref<18x18x4xf32, #tpu.memory_space<vmem>>, vector<16x16x4xf32>
    %43 = vector.shape_cast %42 : vector<16x16x4xf32> to vector<256x4xf32>
    %44 = arith.truncf %43 : vector<256x4xf32> to vector<256x4xbf16>
    %c1_51 = arith.constant 1 : index
    %c2_52 = arith.constant 2 : index
    %c0_53 = arith.constant 0 : index
    %c0_54 = arith.constant 0 : index
    %45 = vector.load %arg2[%c1_51, %c2_52, %c0_53, %c0_54] : memref<3x3x4x32xbf16, #tpu.memory_space<vmem>>, vector<1x1x4x32xbf16>
    %46 = vector.shape_cast %45 : vector<1x1x4x32xbf16> to vector<4x32xbf16>
    %cst_55 = arith.constant dense<0.000000e+00> : vector<256x32xf32>
    %47 = tpu.matmul %44, %46, %cst_55 {dimension_numbers = #tpu.dot_dimension_numbers<[1], [0], [0], [1], [0, 0, 1, 1], [], []>} : vector<256x4xbf16>, vector<4x32xbf16>, vector<256x32xf32> -> vector<256x32xf32>
    %48 = arith.addf %41, %47 : vector<256x32xf32>
    %c2_56 = arith.constant 2 : index
    %c0_57 = arith.constant 0 : index
    %c0_58 = arith.constant 0 : index
    %49 = vector.load %arg9[%c2_56, %c0_57, %c0_58] : memref<18x18x4xf32, #tpu.memory_space<vmem>>, vector<16x16x4xf32>
    %50 = vector.shape_cast %49 : vector<16x16x4xf32> to vector<256x4xf32>
    %51 = arith.truncf %50 : vector<256x4xf32> to vector<256x4xbf16>
    %c2_59 = arith.constant 2 : index
    %c0_60 = arith.constant 0 : index
    %c0_61 = arith.constant 0 : index
    %c0_62 = arith.constant 0 : index
    %52 = vector.load %arg2[%c2_59, %c0_60, %c0_61, %c0_62] : memref<3x3x4x32xbf16, #tpu.memory_space<vmem>>, vector<1x1x4x32xbf16>
    %53 = vector.shape_cast %52 : vector<1x1x4x32xbf16> to vector<4x32xbf16>
    %cst_63 = arith.constant dense<0.000000e+00> : vector<256x32xf32>
    %54 = tpu.matmul %51, %53, %cst_63 {dimension_numbers = #tpu.dot_dimension_numbers<[1], [0], [0], [1], [0, 0, 1, 1], [], []>} : vector<256x4xbf16>, vector<4x32xbf16>, vector<256x32xf32> -> vector<256x32xf32>
    %55 = arith.addf %48, %54 : vector<256x32xf32>
    %c2_64 = arith.constant 2 : index
    %c1_65 = arith.constant 1 : index
    %c0_66 = arith.constant 0 : index
    %56 = vector.load %arg9[%c2_64, %c1_65, %c0_66] : memref<18x18x4xf32, #tpu.memory_space<vmem>>, vector<16x16x4xf32>
    %57 = vector.shape_cast %56 : vector<16x16x4xf32> to vector<256x4xf32>
    %58 = arith.truncf %57 : vector<256x4xf32> to vector<256x4xbf16>
    %c2_67 = arith.constant 2 : index
    %c1_68 = arith.constant 1 : index
    %c0_69 = arith.constant 0 : index
    %c0_70 = arith.constant 0 : index
    %59 = vector.load %arg2[%c2_67, %c1_68, %c0_69, %c0_70] : memref<3x3x4x32xbf16, #tpu.memory_space<vmem>>, vector<1x1x4x32xbf16>
    %60 = vector.shape_cast %59 : vector<1x1x4x32xbf16> to vector<4x32xbf16>
    %cst_71 = arith.constant dense<0.000000e+00> : vector<256x32xf32>
    %61 = tpu.matmul %58, %60, %cst_71 {dimension_numbers = #tpu.dot_dimension_numbers<[1], [0], [0], [1], [0, 0, 1, 1], [], []>} : vector<256x4xbf16>, vector<4x32xbf16>, vector<256x32xf32> -> vector<256x32xf32>
    %62 = arith.addf %55, %61 : vector<256x32xf32>
    %c2_72 = arith.constant 2 : index
    %c2_73 = arith.constant 2 : index
    %c0_74 = arith.constant 0 : index
    %63 = vector.load %arg9[%c2_72, %c2_73, %c0_74] : memref<18x18x4xf32, #tpu.memory_space<vmem>>, vector<16x16x4xf32>
    %64 = vector.shape_cast %63 : vector<16x16x4xf32> to vector<256x4xf32>
    %65 = arith.truncf %64 : vector<256x4xf32> to vector<256x4xbf16>
    %c2_75 = arith.constant 2 : index
    %c2_76 = arith.constant 2 : index
    %c0_77 = arith.constant 0 : index
    %c0_78 = arith.constant 0 : index
    %66 = vector.load %arg2[%c2_75, %c2_76, %c0_77, %c0_78] : memref<3x3x4x32xbf16, #tpu.memory_space<vmem>>, vector<1x1x4x32xbf16>
    %67 = vector.shape_cast %66 : vector<1x1x4x32xbf16> to vector<4x32xbf16>
    %cst_79 = arith.constant dense<0.000000e+00> : vector<256x32xf32>
    %68 = tpu.matmul %65, %67, %cst_79 {dimension_numbers = #tpu.dot_dimension_numbers<[1], [0], [0], [1], [0, 0, 1, 1], [], []>} : vector<256x4xbf16>, vector<4x32xbf16>, vector<256x32xf32> -> vector<256x32xf32>
    %69 = arith.addf %62, %68 : vector<256x32xf32>
    %cst_80 = arith.constant dense<0.000000e+00> : vector<32xf32>
    %70 = vector.multi_reduction <add>, %69, %cst_80 [0] : vector<256x32xf32> to vector<32xf32>
    %71 = vector.shape_cast %70 : vector<32xf32> to vector<1x32xf32>
    %c0_81 = arith.constant 0 : index
    %c0_82 = arith.constant 0 : index
    %c0_83 = arith.constant 0 : index
    %72 = vector.load %arg7[%c0_81, %c0_82, %c0_83] : memref<1x1x32xf32, #tpu.memory_space<vmem>>, vector<1x1x32xf32>
    %73 = vector.shape_cast %72 : vector<1x1x32xf32> to vector<1x32xf32>
    %74 = vector.shape_cast %71 : vector<1x32xf32> to vector<1x1x32xf32>
    tpu.vector_store %arg7[%c0_81, %c0_82, %c0_83], %74 {strides = array<i32>} : memref<1x1x32xf32, #tpu.memory_space<vmem>>, vector<1x1x32xf32>,
    %75 = arith.mulf %69, %69 : vector<256x32xf32>
    %cst_84 = arith.constant dense<0.000000e+00> : vector<32xf32>
    %76 = vector.multi_reduction <add>, %75, %cst_84 [0] : vector<256x32xf32> to vector<32xf32>
    %77 = vector.shape_cast %76 : vector<32xf32> to vector<1x32xf32>
    %c0_85 = arith.constant 0 : index
    %c0_86 = arith.constant 0 : index
    %c0_87 = arith.constant 0 : index
    %78 = vector.load %arg8[%c0_85, %c0_86, %c0_87] : memref<1x1x32xf32, #tpu.memory_space<vmem>>, vector<1x1x32xf32>
    %79 = vector.shape_cast %78 : vector<1x1x32xf32> to vector<1x32xf32>
    %80 = vector.shape_cast %77 : vector<1x32xf32> to vector<1x1x32xf32>
    tpu.vector_store %arg8[%c0_85, %c0_86, %c0_87], %80 {strides = array<i32>} : memref<1x1x32xf32, #tpu.memory_space<vmem>>, vector<1x1x32xf32>,
    %81 = arith.truncf %69 : vector<256x32xf32> to vector<256x32xbf16>
    %c0_88 = arith.constant 0 : index
    %c0_89 = arith.constant 0 : index
    %c0_90 = arith.constant 0 : index
    %82 = vector.load %arg6[%c0_88, %c0_89, %c0_90] : memref<1x256x32xbf16, #tpu.memory_space<vmem>>, vector<1x256x32xbf16>
    %83 = vector.shape_cast %82 : vector<1x256x32xbf16> to vector<256x32xbf16>
    %84 = vector.shape_cast %81 : vector<256x32xbf16> to vector<1x256x32xbf16>
    tpu.vector_store %arg6[%c0_88, %c0_89, %c0_90], %84 {strides = array<i32>} : memref<1x256x32xbf16, #tpu.memory_space<vmem>>, vector<1x256x32xbf16>,
    return
  }
  func.func @transform_0(%arg0: i32) -> (i32, i32, i32, i32) {
    %c0_i32 = arith.constant 0 : i32
    %c0_i32_0 = arith.constant 0 : i32
    %c0_i32_1 = arith.constant 0 : i32
    %c0_i32_2 = arith.constant 0 : i32
    return %arg0, %c0_i32, %c0_i32_0, %c0_i32_1 : i32, i32, i32, i32
  }
  func.func @transform_1(%arg0: i32) -> (i32, i32, i32, i32) {
    %c0_i32 = arith.constant 0 : i32
    %c0_i32_0 = arith.constant 0 : i32
    %c0_i32_1 = arith.constant 0 : i32
    %c0_i32_2 = arith.constant 0 : i32
    %c0_i32_3 = arith.constant 0 : i32
    return %c0_i32, %c0_i32_0, %c0_i32_1, %c0_i32_2 : i32, i32, i32, i32
  }
  func.func @transform_2(%arg0: i32) -> (i32, i32) {
    %c0_i32 = arith.constant 0 : i32
    %c0_i32_0 = arith.constant 0 : i32
    %c0_i32_1 = arith.constant 0 : i32
    return %c0_i32, %c0_i32_0 : i32, i32
  }
  func.func @transform_3(%arg0: i32) -> (i32, i32) {
    %c0_i32 = arith.constant 0 : i32
    %c0_i32_0 = arith.constant 0 : i32
    %c0_i32_1 = arith.constant 0 : i32
    return %c0_i32, %c0_i32_0 : i32, i32
  }
  func.func @transform_4(%arg0: i32) -> (i32, i32) {
    %c0_i32 = arith.constant 0 : i32
    %c0_i32_0 = arith.constant 0 : i32
    %c0_i32_1 = arith.constant 0 : i32
    return %c0_i32, %c0_i32_0 : i32, i32
  }
  func.func @transform_5(%arg0: i32) -> (i32, i32, i32) {
    %c0_i32 = arith.constant 0 : i32
    %c0_i32_0 = arith.constant 0 : i32
    %c0_i32_1 = arith.constant 0 : i32
    return %arg0, %c0_i32, %c0_i32_0 : i32, i32, i32
  }
  func.func @transform_6(%arg0: i32) -> (i32, i32, i32) {
    %c0_i32 = arith.constant 0 : i32
    %c0_i32_0 = arith.constant 0 : i32
    %c0_i32_1 = arith.constant 0 : i32
    return %arg0, %c0_i32, %c0_i32_0 : i32, i32, i32
  }
  func.func @transform_7(%arg0: i32) -> (i32, i32, i32) {
    %c0_i32 = arith.constant 0 : i32
    %c0_i32_0 = arith.constant 0 : i32
    %c0_i32_1 = arith.constant 0 : i32
    return %arg0, %c0_i32, %c0_i32_0 : i32, i32, i32
  }
}

</mosaic_0001>

<llo_original>
// kernel: tpu_custom_call.1
$region0: #{tpu_custom_call.1}
  #allocation0 [shape = 'u32[]', space=smem, size = 0x4, offset = 0x4, fixed_abs, tag = 'smem constant byte address 0x4 - core index']
  #allocation1 [shape = 'u32[144,128]{1,0:T(1,128)}', space=vmem, size = 0x12000, scoped, tag = 'internal scratch']
  #allocation2 [shape = 'f32[18,18,4]{2,1,0:T(8,128)}', space=vmem, size = 0x36000, scoped, tag = 'scratch operand']
  %s0 = inlined_call_operand.vmem [shape: bf16[2,16,16,4], index: 0, kind: input, shape index: {}]
  %s1 = inlined_call_operand.vmem [shape: bf16[3,3,4,32], index: 1, kind: input, shape index: {}]
  %s2 = inlined_call_operand.vmem [shape: f32[1,32], index: 2, kind: input, shape index: {}]
  %s3 = inlined_call_operand.vmem [shape: f32[1,4], index: 3, kind: input, shape index: {}]
  %s4 = inlined_call_operand.vmem [shape: f32[1,4], index: 4, kind: input, shape index: {}]
  %s5 = inlined_call_operand.vmem [shape: bf16[2,256,32], index: 5, kind: output, shape index: {0}]
  %s6 = inlined_call_operand.hbm [shape: f32[2,1,32], index: 6, kind: output, shape index: {1}]
  %s7 = inlined_call_operand.hbm [shape: f32[2,1,32], index: 7, kind: output, shape index: {2}]
  %8 = xla_tuple %s5, %s6, %s7
  %s9 = sld [smem:[#allocation0]]
  $region69: #{tpu_custom_call.1} parent=0
    _
  %s11 = ssub.s32 1, %s9
  %s12 = scalar_select 0, %s11, %s9
  $region1: #{tpu_custom_call.1} parent=0
    #allocation3 [shape = 'u8[1024]{0}', space=vmem, size = 0x400, scoped, tag = 'output window, operand 1']
    #allocation4 [shape = 's32[2]{0}', space=sflag, size = 0x8, scoped, tag = 'scoped memory for tpu_custom_call.1']
    #allocation5 [shape = 'u8[1024]{0}', space=vmem, size = 0x400, scoped, tag = 'output window, operand 2']
    #allocation6 [shape = 's32[2]{0}', space=sflag, size = 0x8, scoped, tag = 'scoped memory for tpu_custom_call.1']
    %13 = vsyncpa [#allocation4], 0
    %s14 = scalar_lea.sflag [#allocation4], 1
    %15 = vsyncpa %s14, 0
    %16 = vsyncpa [#allocation6], 0
    %s17 = scalar_lea.sflag [#allocation6], 1
    %18 = vsyncpa %s17, 0
    loop: start=0, step=1, limit=4
    $region2: #{tpu_custom_call.1} parent=1 // loop_pre_header
      _
    $region3: #{tpu_custom_call.1} parent=1 // loop_header
      %s20 = sphi 0, %s24
      %p21 = scmp.ge.s32.totalorder %s20, 4
      %s30 = sphi 0, %s32
      %s33 = sphi 0, %s30
      %s34 = sphi 0, %s33
      %s50 = sphi 0, %s34
      %s54 = sphi 0, %s54
      %s56 = sphi 0, %s54
      %s57 = sphi 0, %s56
      %s71 = sphi 0, %s57
      %s75 = sphi 0, %s75
      %s77 = sphi 0, %s75
      %s78 = sphi 0, %s77
      %s92 = sphi 0, %s78
      %s96 = sphi 0, %s96
      %s98 = sphi 0, %s96
      %s99 = sphi 0, %s98
      %s113 = sphi 0, %s99
      %s117 = sphi 0, %s117
      %s119 = sphi 0, %s117
      %s120 = sphi 0, %s119
      %s134 = sphi 0, %s120
      %s140 = sphi 0, %s142
      %s143 = sphi 0, %s140
      %s144 = sphi 0, %s143
      %s160 = sphi 0, %s144
      %s166 = sphi 0, %s168
      %s169 = sphi 0, %s166
      %s170 = sphi 0, %s169
      %s186 = sphi 0, %s170
      %s192 = sphi 0, %s194
      %s195 = sphi 0, %s192
      %s196 = sphi 0, %s195
      %s212 = sphi 0, %s196
    $region4: #{tpu_custom_call.1} parent=1 // loop_header_branch
      %23 = sbr.rel (%p21) target = $region8
    $region5: #{tpu_custom_call.1} parent=1 // loop_body
      %s25 = ssub.s32 %s20, 1
      %s26 = ssub.s32 %s20, 2
      %s27 = sadd.s32 %s20, 1
      %s28 = ssub.s32 %s20, %s27
      %p29 = scmp.eq.s32.totalorder %s28, 0
      %s31 = sadd.s32 %s30, 1
      %s32 = scalar_select %p29, %s30, %s31
      %p35 = pneg %p29
      %p36 = scmp.eq.s32.totalorder %s20, 1
      %p37 = por %p35, %p36
      %p38 = scmp.ne.s32.totalorder %s30, %s33
      %p39 = scmp.eq.s32.totalorder %s20, 0
      %p40 = por %p38, %p39
      %p41 = scmp.ne.s32.totalorder %s30, %s33
      %p42 = scmp.eq.s32.totalorder %s25, 1
      %p43 = por %p41, %p42
      %p44 = scmp.ne.s32.totalorder %s33, %s34
      %p45 = scmp.eq.s32.totalorder %s25, 0
      %p46 = por %p44, %p45
      %p47 = scmp.ne.s32.totalorder %s33, %s34
      %p48 = scmp.eq.s32.totalorder %s26, 1
      %p49 = por %p47, %p48
      %p51 = scmp.ne.s32.totalorder %s34, %s50
      %p52 = scmp.eq.s32.totalorder %s26, 0
      %p53 = por %p51, %p52
      %s55 = sadd.s32 %s54, 1
      %p58 = scmp.eq.s32.totalorder %s20, 1
      %p59 = scmp.ne.s32.totalorder %s54, %s56
      %p60 = scmp.eq.s32.totalorder %s20, 0
      %p61 = por %p59, %p60
      %p62 = scmp.ne.s32.totalorder %s54, %s56
      %p63 = scmp.eq.s32.totalorder %s25, 1
      %p64 = por %p62, %p63
      %p65 = scmp.ne.s32.totalorder %s56, %s57
      %p66 = scmp.eq.s32.totalorder %s25, 0
      %p67 = por %p65, %p66
      %p68 = scmp.ne.s32.totalorder %s56, %s57
      %p69 = scmp.eq.s32.totalorder %s26, 1
      %p70 = por %p68, %p69
      %p72 = scmp.ne.s32.totalorder %s57, %s71
      %p73 = scmp.eq.s32.totalorder %s26, 0
      %p74 = por %p72, %p73
      %s76 = sadd.s32 %s75, 1
      %p79 = scmp.eq.s32.totalorder %s20, 1
      %p80 = scmp.ne.s32.totalorder %s75, %s77
      %p81 = scmp.eq.s32.totalorder %s20, 0
      %p82 = por %p80, %p81
      %p83 = scmp.ne.s32.totalorder %s75, %s77
      %p84 = scmp.eq.s32.totalorder %s25, 1
      %p85 = por %p83, %p84
      %p86 = scmp.ne.s32.totalorder %s77, %s78
      %p87 = scmp.eq.s32.totalorder %s25, 0
      %p88 = por %p86, %p87
      %p89 = scmp.ne.s32.totalorder %s77, %s78
      %p90 = scmp.eq.s32.totalorder %s26, 1
      %p91 = por %p89, %p90
      %p93 = scmp.ne.s32.totalorder %s78, %s92
      %p94 = scmp.eq.s32.totalorder %s26, 0
      %p95 = por %p93, %p94
      %s97 = sadd.s32 %s96, 1
      %p100 = scmp.eq.s32.totalorder %s20, 1
      %p101 = scmp.ne.s32.totalorder %s96, %s98
      %p102 = scmp.eq.s32.totalorder %s20, 0
      %p103 = por %p101, %p102
      %p104 = scmp.ne.s32.totalorder %s96, %s98
      %p105 = scmp.eq.s32.totalorder %s25, 1
      %p106 = por %p104, %p105
      %p107 = scmp.ne.s32.totalorder %s98, %s99
      %p108 = scmp.eq.s32.totalorder %s25, 0
      %p109 = por %p107, %p108
      %p110 = scmp.ne.s32.totalorder %s98, %s99
      %p111 = scmp.eq.s32.totalorder %s26, 1
      %p112 = por %p110, %p111
      %p114 = scmp.ne.s32.totalorder %s99, %s113
      %p115 = scmp.eq.s32.totalorder %s26, 0
      %p116 = por %p114, %p115
      %s118 = sadd.s32 %s117, 1
      %p121 = scmp.eq.s32.totalorder %s20, 1
      %p122 = scmp.ne.s32.totalorder %s117, %s119
      %p123 = scmp.eq.s32.totalorder %s20, 0
      %p124 = por %p122, %p123
      %p125 = scmp.ne.s32.totalorder %s117, %s119
      %p126 = scmp.eq.s32.totalorder %s25, 1
      %p127 = por %p125, %p126
      %p128 = scmp.ne.s32.totalorder %s119, %s120
      %p129 = scmp.eq.s32.totalorder %s25, 0
      %p130 = por %p128, %p129
      %p131 = scmp.ne.s32.totalorder %s119, %s120
      %p132 = scmp.eq.s32.totalorder %s26, 1
      %p133 = por %p131, %p132
      %p135 = scmp.ne.s32.totalorder %s120, %s134
      %p136 = scmp.eq.s32.totalorder %s26, 0
      %p137 = por %p135, %p136
      %s138 = ssub.s32 %s20, %s27
      %p139 = scmp.eq.s32.totalorder %s138, 0
      %s141 = sadd.s32 %s140, 1
      %s142 = scalar_select %p139, %s140, %s141
      %p145 = pneg %p139
      %p146 = scmp.eq.s32.totalorder %s20, 1
      %p147 = por %p145, %p146
      %p148 = scmp.ne.s32.totalorder %s140, %s143
      %p149 = scmp.eq.s32.totalorder %s20, 0
      %p150 = por %p148, %p149
      %p151 = scmp.ne.s32.totalorder %s140, %s143
      %p152 = scmp.eq.s32.totalorder %s25, 1
      %p153 = por %p151, %p152
      %p154 = scmp.ne.s32.totalorder %s143, %s144
      %p155 = scmp.eq.s32.totalorder %s25, 0
      %p156 = por %p154, %p155
      %p157 = scmp.ne.s32.totalorder %s143, %s144
      %p158 = scmp.eq.s32.totalorder %s26, 1
      %p159 = por %p157, %p158
      %p161 = scmp.ne.s32.totalorder %s144, %s160
      %p162 = scmp.eq.s32.totalorder %s26, 0
      %p163 = por %p161, %p162
      %s164 = ssub.s32 %s20, %s27
      %p165 = scmp.eq.s32.totalorder %s164, 0
      %s167 = sadd.s32 %s166, 1
      %s168 = scalar_select %p165, %s166, %s167
      %p171 = pneg %p165
      %p172 = scmp.eq.s32.totalorder %s20, 1
      %p173 = por %p171, %p172
      %p174 = scmp.ne.s32.totalorder %s166, %s169
      %p175 = scmp.eq.s32.totalorder %s20, 0
      %p176 = por %p174, %p175
      %p177 = scmp.ne.s32.totalorder %s166, %s169
      %p178 = scmp.eq.s32.totalorder %s25, 1
      %p179 = por %p177, %p178
      %p180 = scmp.ne.s32.totalorder %s169, %s170
      %p181 = scmp.eq.s32.totalorder %s25, 0
      %p182 = por %p180, %p181
      %p183 = scmp.ne.s32.totalorder %s169, %s170
      %p184 = scmp.eq.s32.totalorder %s26, 1
      %p185 = por %p183, %p184
      %p187 = scmp.ne.s32.totalorder %s170, %s186
      %p188 = scmp.eq.s32.totalorder %s26, 0
      %p189 = por %p187, %p188
      %s190 = ssub.s32 %s20, %s27
      %p191 = scmp.eq.s32.totalorder %s190, 0
      %s193 = sadd.s32 %s192, 1
      %s194 = scalar_select %p191, %s192, %s193
      %p197 = pneg %p191
      %p198 = scmp.eq.s32.totalorder %s20, 1
      %p199 = por %p197, %p198
      %p200 = scmp.ne.s32.totalorder %s192, %s195
      %p201 = scmp.eq.s32.totalorder %s20, 0
      %p202 = por %p200, %p201
      %p203 = scmp.ne.s32.totalorder %s192, %s195
      %p204 = scmp.eq.s32.totalorder %s25, 1
      %p205 = por %p203, %p204
      %p206 = scmp.ne.s32.totalorder %s195, %s196
      %p207 = scmp.eq.s32.totalorder %s25, 0
      %p208 = por %p206, %p207
      %p209 = scmp.ne.s32.totalorder %s195, %s196
      %p210 = scmp.eq.s32.totalorder %s26, 1
      %p211 = por %p209, %p210
      %p213 = scmp.ne.s32.totalorder %s196, %s212
      %p214 = scmp.eq.s32.totalorder %s26, 0
      %p215 = por %p213, %p214
      %p216 = scmp.le.s32.totalorder 1, %s20
      %p217 = scmp.lt.s32.totalorder %s20, 3
      %p218 = pnand %p216, %p217
      %p219 = pneg %p218
      // Predicated region
      $region9: #{tpu_custom_call.1} parent=5 // pred_check
        _
      $region10: #{tpu_custom_call.1} parent=5 // pred_check_branch
        %221 = sbr.rel (%p218) target = $region12
      $region11: #{tpu_custom_call.1} parent=5 // pred_region
        %s222 = ssub.s32 %s20, 1
        // Predicated region
        $region13: #{tpu_custom_call.1} parent=11 // pred_check
          %p223 = pneg %p67
        $region14: #{tpu_custom_call.1} parent=11 // pred_check_branch
          %225 = sbr.rel (%p223) target = $region16
        $region15: #{tpu_custom_call.1} parent=11 // pred_region
          _
        $region16: #{tpu_custom_call.1} parent=11 // pred_fallthru
          _
        // Predicated region
        $region17: #{tpu_custom_call.1} parent=11 // pred_check
          %p226 = pneg %p88
        $region18: #{tpu_custom_call.1} parent=11 // pred_check_branch
          %228 = sbr.rel (%p226) target = $region20
        $region19: #{tpu_custom_call.1} parent=11 // pred_region
          _
        $region20: #{tpu_custom_call.1} parent=11 // pred_fallthru
          _
        // Predicated region
        $region21: #{tpu_custom_call.1} parent=11 // pred_check
          %p229 = pneg %p109
        $region22: #{tpu_custom_call.1} parent=11 // pred_check_branch
          %231 = sbr.rel (%p229) target = $region24
        $region23: #{tpu_custom_call.1} parent=11 // pred_region
          _
        $region24: #{tpu_custom_call.1} parent=11 // pred_fallthru
          _
        // Predicated region
        $region25: #{tpu_custom_call.1} parent=11 // pred_check
          %p232 = pneg %p130
        $region26: #{tpu_custom_call.1} parent=11 // pred_check_branch
          %234 = sbr.rel (%p232) target = $region28
        $region27: #{tpu_custom_call.1} parent=11 // pred_region
          _
        $region28: #{tpu_custom_call.1} parent=11 // pred_fallthru
          _
      $region12: #{tpu_custom_call.1} parent=5 // pred_fallthru
        _
      %p235 = scmp.lt.s32.totalorder %s20, 2
      // Predicated region
      $region29: #{tpu_custom_call.1} parent=5 // pred_check
        %p236 = pneg %p235
      $region30: #{tpu_custom_call.1} parent=5 // pred_check_branch
        %238 = sbr.rel (%p236) target = $region32
      $region31: #{tpu_custom_call.1} parent=5 // pred_region
        // Predicated region
        $region33: #{tpu_custom_call.1} parent=31 // pred_check
          %p239 = pneg %p40
        $region34: #{tpu_custom_call.1} parent=31 // pred_check_branch
          %241 = sbr.rel (%p239) target = $region36
        $region35: #{tpu_custom_call.1} parent=31 // pred_region
          %p242 = scmp.lt.s32.totalorder %s20, 1
          %s243 = scalar_select %p242, %s20, 1
          %s244 = smul.addr %s243, 32
          %s245 = smul.addr %s244, 4
          %s246 = scalar_lea.vmem %s0, %s245
        $region36: #{tpu_custom_call.1} parent=31 // pred_fallthru
          _
      $region32: #{tpu_custom_call.1} parent=5 // pred_fallthru
        _
      %p247 = scmp.le.s32.totalorder 1, %s20
      %p248 = scmp.lt.s32.totalorder %s20, 3
      %p249 = pnand %p247, %p248
      %p250 = pneg %p249
      // Predicated region
      $region37: #{tpu_custom_call.1} parent=5 // pred_check
        _
      $region38: #{tpu_custom_call.1} parent=5 // pred_check_branch
        %252 = sbr.rel (%p249) target = $region40
      $region39: #{tpu_custom_call.1} parent=5 // pred_region
        %s253 = ssub.s32 %s20, 1
        %p254 = scmp.lt.s32.totalorder %s25, 1
        %s255 = scalar_select %p254, %s25, 1
        %s256 = smul.addr %s255, 32
        %s257 = smul.addr %s256, 4
        %s258 = scalar_lea.vmem %s0, %s257
        %p259 = pneg %p46
        %p260 = pneg %p43
        %p261 = pneg %p67
        %p262 = pneg %p64
        %p263 = pneg %p88
        %p264 = pneg %p85
        %p265 = pneg %p109
        %p266 = pneg %p106
        %p267 = pneg %p130
        %p268 = pneg %p127
        %p269 = pneg %p156
        %p270 = pneg %p153
        %p271 = scmp.lt.s32.totalorder %s25, 1
        %s272 = scalar_select %p271, %s25, 1
        %s273 = smul.addr %s272, 32
        %s274 = smul.addr %s273, 4
        %s275 = scalar_lea.vmem %s5, %s274
        %p276 = pneg %p182
        %p277 = pneg %p179
        %s278 = sand.u32 %s169, 1
        %s279 = scalar_lea.sflag [#allocation4], %s278
        %s280 = sand.u32 %s169, 1
        %s281 = scalar_lea.vmem [#allocation3], %s280
        %p282 = pneg %p208
        %p283 = pneg %p205
        %s284 = sand.u32 %s195, 1
        %s285 = scalar_lea.sflag [#allocation6], %s284
        %s286 = sand.u32 %s195, 1
        %s287 = scalar_lea.vmem [#allocation5], %s286
        %p288 = scmp.lt.s32.totalorder %s25, 1
        %s289 = scalar_select %p288, %s25, 1
        %s290 = smul.addr %s289, 32
        %s291 = smul.addr %s290, 4
        %s292 = scalar_lea.vmem %s0, %s291
        %p293 = scmp.lt.s32.totalorder %s25, 1
        %s294 = scalar_select %p293, %s25, 1
        %s295 = smul.addr %s294, 32
        %s296 = smul.addr %s295, 4
        %s297 = scalar_lea.vmem %s5, %s296
        %v299 = vld [vmem:[%s292] sm:$0xf]
        %v300 = vld [vmem:[%s292 + $0x4] sm:$0xf]
        %v301 = vld [vmem:[%s292 + $0x8] sm:$0xf]
        %v302 = vld [vmem:[%s292 + $0xc] sm:$0xf]
        %v303 = vld [vmem:[%s292 + $0x10] sm:$0xf]
        %v304 = vld [vmem:[%s292 + $0x14] sm:$0xf]
        %v305 = vld [vmem:[%s292 + $0x18] sm:$0xf]
        %v306 = vld [vmem:[%s292 + $0x1c] sm:$0xf]
        %v307 = vld [vmem:[%s292 + $0x20] sm:$0xf]
        %v308 = vld [vmem:[%s292 + $0x24] sm:$0xf]
        %v309 = vld [vmem:[%s292 + $0x28] sm:$0xf]
        %v310 = vld [vmem:[%s292 + $0x2c] sm:$0xf]
        %v311 = vld [vmem:[%s292 + $0x30] sm:$0xf]
        %v312 = vld [vmem:[%s292 + $0x34] sm:$0xf]
        %v313 = vld [vmem:[%s292 + $0x38] sm:$0xf]
        %v314 = vld [vmem:[%s292 + $0x3c] sm:$0xf]
        %v315 = vld [vmem:[%s292 + $0x40] sm:$0xf]
        %v316 = vld [vmem:[%s292 + $0x44] sm:$0xf]
        %v317 = vld [vmem:[%s292 + $0x48] sm:$0xf]
        %v318 = vld [vmem:[%s292 + $0x4c] sm:$0xf]
        %v319 = vld [vmem:[%s292 + $0x50] sm:$0xf]
        %v320 = vld [vmem:[%s292 + $0x54] sm:$0xf]
        %v321 = vld [vmem:[%s292 + $0x58] sm:$0xf]
        %v322 = vld [vmem:[%s292 + $0x5c] sm:$0xf]
        %v323 = vld [vmem:[%s292 + $0x60] sm:$0xf]
        %v324 = vld [vmem:[%s292 + $0x64] sm:$0xf]
        %v325 = vld [vmem:[%s292 + $0x68] sm:$0xf]
        %v326 = vld [vmem:[%s292 + $0x6c] sm:$0xf]
        %v327 = vld [vmem:[%s292 + $0x70] sm:$0xf]
        %v328 = vld [vmem:[%s292 + $0x74] sm:$0xf]
        %v329 = vld [vmem:[%s292 + $0x78] sm:$0xf]
        %v330 = vld [vmem:[%s292 + $0x7c] sm:$0xf]
        %v331 = vunpack.c.l.bf16 %v299
        %v332 = vunpack.c.l.bf16 %v300
        %v333 = vunpack.c.l.bf16 %v301
        %v334 = vunpack.c.l.bf16 %v302
        %v335 = vunpack.c.l.bf16 %v303
        %v336 = vunpack.c.l.bf16 %v304
        %v337 = vunpack.c.l.bf16 %v305
        %v338 = vunpack.c.l.bf16 %v306
        %v339 = vunpack.c.l.bf16 %v307
        %v340 = vunpack.c.l.bf16 %v308
        %v341 = vunpack.c.l.bf16 %v309
        %v342 = vunpack.c.l.bf16 %v310
        %v343 = vunpack.c.l.bf16 %v311
        %v344 = vunpack.c.l.bf16 %v312
        %v345 = vunpack.c.l.bf16 %v313
        %v346 = vunpack.c.l.bf16 %v314
        %v347 = vunpack.c.l.bf16 %v315
        %v348 = vunpack.c.l.bf16 %v316
        %v349 = vunpack.c.l.bf16 %v317
        %v350 = vunpack.c.l.bf16 %v318
        %v351 = vunpack.c.l.bf16 %v319
        %v352 = vunpack.c.l.bf16 %v320
        %v353 = vunpack.c.l.bf16 %v321
        %v354 = vunpack.c.l.bf16 %v322
        %v355 = vunpack.c.l.bf16 %v323
        %v356 = vunpack.c.l.bf16 %v324
        %v357 = vunpack.c.l.bf16 %v325
        %v358 = vunpack.c.l.bf16 %v326
        %v359 = vunpack.c.l.bf16 %v327
        %v360 = vunpack.c.l.bf16 %v328
        %v361 = vunpack.c.l.bf16 %v329
        %v362 = vunpack.c.l.bf16 %v330
        %vm363 = vcmask 31744
        %364 = vst.msk [vmem:[#allocation2] sm:$0xff] %vm363, 0.0
        %365 = vst.msk [vmem:[#allocation2 + $0x8] sm:$0xff] %vm363, 0.0
        %vm366 = vcmask 25600
        %367 = vst.msk [vmem:[#allocation2 + $0x10] sm:$0x3] %vm366, 0.0
        %368 = vst.msk [vmem:[#allocation2 + $0x18] sm:$0xff] %vm363, 0.0
        %369 = vst.msk [vmem:[#allocation2 + $0x20] sm:$0xff] %vm363, 0.0
        %370 = vst.msk [vmem:[#allocation2 + $0x28] sm:$0x3] %vm366, 0.0
        %371 = vst.msk [vmem:[#allocation2 + $0x30] sm:$0xff] %vm363, 0.0
        %372 = vst.msk [vmem:[#allocation2 + $0x38] sm:$0xff] %vm363, 0.0
        %373 = vst.msk [vmem:[#allocation2 + $0x40] sm:$0x3] %vm366, 0.0
        %374 = vst.msk [vmem:[#allocation2 + $0x48] sm:$0xff] %vm363, 0.0
        %375 = vst.msk [vmem:[#allocation2 + $0x50] sm:$0xff] %vm363, 0.0
        %376 = vst.msk [vmem:[#allocation2 + $0x58] sm:$0x3] %vm366, 0.0
        %377 = vst.msk [vmem:[#allocation2 + $0x60] sm:$0xff] %vm363, 0.0
        %378 = vst.msk [vmem:[#allocation2 + $0x68] sm:$0xff] %vm363, 0.0
        %379 = vst.msk [vmem:[#allocation2 + $0x70] sm:$0x3] %vm366, 0.0
        %380 = vst.msk [vmem:[#allocation2 + $0x78] sm:$0xff] %vm363, 0.0
        %381 = vst.msk [vmem:[#allocation2 + $0x80] sm:$0xff] %vm363, 0.0
        %382 = vst.msk [vmem:[#allocation2 + $0x88] sm:$0x3] %vm366, 0.0
        %383 = vst.msk [vmem:[#allocation2 + $0x90] sm:$0xff] %vm363, 0.0
        %384 = vst.msk [vmem:[#allocation2 + $0x98] sm:$0xff] %vm363, 0.0
        %385 = vst.msk [vmem:[#allocation2 + $0xa0] sm:$0x3] %vm366, 0.0
        %386 = vst.msk [vmem:[#allocation2 + $0xa8] sm:$0xff] %vm363, 0.0
        %387 = vst.msk [vmem:[#allocation2 + $0xb0] sm:$0xff] %vm363, 0.0
        %388 = vst.msk [vmem:[#allocation2 + $0xb8] sm:$0x3] %vm366, 0.0
        %389 = vst.msk [vmem:[#allocation2 + $0xc0] sm:$0xff] %vm363, 0.0
        %390 = vst.msk [vmem:[#allocation2 + $0xc8] sm:$0xff] %vm363, 0.0
        %391 = vst.msk [vmem:[#allocation2 + $0xd0] sm:$0x3] %vm366, 0.0
        %392 = vst.msk [vmem:[#allocation2 + $0xd8] sm:$0xff] %vm363, 0.0
        %393 = vst.msk [vmem:[#allocation2 + $0xe0] sm:$0xff] %vm363, 0.0
        %394 = vst.msk [vmem:[#allocation2 + $0xe8] sm:$0x3] %vm366, 0.0
        %395 = vst.msk [vmem:[#allocation2 + $0xf0] sm:$0xff] %vm363, 0.0
        %396 = vst.msk [vmem:[#allocation2 + $0xf8] sm:$0xff] %vm363, 0.0
        %397 = vst.msk [vmem:[#allocation2 + $0x100] sm:$0x3] %vm366, 0.0
        %398 = vst.msk [vmem:[#allocation2 + $0x108] sm:$0xff] %vm363, 0.0
        %399 = vst.msk [vmem:[#allocation2 + $0x110] sm:$0xff] %vm363, 0.0
        %400 = vst.msk [vmem:[#allocation2 + $0x118] sm:$0x3] %vm366, 0.0
        %401 = vst.msk [vmem:[#allocation2 + $0x120] sm:$0xff] %vm363, 0.0
        %402 = vst.msk [vmem:[#allocation2 + $0x128] sm:$0xff] %vm363, 0.0
        %403 = vst.msk [vmem:[#allocation2 + $0x130] sm:$0x3] %vm366, 0.0
        %404 = vst.msk [vmem:[#allocation2 + $0x138] sm:$0xff] %vm363, 0.0
        %405 = vst.msk [vmem:[#allocation2 + $0x140] sm:$0xff] %vm363, 0.0
        %406 = vst.msk [vmem:[#allocation2 + $0x148] sm:$0x3] %vm366, 0.0
        %407 = vst.msk [vmem:[#allocation2 + $0x150] sm:$0xff] %vm363, 0.0
        %408 = vst.msk [vmem:[#allocation2 + $0x158] sm:$0xff] %vm363, 0.0
        %409 = vst.msk [vmem:[#allocation2 + $0x160] sm:$0x3] %vm366, 0.0
        %410 = vst.msk [vmem:[#allocation2 + $0x168] sm:$0xff] %vm363, 0.0
        %411 = vst.msk [vmem:[#allocation2 + $0x170] sm:$0xff] %vm363, 0.0
        %412 = vst.msk [vmem:[#allocation2 + $0x178] sm:$0x3] %vm366, 0.0
        %413 = vst.msk [vmem:[#allocation2 + $0x180] sm:$0xff] %vm363, 0.0
        %414 = vst.msk [vmem:[#allocation2 + $0x188] sm:$0xff] %vm363, 0.0
        %415 = vst.msk [vmem:[#allocation2 + $0x190] sm:$0x3] %vm366, 0.0
        %416 = vst.msk [vmem:[#allocation2 + $0x198] sm:$0xff] %vm363, 0.0
        %417 = vst.msk [vmem:[#allocation2 + $0x1a0] sm:$0xff] %vm363, 0.0
        %418 = vst.msk [vmem:[#allocation2 + $0x1a8] sm:$0x3] %vm366, 0.0
        %s419 = scalar_lea.vmem [#allocation2], 24
        %420 = vst.msk [vmem:[%s419 + $0x1] sm:$0xff] %vm363, %v331
        %421 = vst.msk [vmem:[%s419 + $0x9] sm:$0xff] %vm363, %v332
        %422 = vst.msk [vmem:[%s419 + $0x19] sm:$0xff] %vm363, %v333
        %423 = vst.msk [vmem:[%s419 + $0x21] sm:$0xff] %vm363, %v334
        %424 = vst.msk [vmem:[%s419 + $0x31] sm:$0xff] %vm363, %v335
        %425 = vst.msk [vmem:[%s419 + $0x39] sm:$0xff] %vm363, %v336
        %426 = vst.msk [vmem:[%s419 + $0x49] sm:$0xff] %vm363, %v337
        %427 = vst.msk [vmem:[%s419 + $0x51] sm:$0xff] %vm363, %v338
        %428 = vst.msk [vmem:[%s419 + $0x61] sm:$0xff] %vm363, %v339
        %429 = vst.msk [vmem:[%s419 + $0x69] sm:$0xff] %vm363, %v340
        %430 = vst.msk [vmem:[%s419 + $0x79] sm:$0xff] %vm363, %v341
        %431 = vst.msk [vmem:[%s419 + $0x81] sm:$0xff] %vm363, %v342
        %432 = vst.msk [vmem:[%s419 + $0x91] sm:$0xff] %vm363, %v343
        %433 = vst.msk [vmem:[%s419 + $0x99] sm:$0xff] %vm363, %v344
        %434 = vst.msk [vmem:[%s419 + $0xa9] sm:$0xff] %vm363, %v345
        %435 = vst.msk [vmem:[%s419 + $0xb1] sm:$0xff] %vm363, %v346
        %436 = vst.msk [vmem:[%s419 + $0xc1] sm:$0xff] %vm363, %v347
        %437 = vst.msk [vmem:[%s419 + $0xc9] sm:$0xff] %vm363, %v348
        %438 = vst.msk [vmem:[%s419 + $0xd9] sm:$0xff] %vm363, %v349
        %439 = vst.msk [vmem:[%s419 + $0xe1] sm:$0xff] %vm363, %v350
        %440 = vst.msk [vmem:[%s419 + $0xf1] sm:$0xff] %vm363, %v351
        %441 = vst.msk [vmem:[%s419 + $0xf9] sm:$0xff] %vm363, %v352
        %442 = vst.msk [vmem:[%s419 + $0x109] sm:$0xff] %vm363, %v353
        %443 = vst.msk [vmem:[%s419 + $0x111] sm:$0xff] %vm363, %v354
        %444 = vst.msk [vmem:[%s419 + $0x121] sm:$0xff] %vm363, %v355
        %445 = vst.msk [vmem:[%s419 + $0x129] sm:$0xff] %vm363, %v356
        %446 = vst.msk [vmem:[%s419 + $0x139] sm:$0xff] %vm363, %v357
        %447 = vst.msk [vmem:[%s419 + $0x141] sm:$0xff] %vm363, %v358
        %448 = vst.msk [vmem:[%s419 + $0x151] sm:$0xff] %vm363, %v359
        %449 = vst.msk [vmem:[%s419 + $0x159] sm:$0xff] %vm363, %v360
        %450 = vst.msk [vmem:[%s419 + $0x169] sm:$0xff] %vm363, %v361
        %451 = vst.msk [vmem:[%s419 + $0x171] sm:$0xff] %vm363, %v362
        %v452 = vld [vmem:[#allocation2] sm:$0xff]
        %v453 = vld [vmem:[#allocation2 + $0x8] sm:$0xff]
        %v454 = vld [vmem:[#allocation2 + $0x18] sm:$0xff]
        %v455 = vld [vmem:[#allocation2 + $0x20] sm:$0xff]
        %v456 = vld [vmem:[#allocation2 + $0x30] sm:$0xff]
        %v457 = vld [vmem:[#allocation2 + $0x38] sm:$0xff]
        %v458 = vld [vmem:[#allocation2 + $0x48] sm:$0xff]
        %v459 = vld [vmem:[#allocation2 + $0x50] sm:$0xff]
        %v460 = vld [vmem:[#allocation2 + $0x60] sm:$0xff]
        %v461 = vld [vmem:[#allocation2 + $0x68] sm:$0xff]
        %v462 = vld [vmem:[#allocation2 + $0x78] sm:$0xff]
        %v463 = vld [vmem:[#allocation2 + $0x80] sm:$0xff]
        %v464 = vld [vmem:[#allocation2 + $0x90] sm:$0xff]
        %v465 = vld [vmem:[#allocation2 + $0x98] sm:$0xff]
        %v466 = vld [vmem:[#allocation2 + $0xa8] sm:$0xff]
        %v467 = vld [vmem:[#allocation2 + $0xb0] sm:$0xff]
        %v468 = vld [vmem:[#allocation2 + $0xc0] sm:$0xff]
        %v469 = vld [vmem:[#allocation2 + $0xc8] sm:$0xff]
        %v470 = vld [vmem:[#allocation2 + $0xd8] sm:$0xff]
        %v471 = vld [vmem:[#allocation2 + $0xe0] sm:$0xff]
        %v472 = vld [vmem:[#allocation2 + $0xf0] sm:$0xff]
        %v473 = vld [vmem:[#allocation2 + $0xf8] sm:$0xff]
        %v474 = vld [vmem:[#allocation2 + $0x108] sm:$0xff]
        %v475 = vld [vmem:[#allocation2 + $0x110] sm:$0xff]
        %v476 = vld [vmem:[#allocation2 + $0x120] sm:$0xff]
        %v477 = vld [vmem:[#allocation2 + $0x128] sm:$0xff]
        %v478 = vld [vmem:[#allocation2 + $0x138] sm:$0xff]
        %v479 = vld [vmem:[#allocation2 + $0x140] sm:$0xff]
        %v480 = vld [vmem:[#allocation2 + $0x150] sm:$0xff]
        %v481 = vld [vmem:[#allocation2 + $0x158] sm:$0xff]
        %v482 = vld [vmem:[#allocation2 + $0x168] sm:$0xff]
        %v483 = vld [vmem:[#allocation2 + $0x170] sm:$0xff]
        %v484 = vpack.c.bf16 %v453, %v452
        %v485 = vpack.c.bf16 %v455, %v454
        %v486 = vpack.c.bf16 %v457, %v456
        %v487 = vpack.c.bf16 %v459, %v458
        %v488 = vpack.c.bf16 %v461, %v460
        %v489 = vpack.c.bf16 %v463, %v462
        %v490 = vpack.c.bf16 %v465, %v464
        %v491 = vpack.c.bf16 %v467, %v466
        %v492 = vpack.c.bf16 %v469, %v468
        %v493 = vpack.c.bf16 %v471, %v470
        %v494 = vpack.c.bf16 %v473, %v472
        %v495 = vpack.c.bf16 %v475, %v474
        %v496 = vpack.c.bf16 %v477, %v476
        %v497 = vpack.c.bf16 %v479, %v478
        %v498 = vpack.c.bf16 %v481, %v480
        %v499 = vpack.c.bf16 %v483, %v482
        %v500 = vld [vmem:[%s1] sm:$0x3]
        %v501 = vld [vmem:[#allocation2 + $0x1] sm:$0xff]
        %v502 = vld [vmem:[#allocation2 + $0x9] sm:$0xff]
        %v503 = vld [vmem:[#allocation2 + $0x19] sm:$0xff]
        %v504 = vld [vmem:[#allocation2 + $0x21] sm:$0xff]
        %v505 = vld [vmem:[#allocation2 + $0x31] sm:$0xff]
        %v506 = vld [vmem:[#allocation2 + $0x39] sm:$0xff]
        %v507 = vld [vmem:[#allocation2 + $0x49] sm:$0xff]
        %v508 = vld [vmem:[#allocation2 + $0x51] sm:$0xff]
        %v509 = vld [vmem:[#allocation2 + $0x61] sm:$0xff]
        %v510 = vld [vmem:[#allocation2 + $0x69] sm:$0xff]
        %v511 = vld [vmem:[#allocation2 + $0x79] sm:$0xff]
        %v512 = vld [vmem:[#allocation2 + $0x81] sm:$0xff]
        %v513 = vld [vmem:[#allocation2 + $0x91] sm:$0xff]
        %v514 = vld [vmem:[#allocation2 + $0x99] sm:$0xff]
        %v515 = vld [vmem:[#allocation2 + $0xa9] sm:$0xff]
        %v516 = vld [vmem:[#allocation2 + $0xb1] sm:$0xff]
        %v517 = vld [vmem:[#allocation2 + $0xc1] sm:$0xff]
        %v518 = vld [vmem:[#allocation2 + $0xc9] sm:$0xff]
        %v519 = vld [vmem:[#allocation2 + $0xd9] sm:$0xff]
        %v520 = vld [vmem:[#allocation2 + $0xe1] sm:$0xff]
        %v521 = vld [vmem:[#allocation2 + $0xf1] sm:$0xff]
        %v522 = vld [vmem:[#allocation2 + $0xf9] sm:$0xff]
        %v523 = vld [vmem:[#allocation2 + $0x109] sm:$0xff]
        %v524 = vld [vmem:[#allocation2 + $0x111] sm:$0xff]
        %v525 = vld [vmem:[#allocation2 + $0x121] sm:$0xff]
        %v526 = vld [vmem:[#allocation2 + $0x129] sm:$0xff]
        %v527 = vld [vmem:[#allocation2 + $0x139] sm:$0xff]
        %v528 = vld [vmem:[#allocation2 + $0x141] sm:$0xff]
        %v529 = vld [vmem:[#allocation2 + $0x151] sm:$0xff]
        %v530 = vld [vmem:[#allocation2 + $0x159] sm:$0xff]
        %v531 = vld [vmem:[#allocation2 + $0x169] sm:$0xff]
        %v532 = vld [vmem:[#allocation2 + $0x171] sm:$0xff]
        %v533 = vpack.c.bf16 %v502, %v501
        %v534 = vpack.c.bf16 %v504, %v503
        %v535 = vpack.c.bf16 %v506, %v505
        %v536 = vpack.c.bf16 %v508, %v507
        %v537 = vpack.c.bf16 %v510, %v509
        %v538 = vpack.c.bf16 %v512, %v511
        %v539 = vpack.c.bf16 %v514, %v513
        %v540 = vpack.c.bf16 %v516, %v515
        %v541 = vpack.c.bf16 %v518, %v517
        %v542 = vpack.c.bf16 %v520, %v519
        %v543 = vpack.c.bf16 %v522, %v521
        %v544 = vpack.c.bf16 %v524, %v523
        %v545 = vpack.c.bf16 %v526, %v525
        %v546 = vpack.c.bf16 %v528, %v527
        %v547 = vpack.c.bf16 %v530, %v529
        %v548 = vpack.c.bf16 %v532, %v531
        %s549 = scalar_lea.vmem %s1, 2
        %v550 = vld [vmem:[%s549] sm:$0x3]
        %v552 = vsel %vm363, %v533, 0
        %v555 = vsel %vm363, %v534, 0
        %v558 = vsel %vm363, %v535, 0
        %v561 = vsel %vm363, %v536, 0
        %v564 = vsel %vm363, %v537, 0
        %v567 = vsel %vm363, %v538, 0
        %v570 = vsel %vm363, %v539, 0
        %v573 = vsel %vm363, %v540, 0
        %v576 = vsel %vm363, %v541, 0
        %v579 = vsel %vm363, %v542, 0
        %v582 = vsel %vm363, %v543, 0
        %v585 = vsel %vm363, %v544, 0
        %v588 = vsel %vm363, %v545, 0
        %v591 = vsel %vm363, %v546, 0
        %v594 = vsel %vm363, %v547, 0
        %v597 = vsel %vm363, %v548, 0
        %vm599 = vcmask 1041408
        %v601 = vsel %vm599, %v550, 0
        %603 = vmatprep.subr.bf16.mxu0 0
        %604 = vmatpush1.bf16.msra.mxu0 %v601
        %605 = vmatprep.subr.bf16.mxu0 0
        %606 = vmatpush1.bf16.msra.mxu0 0
        %607 = vmatprep.subr.bf16.mxu0 0
        %608 = vmatpush1.bf16.msra.mxu0 0
        %609 = vmatprep.subr.bf16.mxu0 0
        %610 = vmatpush1.bf16.msra.mxu0 0
        %611 = vmatprep.subr.bf16.mxu0 0
        %612 = vmatpush1.bf16.msra.mxu0 0
        %613 = vmatprep.subr.bf16.mxu0 0
        %614 = vmatpush1.bf16.msra.mxu0 0
        %615 = vmatprep.subr.bf16.mxu0 0
        %616 = vmatpush1.bf16.msra.mxu0 0
        %617 = vmatprep.subr.bf16.mxu0 0
        %618 = vmatpush1.bf16.msra.mxu0 0
        %619 = vmatprep.subr.bf16.mxu0 0
        %620 = vmatpush1.bf16.msra.mxu0 0
        %621 = vmatprep.subr.bf16.mxu0 0
        %622 = vmatpush1.bf16.msra.mxu0 0
        %623 = vmatprep.subr.bf16.mxu0 0
        %624 = vmatpush1.bf16.msra.mxu0 0
        %625 = vmatprep.subr.bf16.mxu0 0
        %626 = vmatpush1.bf16.msra.mxu0 0
        %627 = vmatprep.subr.bf16.mxu0 0
        %628 = vmatpush1.bf16.msra.mxu0 0
        %629 = vmatprep.subr.bf16.mxu0 0
        %630 = vmatpush1.bf16.msra.mxu0 0
        %631 = vmatprep.subr.bf16.mxu0 0
        %632 = vmatpush1.bf16.msra.mxu0 0
        %633 = vmatprep.subr.bf16.mxu0 0
        %634 = vmatpush1.bf16.msra.mxu0 0
        %635 = vmatprep.mubr.bf16.mxu0 0
        %636 = vmatmul.mubr.bf16.gmra.mrb[0].mxu0 %v552
        %v637 = vpop.f32.mrb[0].mxu0
        %v638 = vadd.f32 0.0, %v637
        %v639 = vpop.f32.mrb[0].mxu0
        %v640 = vpop.f32.mrb[0].mxu0
        %v641 = vadd.f32 0.0, %v640
        %v642 = vpop.f32.mrb[0].mxu0
        %643 = vmatprep.mubr.bf16.mxu0 0
        %644 = vmatmul.mubr.bf16.gmra.mrb[0].mxu0 %v555
        %v645 = vpop.f32.mrb[0].mxu0
        %v646 = vadd.f32 0.0, %v645
        %v647 = vpop.f32.mrb[0].mxu0
        %v648 = vpop.f32.mrb[0].mxu0
        %v649 = vadd.f32 0.0, %v648
        %v650 = vpop.f32.mrb[0].mxu0
        %651 = vmatprep.mubr.bf16.mxu0 0
        %652 = vmatmul.mubr.bf16.gmra.mrb[0].mxu0 %v558
        %v653 = vpop.f32.mrb[0].mxu0
        %v654 = vadd.f32 0.0, %v653
        %v655 = vpop.f32.mrb[0].mxu0
        %v656 = vpop.f32.mrb[0].mxu0
        %v657 = vadd.f32 0.0, %v656
        %v658 = vpop.f32.mrb[0].mxu0
        %659 = vmatprep.mubr.bf16.mxu0 0
        %660 = vmatmul.mubr.bf16.gmra.mrb[0].mxu0 %v561
        %v661 = vpop.f32.mrb[0].mxu0
        %v662 = vadd.f32 0.0, %v661
        %v663 = vpop.f32.mrb[0].mxu0
        %v664 = vpop.f32.mrb[0].mxu0
        %v665 = vadd.f32 0.0, %v664
        %v666 = vpop.f32.mrb[0].mxu0
        %667 = vmatprep.mubr.bf16.mxu0 0
        %668 = vmatmul.mubr.bf16.gmra.mrb[0].mxu0 %v564
        %v669 = vpop.f32.mrb[0].mxu0
        %v670 = vadd.f32 0.0, %v669
        %v671 = vpop.f32.mrb[0].mxu0
        %v672 = vpop.f32.mrb[0].mxu0
        %v673 = vadd.f32 0.0, %v672
        %v674 = vpop.f32.mrb[0].mxu0
        %675 = vmatprep.mubr.bf16.mxu0 0
        %676 = vmatmul.mubr.bf16.gmra.mrb[0].mxu0 %v567
        %v677 = vpop.f32.mrb[0].mxu0
        %v678 = vadd.f32 0.0, %v677
        %v679 = vpop.f32.mrb[0].mxu0
        %v680 = vpop.f32.mrb[0].mxu0
        %v681 = vadd.f32 0.0, %v680
        %v682 = vpop.f32.mrb[0].mxu0
        %683 = vmatprep.mubr.bf16.mxu0 0
        %684 = vmatmul.mubr.bf16.gmra.mrb[0].mxu0 %v570
        %v685 = vpop.f32.mrb[0].mxu0
        %v686 = vadd.f32 0.0, %v685
        %v687 = vpop.f32.mrb[0].mxu0
        %v688 = vpop.f32.mrb[0].mxu0
        %v689 = vadd.f32 0.0, %v688
        %v690 = vpop.f32.mrb[0].mxu0
        %691 = vmatprep.mubr.bf16.mxu0 0
        %692 = vmatmul.mubr.bf16.gmra.mrb[0].mxu0 %v573
        %v693 = vpop.f32.mrb[0].mxu0
        %v694 = vadd.f32 0.0, %v693
        %v695 = vpop.f32.mrb[0].mxu0
        %v696 = vpop.f32.mrb[0].mxu0
        %v697 = vadd.f32 0.0, %v696
        %v698 = vpop.f32.mrb[0].mxu0
        %699 = vmatprep.mubr.bf16.mxu0 0
        %700 = vmatmul.mubr.bf16.gmra.mrb[0].mxu0 %v576
        %v701 = vpop.f32.mrb[0].mxu0
        %v702 = vadd.f32 0.0, %v701
        %v703 = vpop.f32.mrb[0].mxu0
        %v704 = vpop.f32.mrb[0].mxu0
        %v705 = vadd.f32 0.0, %v704
        %v706 = vpop.f32.mrb[0].mxu0
        %707 = vmatprep.mubr.bf16.mxu0 0
        %708 = vmatmul.mubr.bf16.gmra.mrb[0].mxu0 %v579
        %v709 = vpop.f32.mrb[0].mxu0
        %v710 = vadd.f32 0.0, %v709
        %v711 = vpop.f32.mrb[0].mxu0
        %v712 = vpop.f32.mrb[0].mxu0
        %v713 = vadd.f32 0.0, %v712
        %v714 = vpop.f32.mrb[0].mxu0
        %715 = vmatprep.mubr.bf16.mxu0 0
        %716 = vmatmul.mubr.bf16.gmra.mrb[0].mxu0 %v582
        %v717 = vpop.f32.mrb[0].mxu0
        %v718 = vadd.f32 0.0, %v717
        %v719 = vpop.f32.mrb[0].mxu0
        %v720 = vpop.f32.mrb[0].mxu0
        %v721 = vadd.f32 0.0, %v720
        %v722 = vpop.f32.mrb[0].mxu0
        %723 = vmatprep.mubr.bf16.mxu0 0
        %724 = vmatmul.mubr.bf16.gmra.mrb[0].mxu0 %v585
        %v725 = vpop.f32.mrb[0].mxu0
        %v726 = vadd.f32 0.0, %v725
        %v727 = vpop.f32.mrb[0].mxu0
        %v728 = vpop.f32.mrb[0].mxu0
        %v729 = vadd.f32 0.0, %v728
        %v730 = vpop.f32.mrb[0].mxu0
        %731 = vmatprep.mubr.bf16.mxu0 0
        %732 = vmatmul.mubr.bf16.gmra.mrb[0].mxu0 %v588
        %v733 = vpop.f32.mrb[0].mxu0
        %v734 = vadd.f32 0.0, %v733
        %v735 = vpop.f32.mrb[0].mxu0
        %v736 = vpop.f32.mrb[0].mxu0
        %v737 = vadd.f32 0.0, %v736
        %v738 = vpop.f32.mrb[0].mxu0
        %739 = vmatprep.mubr.bf16.mxu0 0
        %740 = vmatmul.mubr.bf16.gmra.mrb[0].mxu0 %v591
        %v741 = vpop.f32.mrb[0].mxu0
        %v742 = vadd.f32 0.0, %v741
        %v743 = vpop.f32.mrb[0].mxu0
        %v744 = vpop.f32.mrb[0].mxu0
        %v745 = vadd.f32 0.0, %v744
        %v746 = vpop.f32.mrb[0].mxu0
        %747 = vmatprep.mubr.bf16.mxu0 0
        %748 = vmatmul.mubr.bf16.gmra.mrb[0].mxu0 %v594
        %v749 = vpop.f32.mrb[0].mxu0
        %v750 = vadd.f32 0.0, %v749
        %v751 = vpop.f32.mrb[0].mxu0
        %v752 = vpop.f32.mrb[0].mxu0
        %v753 = vadd.f32 0.0, %v752
        %v754 = vpop.f32.mrb[0].mxu0
        %755 = vmatprep.mubr.bf16.mxu0 0
        %756 = vmatmul.mubr.bf16.gmra.mrb[0].mxu0 %v597
        %v757 = vpop.f32.mrb[0].mxu0
        %v758 = vadd.f32 0.0, %v757
        %v759 = vpop.f32.mrb[0].mxu0
        %v760 = vpop.f32.mrb[0].mxu0
        %v761 = vadd.f32 0.0, %v760
        %v762 = vpop.f32.mrb[0].mxu0
        %763 = vdwg.mxu0
        %v765 = vsel %vm363, %v484, 0
        %v768 = vsel %vm363, %v485, 0
        %v771 = vsel %vm363, %v486, 0
        %v774 = vsel %vm363, %v487, 0
        %v777 = vsel %vm363, %v488, 0
        %v780 = vsel %vm363, %v489, 0
        %v783 = vsel %vm363, %v490, 0
        %v786 = vsel %vm363, %v491, 0
        %v789 = vsel %vm363, %v492, 0
        %v792 = vsel %vm363, %v493, 0
        %v795 = vsel %vm363, %v494, 0
        %v798 = vsel %vm363, %v495, 0
        %v801 = vsel %vm363, %v496, 0
        %v804 = vsel %vm363, %v497, 0
        %v807 = vsel %vm363, %v498, 0
        %v810 = vsel %vm363, %v499, 0
        %v813 = vsel %vm599, %v500, 0
        %815 = vmatprep.subr.bf16.mxu0 0
        %816 = vmatpush1.bf16.msra.mxu0 %v813
        %817 = vmatprep.subr.bf16.mxu0 0
        %818 = vmatpush1.bf16.msra.mxu0 0
        %819 = vmatprep.subr.bf16.mxu0 0
        %820 = vmatpush1.bf16.msra.mxu0 0
        %821 = vmatprep.subr.bf16.mxu0 0
        %822 = vmatpush1.bf16.msra.mxu0 0
        %823 = vmatprep.subr.bf16.mxu0 0
        %824 = vmatpush1.bf16.msra.mxu0 0
        %825 = vmatprep.subr.bf16.mxu0 0
        %826 = vmatpush1.bf16.msra.mxu0 0
        %827 = vmatprep.subr.bf16.mxu0 0
        %828 = vmatpush1.bf16.msra.mxu0 0
        %829 = vmatprep.subr.bf16.mxu0 0
        %830 = vmatpush1.bf16.msra.mxu0 0
        %831 = vmatprep.subr.bf16.mxu0 0
        %832 = vmatpush1.bf16.msra.mxu0 0
        %833 = vmatprep.subr.bf16.mxu0 0
        %834 = vmatpush1.bf16.msra.mxu0 0
        %835 = vmatprep.subr.bf16.mxu0 0
        %836 = vmatpush1.bf16.msra.mxu0 0
        %837 = vmatprep.subr.bf16.mxu0 0
        %838 = vmatpush1.bf16.msra.mxu0 0
        %839 = vmatprep.subr.bf16.mxu0 0
        %840 = vmatpush1.bf16.msra.mxu0 0
        %841 = vmatprep.subr.bf16.mxu0 0
        %842 = vmatpush1.bf16.msra.mxu0 0
        %843 = vmatprep.subr.bf16.mxu0 0
        %844 = vmatpush1.bf16.msra.mxu0 0
        %845 = vmatprep.subr.bf16.mxu0 0
        %846 = vmatpush1.bf16.msra.mxu0 0
        %847 = vmatprep.mubr.bf16.mxu0 0
        %848 = vmatmul.mubr.bf16.gmra.mrb[0].mxu0 %v765
        %v849 = vpop.f32.mrb[0].mxu0
        %v850 = vadd.f32 %v638, %v849
        %v851 = vpop.f32.mrb[0].mxu0
        %v852 = vpop.f32.mrb[0].mxu0
        %v853 = vadd.f32 %v641, %v852
        %v854 = vpop.f32.mrb[0].mxu0
        %855 = vmatprep.mubr.bf16.mxu0 0
        %856 = vmatmul.mubr.bf16.gmra.mrb[0].mxu0 %v768
        %v857 = vpop.f32.mrb[0].mxu0
        %v858 = vadd.f32 %v646, %v857
        %v859 = vpop.f32.mrb[0].mxu0
        %v860 = vpop.f32.mrb[0].mxu0
        %v861 = vadd.f32 %v649, %v860
        %v862 = vpop.f32.mrb[0].mxu0
        %863 = vmatprep.mubr.bf16.mxu0 0
        %864 = vmatmul.mubr.bf16.gmra.mrb[0].mxu0 %v771
        %v865 = vpop.f32.mrb[0].mxu0
        %v866 = vadd.f32 %v654, %v865
        %v867 = vpop.f32.mrb[0].mxu0
        %v868 = vpop.f32.mrb[0].mxu0
        %v869 = vadd.f32 %v657, %v868
        %v870 = vpop.f32.mrb[0].mxu0
        %871 = vmatprep.mubr.bf16.mxu0 0
        %872 = vmatmul.mubr.bf16.gmra.mrb[0].mxu0 %v774
        %v873 = vpop.f32.mrb[0].mxu0
        %v874 = vadd.f32 %v662, %v873
        %v875 = vpop.f32.mrb[0].mxu0
        %v876 = vpop.f32.mrb[0].mxu0
        %v877 = vadd.f32 %v665, %v876
        %v878 = vpop.f32.mrb[0].mxu0
        %879 = vmatprep.mubr.bf16.mxu0 0
        %880 = vmatmul.mubr.bf16.gmra.mrb[0].mxu0 %v777
        %v881 = vpop.f32.mrb[0].mxu0
        %v882 = vadd.f32 %v670, %v881
        %v883 = vpop.f32.mrb[0].mxu0
        %v884 = vpop.f32.mrb[0].mxu0
        %v885 = vadd.f32 %v673, %v884
        %v886 = vpop.f32.mrb[0].mxu0
        %887 = vmatprep.mubr.bf16.mxu0 0
        %888 = vmatmul.mubr.bf16.gmra.mrb[0].mxu0 %v780
        %v889 = vpop.f32.mrb[0].mxu0
        %v890 = vadd.f32 %v678, %v889
        %v891 = vpop.f32.mrb[0].mxu0
        %v892 = vpop.f32.mrb[0].mxu0
        %v893 = vadd.f32 %v681, %v892
        %v894 = vpop.f32.mrb[0].mxu0
        %895 = vmatprep.mubr.bf16.mxu0 0
        %896 = vmatmul.mubr.bf16.gmra.mrb[0].mxu0 %v783
        %v897 = vpop.f32.mrb[0].mxu0
        %v898 = vadd.f32 %v686, %v897
        %v899 = vpop.f32.mrb[0].mxu0
        %v900 = vpop.f32.mrb[0].mxu0
        %v901 = vadd.f32 %v689, %v900
        %v902 = vpop.f32.mrb[0].mxu0
        %903 = vmatprep.mubr.bf16.mxu0 0
        %904 = vmatmul.mubr.bf16.gmra.mrb[0].mxu0 %v786
        %v905 = vpop.f32.mrb[0].mxu0
        %v906 = vadd.f32 %v694, %v905
        %v907 = vpop.f32.mrb[0].mxu0
        %v908 = vpop.f32.mrb[0].mxu0
        %v909 = vadd.f32 %v697, %v908
        %v910 = vpop.f32.mrb[0].mxu0
        %911 = vmatprep.mubr.bf16.mxu0 0
        %912 = vmatmul.mubr.bf16.gmra.mrb[0].mxu0 %v789
        %v913 = vpop.f32.mrb[0].mxu0
        %v914 = vadd.f32 %v702, %v913
        %v915 = vpop.f32.mrb[0].mxu0
        %v916 = vpop.f32.mrb[0].mxu0
        %v917 = vadd.f32 %v705, %v916
        %v918 = vpop.f32.mrb[0].mxu0
        %919 = vmatprep.mubr.bf16.mxu0 0
        %920 = vmatmul.mubr.bf16.gmra.mrb[0].mxu0 %v792
        %v921 = vpop.f32.mrb[0].mxu0
        %v922 = vadd.f32 %v710, %v921
        %v923 = vpop.f32.mrb[0].mxu0
        %v924 = vpop.f32.mrb[0].mxu0
        %v925 = vadd.f32 %v713, %v924
        %v926 = vpop.f32.mrb[0].mxu0
        %927 = vmatprep.mubr.bf16.mxu0 0
        %928 = vmatmul.mubr.bf16.gmra.mrb[0].mxu0 %v795
        %v929 = vpop.f32.mrb[0].mxu0
        %v930 = vadd.f32 %v718, %v929
        %v931 = vpop.f32.mrb[0].mxu0
        %v932 = vpop.f32.mrb[0].mxu0
        %v933 = vadd.f32 %v721, %v932
        %v934 = vpop.f32.mrb[0].mxu0
        %935 = vmatprep.mubr.bf16.mxu0 0
        %936 = vmatmul.mubr.bf16.gmra.mrb[0].mxu0 %v798
        %v937 = vpop.f32.mrb[0].mxu0
        %v938 = vadd.f32 %v726, %v937
        %v939 = vpop.f32.mrb[0].mxu0
        %v940 = vpop.f32.mrb[0].mxu0
        %v941 = vadd.f32 %v729, %v940
        %v942 = vpop.f32.mrb[0].mxu0
        %943 = vmatprep.mubr.bf16.mxu0 0
        %944 = vmatmul.mubr.bf16.gmra.mrb[0].mxu0 %v801
        %v945 = vpop.f32.mrb[0].mxu0
        %v946 = vadd.f32 %v734, %v945
        %v947 = vpop.f32.mrb[0].mxu0
        %v948 = vpop.f32.mrb[0].mxu0
        %v949 = vadd.f32 %v737, %v948
        %v950 = vpop.f32.mrb[0].mxu0
        %951 = vmatprep.mubr.bf16.mxu0 0
        %952 = vmatmul.mubr.bf16.gmra.mrb[0].mxu0 %v804
        %v953 = vpop.f32.mrb[0].mxu0
        %v954 = vadd.f32 %v742, %v953
        %v955 = vpop.f32.mrb[0].mxu0
        %v956 = vpop.f32.mrb[0].mxu0
        %v957 = vadd.f32 %v745, %v956
        %v958 = vpop.f32.mrb[0].mxu0
        %959 = vmatprep.mubr.bf16.mxu0 0
        %960 = vmatmul.mubr.bf16.gmra.mrb[0].mxu0 %v807
        %v961 = vpop.f32.mrb[0].mxu0
        %v962 = vadd.f32 %v750, %v961
        %v963 = vpop.f32.mrb[0].mxu0
        %v964 = vpop.f32.mrb[0].mxu0
        %v965 = vadd.f32 %v753, %v964
        %v966 = vpop.f32.mrb[0].mxu0
        %967 = vmatprep.mubr.bf16.mxu0 0
        %968 = vmatmul.mubr.bf16.gmra.mrb[0].mxu0 %v810
        %v969 = vpop.f32.mrb[0].mxu0
        %v970 = vadd.f32 %v758, %v969
        %v971 = vpop.f32.mrb[0].mxu0
        %v972 = vpop.f32.mrb[0].mxu0
        %v973 = vadd.f32 %v761, %v972
        %v974 = vpop.f32.mrb[0].mxu0
        %975 = vdwg.mxu0
        %v976 = vld [vmem:[#allocation2 + $0x2] sm:$0xff]
        %v977 = vld [vmem:[#allocation2 + $0xa] sm:$0xff]
        %v978 = vld [vmem:[#allocation2 + $0x1a] sm:$0xff]
        %v979 = vld [vmem:[#allocation2 + $0x22] sm:$0xff]
        %v980 = vld [vmem:[#allocation2 + $0x32] sm:$0xff]
        %v981 = vld [vmem:[#allocation2 + $0x3a] sm:$0xff]
        %v982 = vld [vmem:[#allocation2 + $0x4a] sm:$0xff]
        %v983 = vld [vmem:[#allocation2 + $0x52] sm:$0xff]
        %v984 = vld [vmem:[#allocation2 + $0x62] sm:$0xff]
        %v985 = vld [vmem:[#allocation2 + $0x6a] sm:$0xff]
        %v986 = vld [vmem:[#allocation2 + $0x7a] sm:$0xff]
        %v987 = vld [vmem:[#allocation2 + $0x82] sm:$0xff]
        %v988 = vld [vmem:[#allocation2 + $0x92] sm:$0xff]
        %v989 = vld [vmem:[#allocation2 + $0x9a] sm:$0xff]
        %v990 = vld [vmem:[#allocation2 + $0xaa] sm:$0xff]
        %v991 = vld [vmem:[#allocation2 + $0xb2] sm:$0xff]
        %v992 = vld [vmem:[#allocation2 + $0xc2] sm:$0xff]
        %v993 = vld [vmem:[#allocation2 + $0xca] sm:$0xff]
        %v994 = vld [vmem:[#allocation2 + $0xda] sm:$0xff]
        %v995 = vld [vmem:[#allocation2 + $0xe2] sm:$0xff]
        %v996 = vld [vmem:[#allocation2 + $0xf2] sm:$0xff]
        %v997 = vld [vmem:[#allocation2 + $0xfa] sm:$0xff]
        %v998 = vld [vmem:[#allocation2 + $0x10a] sm:$0xff]
        %v999 = vld [vmem:[#allocation2 + $0x112] sm:$0xff]
        %v1000 = vld [vmem:[#allocation2 + $0x122] sm:$0xff]
        %v1001 = vld [vmem:[#allocation2 + $0x12a] sm:$0xff]
        %v1002 = vld [vmem:[#allocation2 + $0x13a] sm:$0xff]
        %v1003 = vld [vmem:[#allocation2 + $0x142] sm:$0xff]
        %v1004 = vld [vmem:[#allocation2 + $0x152] sm:$0xff]
        %v1005 = vld [vmem:[#allocation2 + $0x15a] sm:$0xff]
        %v1006 = vld [vmem:[#allocation2 + $0x16a] sm:$0xff]
        %v1007 = vld [vmem:[#allocation2 + $0x172] sm:$0xff]
        %v1008 = vpack.c.bf16 %v977, %v976
        %v1009 = vpack.c.bf16 %v979, %v978
        %v1010 = vpack.c.bf16 %v981, %v980
        %v1011 = vpack.c.bf16 %v983, %v982
        %v1012 = vpack.c.bf16 %v985, %v984
        %v1013 = vpack.c.bf16 %v987, %v986
        %v1014 = vpack.c.bf16 %v989, %v988
        %v1015 = vpack.c.bf16 %v991, %v990
        %v1016 = vpack.c.bf16 %v993, %v992
        %v1017 = vpack.c.bf16 %v995, %v994
        %v1018 = vpack.c.bf16 %v997, %v996
        %v1019 = vpack.c.bf16 %v999, %v998
        %v1020 = vpack.c.bf16 %v1001, %v1000
        %v1021 = vpack.c.bf16 %v1003, %v1002
        %v1022 = vpack.c.bf16 %v1005, %v1004
        %v1023 = vpack.c.bf16 %v1007, %v1006
        %s1024 = scalar_lea.vmem %s1, 4
        %v1025 = vld [vmem:[%s1024] sm:$0x3]
        %v1027 = vsel %vm363, %v1008, 0
        %v1030 = vsel %vm363, %v1009, 0
        %v1033 = vsel %vm363, %v1010, 0
        %v1036 = vsel %vm363, %v1011, 0
        %v1039 = vsel %vm363, %v1012, 0
        %v1042 = vsel %vm363, %v1013, 0
        %v1045 = vsel %vm363, %v1014, 0
        %v1048 = vsel %vm363, %v1015, 0
        %v1051 = vsel %vm363, %v1016, 0
        %v1054 = vsel %vm363, %v1017, 0
        %v1057 = vsel %vm363, %v1018, 0
        %v1060 = vsel %vm363, %v1019, 0
        %v1063 = vsel %vm363, %v1020, 0
        %v1066 = vsel %vm363, %v1021, 0
        %v1069 = vsel %vm363, %v1022, 0
        %v1072 = vsel %vm363, %v1023, 0
        %v1075 = vsel %vm599, %v1025, 0
        %1077 = vmatprep.subr.bf16.mxu0 0
        %1078 = vmatpush1.bf16.msra.mxu0 %v1075
        %1079 = vmatprep.subr.bf16.mxu0 0
        %1080 = vmatpush1.bf16.msra.mxu0 0
        %1081 = vmatprep.subr.bf16.mxu0 0
        %1082 = vmatpush1.bf16.msra.mxu0 0
        %1083 = vmatprep.subr.bf16.mxu0 0
        %1084 = vmatpush1.bf16.msra.mxu0 0
        %1085 = vmatprep.subr.bf16.mxu0 0
        %1086 = vmatpush1.bf16.msra.mxu0 0
        %1087 = vmatprep.subr.bf16.mxu0 0
        %1088 = vmatpush1.bf16.msra.mxu0 0
        %1089 = vmatprep.subr.bf16.mxu0 0
        %1090 = vmatpush1.bf16.msra.mxu0 0
        %1091 = vmatprep.subr.bf16.mxu0 0
        %1092 = vmatpush1.bf16.msra.mxu0 0
        %1093 = vmatprep.subr.bf16.mxu0 0
        %1094 = vmatpush1.bf16.msra.mxu0 0
        %1095 = vmatprep.subr.bf16.mxu0 0
        %1096 = vmatpush1.bf16.msra.mxu0 0
        %1097 = vmatprep.subr.bf16.mxu0 0
        %1098 = vmatpush1.bf16.msra.mxu0 0
        %1099 = vmatprep.subr.bf16.mxu0 0
        %1100 = vmatpush1.bf16.msra.mxu0 0
        %1101 = vmatprep.subr.bf16.mxu0 0
        %1102 = vmatpush1.bf16.msra.mxu0 0
        %1103 = vmatprep.subr.bf16.mxu0 0
        %1104 = vmatpush1.bf16.msra.mxu0 0
        %1105 = vmatprep.subr.bf16.mxu0 0
        %1106 = vmatpush1.bf16.msra.mxu0 0
        %1107 = vmatprep.subr.bf16.mxu0 0
        %1108 = vmatpush1.bf16.msra.mxu0 0
        %1109 = vmatprep.mubr.bf16.mxu0 0
        %1110 = vmatmul.mubr.bf16.gmra.mrb[0].mxu0 %v1027
        %v1111 = vpop.f32.mrb[0].mxu0
        %v1112 = vadd.f32 0.0, %v1111
        %v1113 = vpop.f32.mrb[0].mxu0
        %v1114 = vpop.f32.mrb[0].mxu0
        %v1115 = vadd.f32 0.0, %v1114
        %v1116 = vpop.f32.mrb[0].mxu0
        %1117 = vmatprep.mubr.bf16.mxu0 0
        %1118 = vmatmul.mubr.bf16.gmra.mrb[0].mxu0 %v1030
        %v1119 = vpop.f32.mrb[0].mxu0
        %v1120 = vadd.f32 0.0, %v1119
        %v1121 = vpop.f32.mrb[0].mxu0
        %v1122 = vpop.f32.mrb[0].mxu0
        %v1123 = vadd.f32 0.0, %v1122
        %v1124 = vpop.f32.mrb[0].mxu0
        %1125 = vmatprep.mubr.bf16.mxu0 0
        %1126 = vmatmul.mubr.bf16.gmra.mrb[0].mxu0 %v1033
        %v1127 = vpop.f32.mrb[0].mxu0
        %v1128 = vadd.f32 0.0, %v1127
        %v1129 = vpop.f32.mrb[0].mxu0
        %v1130 = vpop.f32.mrb[0].mxu0
        %v1131 = vadd.f32 0.0, %v1130
        %v1132 = vpop.f32.mrb[0].mxu0
        %1133 = vmatprep.mubr.bf16.mxu0 0
        %1134 = vmatmul.mubr.bf16.gmra.mrb[0].mxu0 %v1036
        %v1135 = vpop.f32.mrb[0].mxu0
        %v1136 = vadd.f32 0.0, %v1135
        %v1137 = vpop.f32.mrb[0].mxu0
        %v1138 = vpop.f32.mrb[0].mxu0
        %v1139 = vadd.f32 0.0, %v1138
        %v1140 = vpop.f32.mrb[0].mxu0
        %1141 = vmatprep.mubr.bf16.mxu0 0
        %1142 = vmatmul.mubr.bf16.gmra.mrb[0].mxu0 %v1039
        %v1143 = vpop.f32.mrb[0].mxu0
        %v1144 = vadd.f32 0.0, %v1143
        %v1145 = vpop.f32.mrb[0].mxu0
        %v1146 = vpop.f32.mrb[0].mxu0
        %v1147 = vadd.f32 0.0, %v1146
        %v1148 = vpop.f32.mrb[0].mxu0
        %1149 = vmatprep.mubr.bf16.mxu0 0
        %1150 = vmatmul.mubr.bf16.gmra.mrb[0].mxu0 %v1042
        %v1151 = vpop.f32.mrb[0].mxu0
        %v1152 = vadd.f32 0.0, %v1151
        %v1153 = vpop.f32.mrb[0].mxu0
        %v1154 = vpop.f32.mrb[0].mxu0
        %v1155 = vadd.f32 0.0, %v1154
        %v1156 = vpop.f32.mrb[0].mxu0
        %1157 = vmatprep.mubr.bf16.mxu0 0
        %1158 = vmatmul.mubr.bf16.gmra.mrb[0].mxu0 %v1045
        %v1159 = vpop.f32.mrb[0].mxu0
        %v1160 = vadd.f32 0.0, %v1159
        %v1161 = vpop.f32.mrb[0].mxu0
        %v1162 = vpop.f32.mrb[0].mxu0
        %v1163 = vadd.f32 0.0, %v1162
        %v1164 = vpop.f32.mrb[0].mxu0
        %1165 = vmatprep.mubr.bf16.mxu0 0
        %1166 = vmatmul.mubr.bf16.gmra.mrb[0].mxu0 %v1048
        %v1167 = vpop.f32.mrb[0].mxu0
        %v1168 = vadd.f32 0.0, %v1167
        %v1169 = vpop.f32.mrb[0].mxu0
        %v1170 = vpop.f32.mrb[0].mxu0
        %v1171 = vadd.f32 0.0, %v1170
        %v1172 = vpop.f32.mrb[0].mxu0
        %1173 = vmatprep.mubr.bf16.mxu0 0
        %1174 = vmatmul.mubr.bf16.gmra.mrb[0].mxu0 %v1051
        %v1175 = vpop.f32.mrb[0].mxu0
        %v1176 = vadd.f32 0.0, %v1175
        %v1177 = vpop.f32.mrb[0].mxu0
        %v1178 = vpop.f32.mrb[0].mxu0
        %v1179 = vadd.f32 0.0, %v1178
        %v1180 = vpop.f32.mrb[0].mxu0
        %1181 = vmatprep.mubr.bf16.mxu0 0
        %1182 = vmatmul.mubr.bf16.gmra.mrb[0].mxu0 %v1054
        %v1183 = vpop.f32.mrb[0].mxu0
        %v1184 = vadd.f32 0.0, %v1183
        %v1185 = vpop.f32.mrb[0].mxu0
        %v1186 = vpop.f32.mrb[0].mxu0
        %v1187 = vadd.f32 0.0, %v1186
        %v1188 = vpop.f32.mrb[0].mxu0
        %1189 = vmatprep.mubr.bf16.mxu0 0
        %1190 = vmatmul.mubr.bf16.gmra.mrb[0].mxu0 %v1057
        %v1191 = vpop.f32.mrb[0].mxu0
        %v1192 = vadd.f32 0.0, %v1191
        %v1193 = vpop.f32.mrb[0].mxu0
        %v1194 = vpop.f32.mrb[0].mxu0
        %v1195 = vadd.f32 0.0, %v1194
        %v1196 = vpop.f32.mrb[0].mxu0
        %1197 = vmatprep.mubr.bf16.mxu0 0
        %1198 = vmatmul.mubr.bf16.gmra.mrb[0].mxu0 %v1060
        %v1199 = vpop.f32.mrb[0].mxu0
        %v1200 = vadd.f32 0.0, %v1199
        %v1201 = vpop.f32.mrb[0].mxu0
        %v1202 = vpop.f32.mrb[0].mxu0
        %v1203 = vadd.f32 0.0, %v1202
        %v1204 = vpop.f32.mrb[0].mxu0
        %1205 = vmatprep.mubr.bf16.mxu0 0
        %1206 = vmatmul.mubr.bf16.gmra.mrb[0].mxu0 %v1063
        %v1207 = vpop.f32.mrb[0].mxu0
        %v1208 = vadd.f32 0.0, %v1207
        %v1209 = vpop.f32.mrb[0].mxu0
        %v1210 = vpop.f32.mrb[0].mxu0
        %v1211 = vadd.f32 0.0, %v1210
        %v1212 = vpop.f32.mrb[0].mxu0
        %1213 = vmatprep.mubr.bf16.mxu0 0
        %1214 = vmatmul.mubr.bf16.gmra.mrb[0].mxu0 %v1066
        %v1215 = vpop.f32.mrb[0].mxu0
        %v1216 = vadd.f32 0.0, %v1215
        %v1217 = vpop.f32.mrb[0].mxu0
        %v1218 = vpop.f32.mrb[0].mxu0
        %v1219 = vadd.f32 0.0, %v1218
        %v1220 = vpop.f32.mrb[0].mxu0
        %1221 = vmatprep.mubr.bf16.mxu0 0
        %1222 = vmatmul.mubr.bf16.gmra.mrb[0].mxu0 %v1069
        %v1223 = vpop.f32.mrb[0].mxu0
        %v1224 = vadd.f32 0.0, %v1223
        %v1225 = vpop.f32.mrb[0].mxu0
        %v1226 = vpop.f32.mrb[0].mxu0
        %v1227 = vadd.f32 0.0, %v1226
        %v1228 = vpop.f32.mrb[0].mxu0
        %1229 = vmatprep.mubr.bf16.mxu0 0
        %1230 = vmatmul.mubr.bf16.gmra.mrb[0].mxu0 %v1072
        %v1231 = vpop.f32.mrb[0].mxu0
        %v1232 = vadd.f32 0.0, %v1231
        %v1233 = vpop.f32.mrb[0].mxu0
        %v1234 = vpop.f32.mrb[0].mxu0
        %v1235 = vadd.f32 0.0, %v1234
        %v1236 = vpop.f32.mrb[0].mxu0
        %1237 = vdwg.mxu0
        %v1238 = vadd.f32 %v850, %v1112
        %v1239 = vadd.f32 %v853, %v1115
        %v1240 = vadd.f32 %v858, %v1120
        %v1241 = vadd.f32 %v861, %v1123
        %v1242 = vadd.f32 %v866, %v1128
        %v1243 = vadd.f32 %v869, %v1131
        %v1244 = vadd.f32 %v874, %v1136
        %v1245 = vadd.f32 %v877, %v1139
        %v1246 = vadd.f32 %v882, %v1144
        %v1247 = vadd.f32 %v885, %v1147
        %v1248 = vadd.f32 %v890, %v1152
        %v1249 = vadd.f32 %v893, %v1155
        %v1250 = vadd.f32 %v898, %v1160
        %v1251 = vadd.f32 %v901, %v1163
        %v1252 = vadd.f32 %v906, %v1168
        %v1253 = vadd.f32 %v909, %v1171
        %v1254 = vadd.f32 %v914, %v1176
        %v1255 = vadd.f32 %v917, %v1179
        %v1256 = vadd.f32 %v922, %v1184
        %v1257 = vadd.f32 %v925, %v1187
        %v1258 = vadd.f32 %v930, %v1192
        %v1259 = vadd.f32 %v933, %v1195
        %v1260 = vadd.f32 %v938, %v1200
        %v1261 = vadd.f32 %v941, %v1203
        %v1262 = vadd.f32 %v946, %v1208
        %v1263 = vadd.f32 %v949, %v1211
        %v1264 = vadd.f32 %v954, %v1216
        %v1265 = vadd.f32 %v957, %v1219
        %v1266 = vadd.f32 %v962, %v1224
        %v1267 = vadd.f32 %v965, %v1227
        %v1268 = vadd.f32 %v970, %v1232
        %v1269 = vadd.f32 %v973, %v1235
        %v1270 = vld [vmem:[%s419] sm:$0xff]
        %v1271 = vld [vmem:[%s419 + $0x8] sm:$0xff]
        %v1272 = vld [vmem:[%s419 + $0x18] sm:$0xff]
        %v1273 = vld [vmem:[%s419 + $0x20] sm:$0xff]
        %v1274 = vld [vmem:[%s419 + $0x30] sm:$0xff]
        %v1275 = vld [vmem:[%s419 + $0x38] sm:$0xff]
        %v1276 = vld [vmem:[%s419 + $0x48] sm:$0xff]
        %v1277 = vld [vmem:[%s419 + $0x50] sm:$0xff]
        %v1278 = vld [vmem:[%s419 + $0x60] sm:$0xff]
        %v1279 = vld [vmem:[%s419 + $0x68] sm:$0xff]
        %v1280 = vld [vmem:[%s419 + $0x78] sm:$0xff]
        %v1281 = vld [vmem:[%s419 + $0x80] sm:$0xff]
        %v1282 = vld [vmem:[%s419 + $0x90] sm:$0xff]
        %v1283 = vld [vmem:[%s419 + $0x98] sm:$0xff]
        %v1284 = vld [vmem:[%s419 + $0xa8] sm:$0xff]
        %v1285 = vld [vmem:[%s419 + $0xb0] sm:$0xff]
        %v1286 = vld [vmem:[%s419 + $0xc0] sm:$0xff]
        %v1287 = vld [vmem:[%s419 + $0xc8] sm:$0xff]
        %v1288 = vld [vmem:[%s419 + $0xd8] sm:$0xff]
        %v1289 = vld [vmem:[%s419 + $0xe0] sm:$0xff]
        %v1290 = vld [vmem:[%s419 + $0xf0] sm:$0xff]
        %v1291 = vld [vmem:[%s419 + $0xf8] sm:$0xff]
        %v1292 = vld [vmem:[%s419 + $0x108] sm:$0xff]
        %v1293 = vld [vmem:[%s419 + $0x110] sm:$0xff]
        %v1294 = vld [vmem:[%s419 + $0x120] sm:$0xff]
        %v1295 = vld [vmem:[%s419 + $0x128] sm:$0xff]
        %v1296 = vld [vmem:[%s419 + $0x138] sm:$0xff]
        %v1297 = vld [vmem:[%s419 + $0x140] sm:$0xff]
        %v1298 = vld [vmem:[%s419 + $0x150] sm:$0xff]
        %v1299 = vld [vmem:[%s419 + $0x158] sm:$0xff]
        %v1300 = vld [vmem:[%s419 + $0x168] sm:$0xff]
        %v1301 = vld [vmem:[%s419 + $0x170] sm:$0xff]
        %v1302 = vpack.c.bf16 %v1271, %v1270
        %v1303 = vpack.c.bf16 %v1273, %v1272
        %v1304 = vpack.c.bf16 %v1275, %v1274
        %v1305 = vpack.c.bf16 %v1277, %v1276
        %v1306 = vpack.c.bf16 %v1279, %v1278
        %v1307 = vpack.c.bf16 %v1281, %v1280
        %v1308 = vpack.c.bf16 %v1283, %v1282
        %v1309 = vpack.c.bf16 %v1285, %v1284
        %v1310 = vpack.c.bf16 %v1287, %v1286
        %v1311 = vpack.c.bf16 %v1289, %v1288
        %v1312 = vpack.c.bf16 %v1291, %v1290
        %v1313 = vpack.c.bf16 %v1293, %v1292
        %v1314 = vpack.c.bf16 %v1295, %v1294
        %v1315 = vpack.c.bf16 %v1297, %v1296
        %v1316 = vpack.c.bf16 %v1299, %v1298
        %v1317 = vpack.c.bf16 %v1301, %v1300
        %s1318 = scalar_lea.vmem %s1, 6
        %v1319 = vld [vmem:[%s1318] sm:$0x3]
        %v1321 = vsel %vm363, %v1302, 0
        %v1324 = vsel %vm363, %v1303, 0
        %v1327 = vsel %vm363, %v1304, 0
        %v1330 = vsel %vm363, %v1305, 0
        %v1333 = vsel %vm363, %v1306, 0
        %v1336 = vsel %vm363, %v1307, 0
        %v1339 = vsel %vm363, %v1308, 0
        %v1342 = vsel %vm363, %v1309, 0
        %v1345 = vsel %vm363, %v1310, 0
        %v1348 = vsel %vm363, %v1311, 0
        %v1351 = vsel %vm363, %v1312, 0
        %v1354 = vsel %vm363, %v1313, 0
        %v1357 = vsel %vm363, %v1314, 0
        %v1360 = vsel %vm363, %v1315, 0
        %v1363 = vsel %vm363, %v1316, 0
        %v1366 = vsel %vm363, %v1317, 0
        %v1369 = vsel %vm599, %v1319, 0
        %1371 = vmatprep.subr.bf16.mxu0 0
        %1372 = vmatpush1.bf16.msra.mxu0 %v1369
        %1373 = vmatprep.subr.bf16.mxu0 0
        %1374 = vmatpush1.bf16.msra.mxu0 0
        %1375 = vmatprep.subr.bf16.mxu0 0
        %1376 = vmatpush1.bf16.msra.mxu0 0
        %1377 = vmatprep.subr.bf16.mxu0 0
        %1378 = vmatpush1.bf16.msra.mxu0 0
        %1379 = vmatprep.subr.bf16.mxu0 0
        %1380 = vmatpush1.bf16.msra.mxu0 0
        %1381 = vmatprep.subr.bf16.mxu0 0
        %1382 = vmatpush1.bf16.msra.mxu0 0
        %1383 = vmatprep.subr.bf16.mxu0 0
        %1384 = vmatpush1.bf16.msra.mxu0 0
        %1385 = vmatprep.subr.bf16.mxu0 0
        %1386 = vmatpush1.bf16.msra.mxu0 0
        %1387 = vmatprep.subr.bf16.mxu0 0
        %1388 = vmatpush1.bf16.msra.mxu0 0
        %1389 = vmatprep.subr.bf16.mxu0 0
        %1390 = vmatpush1.bf16.msra.mxu0 0
        %1391 = vmatprep.subr.bf16.mxu0 0
        %1392 = vmatpush1.bf16.msra.mxu0 0
        %1393 = vmatprep.subr.bf16.mxu0 0
        %1394 = vmatpush1.bf16.msra.mxu0 0
        %1395 = vmatprep.subr.bf16.mxu0 0
        %1396 = vmatpush1.bf16.msra.mxu0 0
        %1397 = vmatprep.subr.bf16.mxu0 0
        %1398 = vmatpush1.bf16.msra.mxu0 0
        %1399 = vmatprep.subr.bf16.mxu0 0
        %1400 = vmatpush1.bf16.msra.mxu0 0
        %1401 = vmatprep.subr.bf16.mxu0 0
        %1402 = vmatpush1.bf16.msra.mxu0 0
        %1403 = vmatprep.mubr.bf16.mxu0 0
        %1404 = vmatmul.mubr.bf16.gmra.mrb[0].mxu0 %v1321
        %v1405 = vpop.f32.mrb[0].mxu0
        %v1406 = vadd.f32 0.0, %v1405
        %v1407 = vpop.f32.mrb[0].mxu0
        %v1408 = vpop.f32.mrb[0].mxu0
        %v1409 = vadd.f32 0.0, %v1408
        %v1410 = vpop.f32.mrb[0].mxu0
        %1411 = vmatprep.mubr.bf16.mxu0 0
        %1412 = vmatmul.mubr.bf16.gmra.mrb[0].mxu0 %v1324
        %v1413 = vpop.f32.mrb[0].mxu0
        %v1414 = vadd.f32 0.0, %v1413
        %v1415 = vpop.f32.mrb[0].mxu0
        %v1416 = vpop.f32.mrb[0].mxu0
        %v1417 = vadd.f32 0.0, %v1416
        %v1418 = vpop.f32.mrb[0].mxu0
        %1419 = vmatprep.mubr.bf16.mxu0 0
        %1420 = vmatmul.mubr.bf16.gmra.mrb[0].mxu0 %v1327
        %v1421 = vpop.f32.mrb[0].mxu0
        %v1422 = vadd.f32 0.0, %v1421
        %v1423 = vpop.f32.mrb[0].mxu0
        %v1424 = vpop.f32.mrb[0].mxu0
        %v1425 = vadd.f32 0.0, %v1424
        %v1426 = vpop.f32.mrb[0].mxu0
        %1427 = vmatprep.mubr.bf16.mxu0 0
        %1428 = vmatmul.mubr.bf16.gmra.mrb[0].mxu0 %v1330
        %v1429 = vpop.f32.mrb[0].mxu0
        %v1430 = vadd.f32 0.0, %v1429
        %v1431 = vpop.f32.mrb[0].mxu0
        %v1432 = vpop.f32.mrb[0].mxu0
        %v1433 = vadd.f32 0.0, %v1432
        %v1434 = vpop.f32.mrb[0].mxu0
        %1435 = vmatprep.mubr.bf16.mxu0 0
        %1436 = vmatmul.mubr.bf16.gmra.mrb[0].mxu0 %v1333
        %v1437 = vpop.f32.mrb[0].mxu0
        %v1438 = vadd.f32 0.0, %v1437
        %v1439 = vpop.f32.mrb[0].mxu0
        %v1440 = vpop.f32.mrb[0].mxu0
        %v1441 = vadd.f32 0.0, %v1440
        %v1442 = vpop.f32.mrb[0].mxu0
        %1443 = vmatprep.mubr.bf16.mxu0 0
        %1444 = vmatmul.mubr.bf16.gmra.mrb[0].mxu0 %v1336
        %v1445 = vpop.f32.mrb[0].mxu0
        %v1446 = vadd.f32 0.0, %v1445
        %v1447 = vpop.f32.mrb[0].mxu0
        %v1448 = vpop.f32.mrb[0].mxu0
        %v1449 = vadd.f32 0.0, %v1448
        %v1450 = vpop.f32.mrb[0].mxu0
        %1451 = vmatprep.mubr.bf16.mxu0 0
        %1452 = vmatmul.mubr.bf16.gmra.mrb[0].mxu0 %v1339
        %v1453 = vpop.f32.mrb[0].mxu0
        %v1454 = vadd.f32 0.0, %v1453
        %v1455 = vpop.f32.mrb[0].mxu0
        %v1456 = vpop.f32.mrb[0].mxu0
        %v1457 = vadd.f32 0.0, %v1456
        %v1458 = vpop.f32.mrb[0].mxu0
        %1459 = vmatprep.mubr.bf16.mxu0 0
        %1460 = vmatmul.mubr.bf16.gmra.mrb[0].mxu0 %v1342
        %v1461 = vpop.f32.mrb[0].mxu0
        %v1462 = vadd.f32 0.0, %v1461
        %v1463 = vpop.f32.mrb[0].mxu0
        %v1464 = vpop.f32.mrb[0].mxu0
        %v1465 = vadd.f32 0.0, %v1464
        %v1466 = vpop.f32.mrb[0].mxu0
        %1467 = vmatprep.mubr.bf16.mxu0 0
        %1468 = vmatmul.mubr.bf16.gmra.mrb[0].mxu0 %v1345
        %v1469 = vpop.f32.mrb[0].mxu0
        %v1470 = vadd.f32 0.0, %v1469
        %v1471 = vpop.f32.mrb[0].mxu0
        %v1472 = vpop.f32.mrb[0].mxu0
        %v1473 = vadd.f32 0.0, %v1472
        %v1474 = vpop.f32.mrb[0].mxu0
        %1475 = vmatprep.mubr.bf16.mxu0 0
        %1476 = vmatmul.mubr.bf16.gmra.mrb[0].mxu0 %v1348
        %v1477 = vpop.f32.mrb[0].mxu0
        %v1478 = vadd.f32 0.0, %v1477
        %v1479 = vpop.f32.mrb[0].mxu0
        %v1480 = vpop.f32.mrb[0].mxu0
        %v1481 = vadd.f32 0.0, %v1480
        %v1482 = vpop.f32.mrb[0].mxu0
        %1483 = vmatprep.mubr.bf16.mxu0 0
        %1484 = vmatmul.mubr.bf16.gmra.mrb[0].mxu0 %v1351
        %v1485 = vpop.f32.mrb[0].mxu0
        %v1486 = vadd.f32 0.0, %v1485
        %v1487 = vpop.f32.mrb[0].mxu0
        %v1488 = vpop.f32.mrb[0].mxu0
        %v1489 = vadd.f32 0.0, %v1488
        %v1490 = vpop.f32.mrb[0].mxu0
        %1491 = vmatprep.mubr.bf16.mxu0 0
        %1492 = vmatmul.mubr.bf16.gmra.mrb[0].mxu0 %v1354
        %v1493 = vpop.f32.mrb[0].mxu0
        %v1494 = vadd.f32 0.0, %v1493
        %v1495 = vpop.f32.mrb[0].mxu0
        %v1496 = vpop.f32.mrb[0].mxu0
        %v1497 = vadd.f32 0.0, %v1496
        %v1498 = vpop.f32.mrb[0].mxu0
        %1499 = vmatprep.mubr.bf16.mxu0 0
        %1500 = vmatmul.mubr.bf16.gmra.mrb[0].mxu0 %v1357
        %v1501 = vpop.f32.mrb[0].mxu0
        %v1502 = vadd.f32 0.0, %v1501
        %v1503 = vpop.f32.mrb[0].mxu0
        %v1504 = vpop.f32.mrb[0].mxu0
        %v1505 = vadd.f32 0.0, %v1504
        %v1506 = vpop.f32.mrb[0].mxu0
        %1507 = vmatprep.mubr.bf16.mxu0 0
        %1508 = vmatmul.mubr.bf16.gmra.mrb[0].mxu0 %v1360
        %v1509 = vpop.f32.mrb[0].mxu0
        %v1510 = vadd.f32 0.0, %v1509
        %v1511 = vpop.f32.mrb[0].mxu0
        %v1512 = vpop.f32.mrb[0].mxu0
        %v1513 = vadd.f32 0.0, %v1512
        %v1514 = vpop.f32.mrb[0].mxu0
        %1515 = vmatprep.mubr.bf16.mxu0 0
        %1516 = vmatmul.mubr.bf16.gmra.mrb[0].mxu0 %v1363
        %v1517 = vpop.f32.mrb[0].mxu0
        %v1518 = vadd.f32 0.0, %v1517
        %v1519 = vpop.f32.mrb[0].mxu0
        %v1520 = vpop.f32.mrb[0].mxu0
        %v1521 = vadd.f32 0.0, %v1520
        %v1522 = vpop.f32.mrb[0].mxu0
        %1523 = vmatprep.mubr.bf16.mxu0 0
        %1524 = vmatmul.mubr.bf16.gmra.mrb[0].mxu0 %v1366
        %v1525 = vpop.f32.mrb[0].mxu0
        %v1526 = vadd.f32 0.0, %v1525
        %v1527 = vpop.f32.mrb[0].mxu0
        %v1528 = vpop.f32.mrb[0].mxu0
        %v1529 = vadd.f32 0.0, %v1528
        %v1530 = vpop.f32.mrb[0].mxu0
        %1531 = vdwg.mxu0
        %v1532 = vadd.f32 %v1238, %v1406
        %v1533 = vadd.f32 %v1239, %v1409
        %v1534 = vadd.f32 %v1240, %v1414
        %v1535 = vadd.f32 %v1241, %v1417
        %v1536 = vadd.f32 %v1242, %v1422
        %v1537 = vadd.f32 %v1243, %v1425
        %v1538 = vadd.f32 %v1244, %v1430
        %v1539 = vadd.f32 %v1245, %v1433
        %v1540 = vadd.f32 %v1246, %v1438
        %v1541 = vadd.f32 %v1247, %v1441
        %v1542 = vadd.f32 %v1248, %v1446
        %v1543 = vadd.f32 %v1249, %v1449
        %v1544 = vadd.f32 %v1250, %v1454
        %v1545 = vadd.f32 %v1251, %v1457
        %v1546 = vadd.f32 %v1252, %v1462
        %v1547 = vadd.f32 %v1253, %v1465
        %v1548 = vadd.f32 %v1254, %v1470
        %v1549 = vadd.f32 %v1255, %v1473
        %v1550 = vadd.f32 %v1256, %v1478
        %v1551 = vadd.f32 %v1257, %v1481
        %v1552 = vadd.f32 %v1258, %v1486
        %v1553 = vadd.f32 %v1259, %v1489
        %v1554 = vadd.f32 %v1260, %v1494
        %v1555 = vadd.f32 %v1261, %v1497
        %v1556 = vadd.f32 %v1262, %v1502
        %v1557 = vadd.f32 %v1263, %v1505
        %v1558 = vadd.f32 %v1264, %v1510
        %v1559 = vadd.f32 %v1265, %v1513
        %v1560 = vadd.f32 %v1266, %v1518
        %v1561 = vadd.f32 %v1267, %v1521
        %v1562 = vadd.f32 %v1268, %v1526
        %v1563 = vadd.f32 %v1269, %v1529
        %v1564 = vld [vmem:[%s419 + $0x1] sm:$0xff]
        %v1565 = vld [vmem:[%s419 + $0x9] sm:$0xff]
        %v1566 = vld [vmem:[%s419 + $0x19] sm:$0xff]
        %v1567 = vld [vmem:[%s419 + $0x21] sm:$0xff]
        %v1568 = vld [vmem:[%s419 + $0x31] sm:$0xff]
        %v1569 = vld [vmem:[%s419 + $0x39] sm:$0xff]
        %v1570 = vld [vmem:[%s419 + $0x49] sm:$0xff]
        %v1571 = vld [vmem:[%s419 + $0x51] sm:$0xff]
        %v1572 = vld [vmem:[%s419 + $0x61] sm:$0xff]
        %v1573 = vld [vmem:[%s419 + $0x69] sm:$0xff]
        %v1574 = vld [vmem:[%s419 + $0x79] sm:$0xff]
        %v1575 = vld [vmem:[%s419 + $0x81] sm:$0xff]
        %v1576 = vld [vmem:[%s419 + $0x91] sm:$0xff]
        %v1577 = vld [vmem:[%s419 + $0x99] sm:$0xff]
        %v1578 = vld [vmem:[%s419 + $0xa9] sm:$0xff]
        %v1579 = vld [vmem:[%s419 + $0xb1] sm:$0xff]
        %v1580 = vld [vmem:[%s419 + $0xc1] sm:$0xff]
        %v1581 = vld [vmem:[%s419 + $0xc9] sm:$0xff]
        %v1582 = vld [vmem:[%s419 + $0xd9] sm:$0xff]
        %v1583 = vld [vmem:[%s419 + $0xe1] sm:$0xff]
        %v1584 = vld [vmem:[%s419 + $0xf1] sm:$0xff]
        %v1585 = vld [vmem:[%s419 + $0xf9] sm:$0xff]
        %v1586 = vld [vmem:[%s419 + $0x109] sm:$0xff]
        %v1587 = vld [vmem:[%s419 + $0x111] sm:$0xff]
        %v1588 = vld [vmem:[%s419 + $0x121] sm:$0xff]
        %v1589 = vld [vmem:[%s419 + $0x129] sm:$0xff]
        %v1590 = vld [vmem:[%s419 + $0x139] sm:$0xff]
        %v1591 = vld [vmem:[%s419 + $0x141] sm:$0xff]
        %v1592 = vld [vmem:[%s419 + $0x151] sm:$0xff]
        %v1593 = vld [vmem:[%s419 + $0x159] sm:$0xff]
        %v1594 = vld [vmem:[%s419 + $0x169] sm:$0xff]
        %v1595 = vld [vmem:[%s419 + $0x171] sm:$0xff]
        %v1596 = vpack.c.bf16 %v1565, %v1564
        %v1597 = vpack.c.bf16 %v1567, %v1566
        %v1598 = vpack.c.bf16 %v1569, %v1568
        %v1599 = vpack.c.bf16 %v1571, %v1570
        %v1600 = vpack.c.bf16 %v1573, %v1572
        %v1601 = vpack.c.bf16 %v1575, %v1574
        %v1602 = vpack.c.bf16 %v1577, %v1576
        %v1603 = vpack.c.bf16 %v1579, %v1578
        %v1604 = vpack.c.bf16 %v1581, %v1580
        %v1605 = vpack.c.bf16 %v1583, %v1582
        %v1606 = vpack.c.bf16 %v1585, %v1584
        %v1607 = vpack.c.bf16 %v1587, %v1586
        %v1608 = vpack.c.bf16 %v1589, %v1588
        %v1609 = vpack.c.bf16 %v1591, %v1590
        %v1610 = vpack.c.bf16 %v1593, %v1592
        %v1611 = vpack.c.bf16 %v1595, %v1594
        %s1612 = scalar_lea.vmem %s1, 8
        %v1613 = vld [vmem:[%s1612] sm:$0x3]
        %v1615 = vsel %vm363, %v1596, 0
        %v1618 = vsel %vm363, %v1597, 0
        %v1621 = vsel %vm363, %v1598, 0
        %v1624 = vsel %vm363, %v1599, 0
        %v1627 = vsel %vm363, %v1600, 0
        %v1630 = vsel %vm363, %v1601, 0
        %v1633 = vsel %vm363, %v1602, 0
        %v1636 = vsel %vm363, %v1603, 0
        %v1639 = vsel %vm363, %v1604, 0
        %v1642 = vsel %vm363, %v1605, 0
        %v1645 = vsel %vm363, %v1606, 0
        %v1648 = vsel %vm363, %v1607, 0
        %v1651 = vsel %vm363, %v1608, 0
        %v1654 = vsel %vm363, %v1609, 0
        %v1657 = vsel %vm363, %v1610, 0
        %v1660 = vsel %vm363, %v1611, 0
        %v1663 = vsel %vm599, %v1613, 0
        %1665 = vmatprep.subr.bf16.mxu0 0
        %1666 = vmatpush1.bf16.msra.mxu0 %v1663
        %1667 = vmatprep.subr.bf16.mxu0 0
        %1668 = vmatpush1.bf16.msra.mxu0 0
        %1669 = vmatprep.subr.bf16.mxu0 0
        %1670 = vmatpush1.bf16.msra.mxu0 0
        %1671 = vmatprep.subr.bf16.mxu0 0
        %1672 = vmatpush1.bf16.msra.mxu0 0
        %1673 = vmatprep.subr.bf16.mxu0 0
        %1674 = vmatpush1.bf16.msra.mxu0 0
        %1675 = vmatprep.subr.bf16.mxu0 0
        %1676 = vmatpush1.bf16.msra.mxu0 0
        %1677 = vmatprep.subr.bf16.mxu0 0
        %1678 = vmatpush1.bf16.msra.mxu0 0
        %1679 = vmatprep.subr.bf16.mxu0 0
        %1680 = vmatpush1.bf16.msra.mxu0 0
        %1681 = vmatprep.subr.bf16.mxu0 0
        %1682 = vmatpush1.bf16.msra.mxu0 0
        %1683 = vmatprep.subr.bf16.mxu0 0
        %1684 = vmatpush1.bf16.msra.mxu0 0
        %1685 = vmatprep.subr.bf16.mxu0 0
        %1686 = vmatpush1.bf16.msra.mxu0 0
        %1687 = vmatprep.subr.bf16.mxu0 0
        %1688 = vmatpush1.bf16.msra.mxu0 0
        %1689 = vmatprep.subr.bf16.mxu0 0
        %1690 = vmatpush1.bf16.msra.mxu0 0
        %1691 = vmatprep.subr.bf16.mxu0 0
        %1692 = vmatpush1.bf16.msra.mxu0 0
        %1693 = vmatprep.subr.bf16.mxu0 0
        %1694 = vmatpush1.bf16.msra.mxu0 0
        %1695 = vmatprep.subr.bf16.mxu0 0
        %1696 = vmatpush1.bf16.msra.mxu0 0
        %1697 = vmatprep.mubr.bf16.mxu0 0
        %1698 = vmatmul.mubr.bf16.gmra.mrb[0].mxu0 %v1615
        %v1699 = vpop.f32.mrb[0].mxu0
        %v1700 = vadd.f32 0.0, %v1699
        %v1701 = vpop.f32.mrb[0].mxu0
        %v1702 = vpop.f32.mrb[0].mxu0
        %v1703 = vadd.f32 0.0, %v1702
        %v1704 = vpop.f32.mrb[0].mxu0
        %1705 = vmatprep.mubr.bf16.mxu0 0
        %1706 = vmatmul.mubr.bf16.gmra.mrb[0].mxu0 %v1618
        %v1707 = vpop.f32.mrb[0].mxu0
        %v1708 = vadd.f32 0.0, %v1707
        %v1709 = vpop.f32.mrb[0].mxu0
        %v1710 = vpop.f32.mrb[0].mxu0
        %v1711 = vadd.f32 0.0, %v1710
        %v1712 = vpop.f32.mrb[0].mxu0
        %1713 = vmatprep.mubr.bf16.mxu0 0
        %1714 = vmatmul.mubr.bf16.gmra.mrb[0].mxu0 %v1621
        %v1715 = vpop.f32.mrb[0].mxu0
        %v1716 = vadd.f32 0.0, %v1715
        %v1717 = vpop.f32.mrb[0].mxu0
        %v1718 = vpop.f32.mrb[0].mxu0
        %v1719 = vadd.f32 0.0, %v1718
        %v1720 = vpop.f32.mrb[0].mxu0
        %1721 = vmatprep.mubr.bf16.mxu0 0
        %1722 = vmatmul.mubr.bf16.gmra.mrb[0].mxu0 %v1624
        %v1723 = vpop.f32.mrb[0].mxu0
        %v1724 = vadd.f32 0.0, %v1723
        %v1725 = vpop.f32.mrb[0].mxu0
        %v1726 = vpop.f32.mrb[0].mxu0
        %v1727 = vadd.f32 0.0, %v1726
        %v1728 = vpop.f32.mrb[0].mxu0
        %1729 = vmatprep.mubr.bf16.mxu0 0
        %1730 = vmatmul.mubr.bf16.gmra.mrb[0].mxu0 %v1627
        %v1731 = vpop.f32.mrb[0].mxu0
        %v1732 = vadd.f32 0.0, %v1731
        %v1733 = vpop.f32.mrb[0].mxu0
        %v1734 = vpop.f32.mrb[0].mxu0
        %v1735 = vadd.f32 0.0, %v1734
        %v1736 = vpop.f32.mrb[0].mxu0
        %1737 = vmatprep.mubr.bf16.mxu0 0
        %1738 = vmatmul.mubr.bf16.gmra.mrb[0].mxu0 %v1630
        %v1739 = vpop.f32.mrb[0].mxu0
        %v1740 = vadd.f32 0.0, %v1739
        %v1741 = vpop.f32.mrb[0].mxu0
        %v1742 = vpop.f32.mrb[0].mxu0
        %v1743 = vadd.f32 0.0, %v1742
        %v1744 = vpop.f32.mrb[0].mxu0
        %1745 = vmatprep.mubr.bf16.mxu0 0
        %1746 = vmatmul.mubr.bf16.gmra.mrb[0].mxu0 %v1633
        %v1747 = vpop.f32.mrb[0].mxu0
        %v1748 = vadd.f32 0.0, %v1747
        %v1749 = vpop.f32.mrb[0].mxu0
        %v1750 = vpop.f32.mrb[0].mxu0
        %v1751 = vadd.f32 0.0, %v1750
        %v1752 = vpop.f32.mrb[0].mxu0
        %1753 = vmatprep.mubr.bf16.mxu0 0
        %1754 = vmatmul.mubr.bf16.gmra.mrb[0].mxu0 %v1636
        %v1755 = vpop.f32.mrb[0].mxu0
        %v1756 = vadd.f32 0.0, %v1755
        %v1757 = vpop.f32.mrb[0].mxu0
        %v1758 = vpop.f32.mrb[0].mxu0
        %v1759 = vadd.f32 0.0, %v1758
        %v1760 = vpop.f32.mrb[0].mxu0
        %1761 = vmatprep.mubr.bf16.mxu0 0
        %1762 = vmatmul.mubr.bf16.gmra.mrb[0].mxu0 %v1639
        %v1763 = vpop.f32.mrb[0].mxu0
        %v1764 = vadd.f32 0.0, %v1763
        %v1765 = vpop.f32.mrb[0].mxu0
        %v1766 = vpop.f32.mrb[0].mxu0
        %v1767 = vadd.f32 0.0, %v1766
        %v1768 = vpop.f32.mrb[0].mxu0
        %1769 = vmatprep.mubr.bf16.mxu0 0
        %1770 = vmatmul.mubr.bf16.gmra.mrb[0].mxu0 %v1642
        %v1771 = vpop.f32.mrb[0].mxu0
        %v1772 = vadd.f32 0.0, %v1771
        %v1773 = vpop.f32.mrb[0].mxu0
        %v1774 = vpop.f32.mrb[0].mxu0
        %v1775 = vadd.f32 0.0, %v1774
        %v1776 = vpop.f32.mrb[0].mxu0
        %1777 = vmatprep.mubr.bf16.mxu0 0
        %1778 = vmatmul.mubr.bf16.gmra.mrb[0].mxu0 %v1645
        %v1779 = vpop.f32.mrb[0].mxu0
        %v1780 = vadd.f32 0.0, %v1779
        %v1781 = vpop.f32.mrb[0].mxu0
        %v1782 = vpop.f32.mrb[0].mxu0
        %v1783 = vadd.f32 0.0, %v1782
        %v1784 = vpop.f32.mrb[0].mxu0
        %1785 = vmatprep.mubr.bf16.mxu0 0
        %1786 = vmatmul.mubr.bf16.gmra.mrb[0].mxu0 %v1648
        %v1787 = vpop.f32.mrb[0].mxu0
        %v1788 = vadd.f32 0.0, %v1787
        %v1789 = vpop.f32.mrb[0].mxu0
        %v1790 = vpop.f32.mrb[0].mxu0
        %v1791 = vadd.f32 0.0, %v1790
        %v1792 = vpop.f32.mrb[0].mxu0
        %1793 = vmatprep.mubr.bf16.mxu0 0
        %1794 = vmatmul.mubr.bf16.gmra.mrb[0].mxu0 %v1651
        %v1795 = vpop.f32.mrb[0].mxu0
        %v1796 = vadd.f32 0.0, %v1795
        %v1797 = vpop.f32.mrb[0].mxu0
        %v1798 = vpop.f32.mrb[0].mxu0
        %v1799 = vadd.f32 0.0, %v1798
        %v1800 = vpop.f32.mrb[0].mxu0
        %1801 = vmatprep.mubr.bf16.mxu0 0
        %1802 = vmatmul.mubr.bf16.gmra.mrb[0].mxu0 %v1654
        %v1803 = vpop.f32.mrb[0].mxu0
        %v1804 = vadd.f32 0.0, %v1803
        %v1805 = vpop.f32.mrb[0].mxu0
        %v1806 = vpop.f32.mrb[0].mxu0
        %v1807 = vadd.f32 0.0, %v1806
        %v1808 = vpop.f32.mrb[0].mxu0
        %1809 = vmatprep.mubr.bf16.mxu0 0
        %1810 = vmatmul.mubr.bf16.gmra.mrb[0].mxu0 %v1657
        %v1811 = vpop.f32.mrb[0].mxu0
        %v1812 = vadd.f32 0.0, %v1811
        %v1813 = vpop.f32.mrb[0].mxu0
        %v1814 = vpop.f32.mrb[0].mxu0
        %v1815 = vadd.f32 0.0, %v1814
        %v1816 = vpop.f32.mrb[0].mxu0
        %1817 = vmatprep.mubr.bf16.mxu0 0
        %1818 = vmatmul.mubr.bf16.gmra.mrb[0].mxu0 %v1660
        %v1819 = vpop.f32.mrb[0].mxu0
        %v1820 = vadd.f32 0.0, %v1819
        %v1821 = vpop.f32.mrb[0].mxu0
        %v1822 = vpop.f32.mrb[0].mxu0
        %v1823 = vadd.f32 0.0, %v1822
        %v1824 = vpop.f32.mrb[0].mxu0
        %1825 = vdwg.mxu0
        %v1826 = vadd.f32 %v1532, %v1700
        %v1827 = vadd.f32 %v1533, %v1703
        %v1828 = vadd.f32 %v1534, %v1708
        %v1829 = vadd.f32 %v1535, %v1711
        %v1830 = vadd.f32 %v1536, %v1716
        %v1831 = vadd.f32 %v1537, %v1719
        %v1832 = vadd.f32 %v1538, %v1724
        %v1833 = vadd.f32 %v1539, %v1727
        %v1834 = vadd.f32 %v1540, %v1732
        %v1835 = vadd.f32 %v1541, %v1735
        %v1836 = vadd.f32 %v1542, %v1740
        %v1837 = vadd.f32 %v1543, %v1743
        %v1838 = vadd.f32 %v1544, %v1748
        %v1839 = vadd.f32 %v1545, %v1751
        %v1840 = vadd.f32 %v1546, %v1756
        %v1841 = vadd.f32 %v1547, %v1759
        %v1842 = vadd.f32 %v1548, %v1764
        %v1843 = vadd.f32 %v1549, %v1767
        %v1844 = vadd.f32 %v1550, %v1772
        %v1845 = vadd.f32 %v1551, %v1775
        %v1846 = vadd.f32 %v1552, %v1780
        %v1847 = vadd.f32 %v1553, %v1783
        %v1848 = vadd.f32 %v1554, %v1788
        %v1849 = vadd.f32 %v1555, %v1791
        %v1850 = vadd.f32 %v1556, %v1796
        %v1851 = vadd.f32 %v1557, %v1799
        %v1852 = vadd.f32 %v1558, %v1804
        %v1853 = vadd.f32 %v1559, %v1807
        %v1854 = vadd.f32 %v1560, %v1812
        %v1855 = vadd.f32 %v1561, %v1815
        %v1856 = vadd.f32 %v1562, %v1820
        %v1857 = vadd.f32 %v1563, %v1823
        %v1858 = vld [vmem:[%s419 + $0x2] sm:$0xff]
        %v1859 = vld [vmem:[%s419 + $0xa] sm:$0xff]
        %v1860 = vld [vmem:[%s419 + $0x1a] sm:$0xff]
        %v1861 = vld [vmem:[%s419 + $0x22] sm:$0xff]
        %v1862 = vld [vmem:[%s419 + $0x32] sm:$0xff]
        %v1863 = vld [vmem:[%s419 + $0x3a] sm:$0xff]
        %v1864 = vld [vmem:[%s419 + $0x4a] sm:$0xff]
        %v1865 = vld [vmem:[%s419 + $0x52] sm:$0xff]
        %v1866 = vld [vmem:[%s419 + $0x62] sm:$0xff]
        %v1867 = vld [vmem:[%s419 + $0x6a] sm:$0xff]
        %v1868 = vld [vmem:[%s419 + $0x7a] sm:$0xff]
        %v1869 = vld [vmem:[%s419 + $0x82] sm:$0xff]
        %v1870 = vld [vmem:[%s419 + $0x92] sm:$0xff]
        %v1871 = vld [vmem:[%s419 + $0x9a] sm:$0xff]
        %v1872 = vld [vmem:[%s419 + $0xaa] sm:$0xff]
        %v1873 = vld [vmem:[%s419 + $0xb2] sm:$0xff]
        %v1874 = vld [vmem:[%s419 + $0xc2] sm:$0xff]
        %v1875 = vld [vmem:[%s419 + $0xca] sm:$0xff]
        %v1876 = vld [vmem:[%s419 + $0xda] sm:$0xff]
        %v1877 = vld [vmem:[%s419 + $0xe2] sm:$0xff]
        %v1878 = vld [vmem:[%s419 + $0xf2] sm:$0xff]
        %v1879 = vld [vmem:[%s419 + $0xfa] sm:$0xff]
        %v1880 = vld [vmem:[%s419 + $0x10a] sm:$0xff]
        %v1881 = vld [vmem:[%s419 + $0x112] sm:$0xff]
        %v1882 = vld [vmem:[%s419 + $0x122] sm:$0xff]
        %v1883 = vld [vmem:[%s419 + $0x12a] sm:$0xff]
        %v1884 = vld [vmem:[%s419 + $0x13a] sm:$0xff]
        %v1885 = vld [vmem:[%s419 + $0x142] sm:$0xff]
        %v1886 = vld [vmem:[%s419 + $0x152] sm:$0xff]
        %v1887 = vld [vmem:[%s419 + $0x15a] sm:$0xff]
        %v1888 = vld [vmem:[%s419 + $0x16a] sm:$0xff]
        %v1889 = vld [vmem:[%s419 + $0x172] sm:$0xff]
        %v1890 = vpack.c.bf16 %v1859, %v1858
        %v1891 = vpack.c.bf16 %v1861, %v1860
        %v1892 = vpack.c.bf16 %v1863, %v1862
        %v1893 = vpack.c.bf16 %v1865, %v1864
        %v1894 = vpack.c.bf16 %v1867, %v1866
        %v1895 = vpack.c.bf16 %v1869, %v1868
        %v1896 = vpack.c.bf16 %v1871, %v1870
        %v1897 = vpack.c.bf16 %v1873, %v1872
        %v1898 = vpack.c.bf16 %v1875, %v1874
        %v1899 = vpack.c.bf16 %v1877, %v1876
        %v1900 = vpack.c.bf16 %v1879, %v1878
        %v1901 = vpack.c.bf16 %v1881, %v1880
        %v1902 = vpack.c.bf16 %v1883, %v1882
        %v1903 = vpack.c.bf16 %v1885, %v1884
        %v1904 = vpack.c.bf16 %v1887, %v1886
        %v1905 = vpack.c.bf16 %v1889, %v1888
        %s1906 = scalar_lea.vmem %s1, 10
        %v1907 = vld [vmem:[%s1906] sm:$0x3]
        %v1909 = vsel %vm363, %v1890, 0
        %v1912 = vsel %vm363, %v1891, 0
        %v1915 = vsel %vm363, %v1892, 0
        %v1918 = vsel %vm363, %v1893, 0
        %v1921 = vsel %vm363, %v1894, 0
        %v1924 = vsel %vm363, %v1895, 0
        %v1927 = vsel %vm363, %v1896, 0
        %v1930 = vsel %vm363, %v1897, 0
        %v1933 = vsel %vm363, %v1898, 0
        %v1936 = vsel %vm363, %v1899, 0
        %v1939 = vsel %vm363, %v1900, 0
        %v1942 = vsel %vm363, %v1901, 0
        %v1945 = vsel %vm363, %v1902, 0
        %v1948 = vsel %vm363, %v1903, 0
        %v1951 = vsel %vm363, %v1904, 0
        %v1954 = vsel %vm363, %v1905, 0
        %v1957 = vsel %vm599, %v1907, 0
        %1959 = vmatprep.subr.bf16.mxu0 0
        %1960 = vmatpush1.bf16.msra.mxu0 %v1957
        %1961 = vmatprep.subr.bf16.mxu0 0
        %1962 = vmatpush1.bf16.msra.mxu0 0
        %1963 = vmatprep.subr.bf16.mxu0 0
        %1964 = vmatpush1.bf16.msra.mxu0 0
        %1965 = vmatprep.subr.bf16.mxu0 0
        %1966 = vmatpush1.bf16.msra.mxu0 0
        %1967 = vmatprep.subr.bf16.mxu0 0
        %1968 = vmatpush1.bf16.msra.mxu0 0
        %1969 = vmatprep.subr.bf16.mxu0 0
        %1970 = vmatpush1.bf16.msra.mxu0 0
        %1971 = vmatprep.subr.bf16.mxu0 0
        %1972 = vmatpush1.bf16.msra.mxu0 0
        %1973 = vmatprep.subr.bf16.mxu0 0
        %1974 = vmatpush1.bf16.msra.mxu0 0
        %1975 = vmatprep.subr.bf16.mxu0 0
        %1976 = vmatpush1.bf16.msra.mxu0 0
        %1977 = vmatprep.subr.bf16.mxu0 0
        %1978 = vmatpush1.bf16.msra.mxu0 0
        %1979 = vmatprep.subr.bf16.mxu0 0
        %1980 = vmatpush1.bf16.msra.mxu0 0
        %1981 = vmatprep.subr.bf16.mxu0 0
        %1982 = vmatpush1.bf16.msra.mxu0 0
        %1983 = vmatprep.subr.bf16.mxu0 0
        %1984 = vmatpush1.bf16.msra.mxu0 0
        %1985 = vmatprep.subr.bf16.mxu0 0
        %1986 = vmatpush1.bf16.msra.mxu0 0
        %1987 = vmatprep.subr.bf16.mxu0 0
        %1988 = vmatpush1.bf16.msra.mxu0 0
        %1989 = vmatprep.subr.bf16.mxu0 0
        %1990 = vmatpush1.bf16.msra.mxu0 0
        %1991 = vmatprep.mubr.bf16.mxu0 0
        %1992 = vmatmul.mubr.bf16.gmra.mrb[0].mxu0 %v1909
        %v1993 = vpop.f32.mrb[0].mxu0
        %v1994 = vadd.f32 0.0, %v1993
        %v1995 = vpop.f32.mrb[0].mxu0
        %v1996 = vpop.f32.mrb[0].mxu0
        %v1997 = vadd.f32 0.0, %v1996
        %v1998 = vpop.f32.mrb[0].mxu0
        %1999 = vmatprep.mubr.bf16.mxu0 0
        %2000 = vmatmul.mubr.bf16.gmra.mrb[0].mxu0 %v1912
        %v2001 = vpop.f32.mrb[0].mxu0
        %v2002 = vadd.f32 0.0, %v2001
        %v2003 = vpop.f32.mrb[0].mxu0
        %v2004 = vpop.f32.mrb[0].mxu0
        %v2005 = vadd.f32 0.0, %v2004
        %v2006 = vpop.f32.mrb[0].mxu0
        %2007 = vmatprep.mubr.bf16.mxu0 0
        %2008 = vmatmul.mubr.bf16.gmra.mrb[0].mxu0 %v1915
        %v2009 = vpop.f32.mrb[0].mxu0
        %v2010 = vadd.f32 0.0, %v2009
        %v2011 = vpop.f32.mrb[0].mxu0
        %v2012 = vpop.f32.mrb[0].mxu0
        %v2013 = vadd.f32 0.0, %v2012
        %v2014 = vpop.f32.mrb[0].mxu0
        %2015 = vmatprep.mubr.bf16.mxu0 0
        %2016 = vmatmul.mubr.bf16.gmra.mrb[0].mxu0 %v1918
        %v2017 = vpop.f32.mrb[0].mxu0
        %v2018 = vadd.f32 0.0, %v2017
        %v2019 = vpop.f32.mrb[0].mxu0
        %v2020 = vpop.f32.mrb[0].mxu0
        %v2021 = vadd.f32 0.0, %v2020
        %v2022 = vpop.f32.mrb[0].mxu0
        %2023 = vmatprep.mubr.bf16.mxu0 0
        %2024 = vmatmul.mubr.bf16.gmra.mrb[0].mxu0 %v1921
        %v2025 = vpop.f32.mrb[0].mxu0
        %v2026 = vadd.f32 0.0, %v2025
        %v2027 = vpop.f32.mrb[0].mxu0
        %v2028 = vpop.f32.mrb[0].mxu0
        %v2029 = vadd.f32 0.0, %v2028
        %v2030 = vpop.f32.mrb[0].mxu0
        %2031 = vmatprep.mubr.bf16.mxu0 0
        %2032 = vmatmul.mubr.bf16.gmra.mrb[0].mxu0 %v1924
        %v2033 = vpop.f32.mrb[0].mxu0
        %v2034 = vadd.f32 0.0, %v2033
        %v2035 = vpop.f32.mrb[0].mxu0
        %v2036 = vpop.f32.mrb[0].mxu0
        %v2037 = vadd.f32 0.0, %v2036
        %v2038 = vpop.f32.mrb[0].mxu0
        %2039 = vmatprep.mubr.bf16.mxu0 0
        %2040 = vmatmul.mubr.bf16.gmra.mrb[0].mxu0 %v1927
        %v2041 = vpop.f32.mrb[0].mxu0
        %v2042 = vadd.f32 0.0, %v2041
        %v2043 = vpop.f32.mrb[0].mxu0
        %v2044 = vpop.f32.mrb[0].mxu0
        %v2045 = vadd.f32 0.0, %v2044
        %v2046 = vpop.f32.mrb[0].mxu0
        %2047 = vmatprep.mubr.bf16.mxu0 0
        %2048 = vmatmul.mubr.bf16.gmra.mrb[0].mxu0 %v1930
        %v2049 = vpop.f32.mrb[0].mxu0
        %v2050 = vadd.f32 0.0, %v2049
        %v2051 = vpop.f32.mrb[0].mxu0
        %v2052 = vpop.f32.mrb[0].mxu0
        %v2053 = vadd.f32 0.0, %v2052
        %v2054 = vpop.f32.mrb[0].mxu0
        %2055 = vmatprep.mubr.bf16.mxu0 0
        %2056 = vmatmul.mubr.bf16.gmra.mrb[0].mxu0 %v1933
        %v2057 = vpop.f32.mrb[0].mxu0
        %v2058 = vadd.f32 0.0, %v2057
        %v2059 = vpop.f32.mrb[0].mxu0
        %v2060 = vpop.f32.mrb[0].mxu0
        %v2061 = vadd.f32 0.0, %v2060
        %v2062 = vpop.f32.mrb[0].mxu0
        %2063 = vmatprep.mubr.bf16.mxu0 0
        %2064 = vmatmul.mubr.bf16.gmra.mrb[0].mxu0 %v1936
        %v2065 = vpop.f32.mrb[0].mxu0
        %v2066 = vadd.f32 0.0, %v2065
        %v2067 = vpop.f32.mrb[0].mxu0
        %v2068 = vpop.f32.mrb[0].mxu0
        %v2069 = vadd.f32 0.0, %v2068
        %v2070 = vpop.f32.mrb[0].mxu0
        %2071 = vmatprep.mubr.bf16.mxu0 0
        %2072 = vmatmul.mubr.bf16.gmra.mrb[0].mxu0 %v1939
        %v2073 = vpop.f32.mrb[0].mxu0
        %v2074 = vadd.f32 0.0, %v2073
        %v2075 = vpop.f32.mrb[0].mxu0
        %v2076 = vpop.f32.mrb[0].mxu0
        %v2077 = vadd.f32 0.0, %v2076
        %v2078 = vpop.f32.mrb[0].mxu0
        %2079 = vmatprep.mubr.bf16.mxu0 0
        %2080 = vmatmul.mubr.bf16.gmra.mrb[0].mxu0 %v1942
        %v2081 = vpop.f32.mrb[0].mxu0
        %v2082 = vadd.f32 0.0, %v2081
        %v2083 = vpop.f32.mrb[0].mxu0
        %v2084 = vpop.f32.mrb[0].mxu0
        %v2085 = vadd.f32 0.0, %v2084
        %v2086 = vpop.f32.mrb[0].mxu0
        %2087 = vmatprep.mubr.bf16.mxu0 0
        %2088 = vmatmul.mubr.bf16.gmra.mrb[0].mxu0 %v1945
        %v2089 = vpop.f32.mrb[0].mxu0
        %v2090 = vadd.f32 0.0, %v2089
        %v2091 = vpop.f32.mrb[0].mxu0
        %v2092 = vpop.f32.mrb[0].mxu0
        %v2093 = vadd.f32 0.0, %v2092
        %v2094 = vpop.f32.mrb[0].mxu0
        %2095 = vmatprep.mubr.bf16.mxu0 0
        %2096 = vmatmul.mubr.bf16.gmra.mrb[0].mxu0 %v1948
        %v2097 = vpop.f32.mrb[0].mxu0
        %v2098 = vadd.f32 0.0, %v2097
        %v2099 = vpop.f32.mrb[0].mxu0
        %v2100 = vpop.f32.mrb[0].mxu0
        %v2101 = vadd.f32 0.0, %v2100
        %v2102 = vpop.f32.mrb[0].mxu0
        %2103 = vmatprep.mubr.bf16.mxu0 0
        %2104 = vmatmul.mubr.bf16.gmra.mrb[0].mxu0 %v1951
        %v2105 = vpop.f32.mrb[0].mxu0
        %v2106 = vadd.f32 0.0, %v2105
        %v2107 = vpop.f32.mrb[0].mxu0
        %v2108 = vpop.f32.mrb[0].mxu0
        %v2109 = vadd.f32 0.0, %v2108
        %v2110 = vpop.f32.mrb[0].mxu0
        %2111 = vmatprep.mubr.bf16.mxu0 0
        %2112 = vmatmul.mubr.bf16.gmra.mrb[0].mxu0 %v1954
        %v2113 = vpop.f32.mrb[0].mxu0
        %v2114 = vadd.f32 0.0, %v2113
        %v2115 = vpop.f32.mrb[0].mxu0
        %v2116 = vpop.f32.mrb[0].mxu0
        %v2117 = vadd.f32 0.0, %v2116
        %v2118 = vpop.f32.mrb[0].mxu0
        %2119 = vdwg.mxu0
        %v2120 = vadd.f32 %v1826, %v1994
        %v2121 = vadd.f32 %v1827, %v1997
        %v2122 = vadd.f32 %v1828, %v2002
        %v2123 = vadd.f32 %v1829, %v2005
        %v2124 = vadd.f32 %v1830, %v2010
        %v2125 = vadd.f32 %v1831, %v2013
        %v2126 = vadd.f32 %v1832, %v2018
        %v2127 = vadd.f32 %v1833, %v2021
        %v2128 = vadd.f32 %v1834, %v2026
        %v2129 = vadd.f32 %v1835, %v2029
        %v2130 = vadd.f32 %v1836, %v2034
        %v2131 = vadd.f32 %v1837, %v2037
        %v2132 = vadd.f32 %v1838, %v2042
        %v2133 = vadd.f32 %v1839, %v2045
        %v2134 = vadd.f32 %v1840, %v2050
        %v2135 = vadd.f32 %v1841, %v2053
        %v2136 = vadd.f32 %v1842, %v2058
        %v2137 = vadd.f32 %v1843, %v2061
        %v2138 = vadd.f32 %v1844, %v2066
        %v2139 = vadd.f32 %v1845, %v2069
        %v2140 = vadd.f32 %v1846, %v2074
        %v2141 = vadd.f32 %v1847, %v2077
        %v2142 = vadd.f32 %v1848, %v2082
        %v2143 = vadd.f32 %v1849, %v2085
        %v2144 = vadd.f32 %v1850, %v2090
        %v2145 = vadd.f32 %v1851, %v2093
        %v2146 = vadd.f32 %v1852, %v2098
        %v2147 = vadd.f32 %v1853, %v2101
        %v2148 = vadd.f32 %v1854, %v2106
        %v2149 = vadd.f32 %v1855, %v2109
        %v2150 = vadd.f32 %v1856, %v2114
        %v2151 = vadd.f32 %v1857, %v2117
        %s2152 = scalar_lea.vmem [#allocation2], 48
        %v2153 = vld [vmem:[%s2152] sm:$0xff]
        %v2154 = vld [vmem:[%s2152 + $0x8] sm:$0xff]
        %v2155 = vld [vmem:[%s2152 + $0x18] sm:$0xff]
        %v2156 = vld [vmem:[%s2152 + $0x20] sm:$0xff]
        %v2157 = vld [vmem:[%s2152 + $0x30] sm:$0xff]
        %v2158 = vld [vmem:[%s2152 + $0x38] sm:$0xff]
        %v2159 = vld [vmem:[%s2152 + $0x48] sm:$0xff]
        %v2160 = vld [vmem:[%s2152 + $0x50] sm:$0xff]
        %v2161 = vld [vmem:[%s2152 + $0x60] sm:$0xff]
        %v2162 = vld [vmem:[%s2152 + $0x68] sm:$0xff]
        %v2163 = vld [vmem:[%s2152 + $0x78] sm:$0xff]
        %v2164 = vld [vmem:[%s2152 + $0x80] sm:$0xff]
        %v2165 = vld [vmem:[%s2152 + $0x90] sm:$0xff]
        %v2166 = vld [vmem:[%s2152 + $0x98] sm:$0xff]
        %v2167 = vld [vmem:[%s2152 + $0xa8] sm:$0xff]
        %v2168 = vld [vmem:[%s2152 + $0xb0] sm:$0xff]
        %v2169 = vld [vmem:[%s2152 + $0xc0] sm:$0xff]
        %v2170 = vld [vmem:[%s2152 + $0xc8] sm:$0xff]
        %v2171 = vld [vmem:[%s2152 + $0xd8] sm:$0xff]
        %v2172 = vld [vmem:[%s2152 + $0xe0] sm:$0xff]
        %v2173 = vld [vmem:[%s2152 + $0xf0] sm:$0xff]
        %v2174 = vld [vmem:[%s2152 + $0xf8] sm:$0xff]
        %v2175 = vld [vmem:[%s2152 + $0x108] sm:$0xff]
        %v2176 = vld [vmem:[%s2152 + $0x110] sm:$0xff]
        %v2177 = vld [vmem:[%s2152 + $0x120] sm:$0xff]
        %v2178 = vld [vmem:[%s2152 + $0x128] sm:$0xff]
        %v2179 = vld [vmem:[%s2152 + $0x138] sm:$0xff]
        %v2180 = vld [vmem:[%s2152 + $0x140] sm:$0xff]
        %v2181 = vld [vmem:[%s2152 + $0x150] sm:$0xff]
        %v2182 = vld [vmem:[%s2152 + $0x158] sm:$0xff]
        %v2183 = vld [vmem:[%s2152 + $0x168] sm:$0xff]
        %v2184 = vld [vmem:[%s2152 + $0x170] sm:$0xff]
        %v2185 = vpack.c.bf16 %v2154, %v2153
        %v2186 = vpack.c.bf16 %v2156, %v2155
        %v2187 = vpack.c.bf16 %v2158, %v2157
        %v2188 = vpack.c.bf16 %v2160, %v2159
        %v2189 = vpack.c.bf16 %v2162, %v2161
        %v2190 = vpack.c.bf16 %v2164, %v2163
        %v2191 = vpack.c.bf16 %v2166, %v2165
        %v2192 = vpack.c.bf16 %v2168, %v2167
        %v2193 = vpack.c.bf16 %v2170, %v2169
        %v2194 = vpack.c.bf16 %v2172, %v2171
        %v2195 = vpack.c.bf16 %v2174, %v2173
        %v2196 = vpack.c.bf16 %v2176, %v2175
        %v2197 = vpack.c.bf16 %v2178, %v2177
        %v2198 = vpack.c.bf16 %v2180, %v2179
        %v2199 = vpack.c.bf16 %v2182, %v2181
        %v2200 = vpack.c.bf16 %v2184, %v2183
        %s2201 = scalar_lea.vmem %s1, 12
        %v2202 = vld [vmem:[%s2201] sm:$0x3]
        %v2204 = vsel %vm363, %v2185, 0
        %v2207 = vsel %vm363, %v2186, 0
        %v2210 = vsel %vm363, %v2187, 0
        %v2213 = vsel %vm363, %v2188, 0
        %v2216 = vsel %vm363, %v2189, 0
        %v2219 = vsel %vm363, %v2190, 0
        %v2222 = vsel %vm363, %v2191, 0
        %v2225 = vsel %vm363, %v2192, 0
        %v2228 = vsel %vm363, %v2193, 0
        %v2231 = vsel %vm363, %v2194, 0
        %v2234 = vsel %vm363, %v2195, 0
        %v2237 = vsel %vm363, %v2196, 0
        %v2240 = vsel %vm363, %v2197, 0
        %v2243 = vsel %vm363, %v2198, 0
        %v2246 = vsel %vm363, %v2199, 0
        %v2249 = vsel %vm363, %v2200, 0
        %v2252 = vsel %vm599, %v2202, 0
        %2254 = vmatprep.subr.bf16.mxu0 0
        %2255 = vmatpush1.bf16.msra.mxu0 %v2252
        %2256 = vmatprep.subr.bf16.mxu0 0
        %2257 = vmatpush1.bf16.msra.mxu0 0
        %2258 = vmatprep.subr.bf16.mxu0 0
        %2259 = vmatpush1.bf16.msra.mxu0 0
        %2260 = vmatprep.subr.bf16.mxu0 0
        %2261 = vmatpush1.bf16.msra.mxu0 0
        %2262 = vmatprep.subr.bf16.mxu0 0
        %2263 = vmatpush1.bf16.msra.mxu0 0
        %2264 = vmatprep.subr.bf16.mxu0 0
        %2265 = vmatpush1.bf16.msra.mxu0 0
        %2266 = vmatprep.subr.bf16.mxu0 0
        %2267 = vmatpush1.bf16.msra.mxu0 0
        %2268 = vmatprep.subr.bf16.mxu0 0
        %2269 = vmatpush1.bf16.msra.mxu0 0
        %2270 = vmatprep.subr.bf16.mxu0 0
        %2271 = vmatpush1.bf16.msra.mxu0 0
        %2272 = vmatprep.subr.bf16.mxu0 0
        %2273 = vmatpush1.bf16.msra.mxu0 0
        %2274 = vmatprep.subr.bf16.mxu0 0
        %2275 = vmatpush1.bf16.msra.mxu0 0
        %2276 = vmatprep.subr.bf16.mxu0 0
        %2277 = vmatpush1.bf16.msra.mxu0 0
        %2278 = vmatprep.subr.bf16.mxu0 0
        %2279 = vmatpush1.bf16.msra.mxu0 0
        %2280 = vmatprep.subr.bf16.mxu0 0
        %2281 = vmatpush1.bf16.msra.mxu0 0
        %2282 = vmatprep.subr.bf16.mxu0 0
        %2283 = vmatpush1.bf16.msra.mxu0 0
        %2284 = vmatprep.subr.bf16.mxu0 0
        %2285 = vmatpush1.bf16.msra.mxu0 0
        %2286 = vmatprep.mubr.bf16.mxu0 0
        %2287 = vmatmul.mubr.bf16.gmra.mrb[0].mxu0 %v2204
        %v2288 = vpop.f32.mrb[0].mxu0
        %v2289 = vadd.f32 0.0, %v2288
        %v2290 = vpop.f32.mrb[0].mxu0
        %v2291 = vpop.f32.mrb[0].mxu0
        %v2292 = vadd.f32 0.0, %v2291
        %v2293 = vpop.f32.mrb[0].mxu0
        %2294 = vmatprep.mubr.bf16.mxu0 0
        %2295 = vmatmul.mubr.bf16.gmra.mrb[0].mxu0 %v2207
        %v2296 = vpop.f32.mrb[0].mxu0
        %v2297 = vadd.f32 0.0, %v2296
        %v2298 = vpop.f32.mrb[0].mxu0
        %v2299 = vpop.f32.mrb[0].mxu0
        %v2300 = vadd.f32 0.0, %v2299
        %v2301 = vpop.f32.mrb[0].mxu0
        %2302 = vmatprep.mubr.bf16.mxu0 0
        %2303 = vmatmul.mubr.bf16.gmra.mrb[0].mxu0 %v2210
        %v2304 = vpop.f32.mrb[0].mxu0
        %v2305 = vadd.f32 0.0, %v2304
        %v2306 = vpop.f32.mrb[0].mxu0
        %v2307 = vpop.f32.mrb[0].mxu0
        %v2308 = vadd.f32 0.0, %v2307
        %v2309 = vpop.f32.mrb[0].mxu0
        %2310 = vmatprep.mubr.bf16.mxu0 0
        %2311 = vmatmul.mubr.bf16.gmra.mrb[0].mxu0 %v2213
        %v2312 = vpop.f32.mrb[0].mxu0
        %v2313 = vadd.f32 0.0, %v2312
        %v2314 = vpop.f32.mrb[0].mxu0
        %v2315 = vpop.f32.mrb[0].mxu0
        %v2316 = vadd.f32 0.0, %v2315
        %v2317 = vpop.f32.mrb[0].mxu0
        %2318 = vmatprep.mubr.bf16.mxu0 0
        %2319 = vmatmul.mubr.bf16.gmra.mrb[0].mxu0 %v2216
        %v2320 = vpop.f32.mrb[0].mxu0
        %v2321 = vadd.f32 0.0, %v2320
        %v2322 = vpop.f32.mrb[0].mxu0
        %v2323 = vpop.f32.mrb[0].mxu0
        %v2324 = vadd.f32 0.0, %v2323
        %v2325 = vpop.f32.mrb[0].mxu0
        %2326 = vmatprep.mubr.bf16.mxu0 0
        %2327 = vmatmul.mubr.bf16.gmra.mrb[0].mxu0 %v2219
        %v2328 = vpop.f32.mrb[0].mxu0
        %v2329 = vadd.f32 0.0, %v2328
        %v2330 = vpop.f32.mrb[0].mxu0
        %v2331 = vpop.f32.mrb[0].mxu0
        %v2332 = vadd.f32 0.0, %v2331
        %v2333 = vpop.f32.mrb[0].mxu0
        %2334 = vmatprep.mubr.bf16.mxu0 0
        %2335 = vmatmul.mubr.bf16.gmra.mrb[0].mxu0 %v2222
        %v2336 = vpop.f32.mrb[0].mxu0
        %v2337 = vadd.f32 0.0, %v2336
        %v2338 = vpop.f32.mrb[0].mxu0
        %v2339 = vpop.f32.mrb[0].mxu0
        %v2340 = vadd.f32 0.0, %v2339
        %v2341 = vpop.f32.mrb[0].mxu0
        %2342 = vmatprep.mubr.bf16.mxu0 0
        %2343 = vmatmul.mubr.bf16.gmra.mrb[0].mxu0 %v2225
        %v2344 = vpop.f32.mrb[0].mxu0
        %v2345 = vadd.f32 0.0, %v2344
        %v2346 = vpop.f32.mrb[0].mxu0
        %v2347 = vpop.f32.mrb[0].mxu0
        %v2348 = vadd.f32 0.0, %v2347
        %v2349 = vpop.f32.mrb[0].mxu0
        %2350 = vmatprep.mubr.bf16.mxu0 0
        %2351 = vmatmul.mubr.bf16.gmra.mrb[0].mxu0 %v2228
        %v2352 = vpop.f32.mrb[0].mxu0
        %v2353 = vadd.f32 0.0, %v2352
        %v2354 = vpop.f32.mrb[0].mxu0
        %v2355 = vpop.f32.mrb[0].mxu0
        %v2356 = vadd.f32 0.0, %v2355
        %v2357 = vpop.f32.mrb[0].mxu0
        %2358 = vmatprep.mubr.bf16.mxu0 0
        %2359 = vmatmul.mubr.bf16.gmra.mrb[0].mxu0 %v2231
        %v2360 = vpop.f32.mrb[0].mxu0
        %v2361 = vadd.f32 0.0, %v2360
        %v2362 = vpop.f32.mrb[0].mxu0
        %v2363 = vpop.f32.mrb[0].mxu0
        %v2364 = vadd.f32 0.0, %v2363
        %v2365 = vpop.f32.mrb[0].mxu0
        %2366 = vmatprep.mubr.bf16.mxu0 0
        %2367 = vmatmul.mubr.bf16.gmra.mrb[0].mxu0 %v2234
        %v2368 = vpop.f32.mrb[0].mxu0
        %v2369 = vadd.f32 0.0, %v2368
        %v2370 = vpop.f32.mrb[0].mxu0
        %v2371 = vpop.f32.mrb[0].mxu0
        %v2372 = vadd.f32 0.0, %v2371
        %v2373 = vpop.f32.mrb[0].mxu0
        %2374 = vmatprep.mubr.bf16.mxu0 0
        %2375 = vmatmul.mubr.bf16.gmra.mrb[0].mxu0 %v2237
        %v2376 = vpop.f32.mrb[0].mxu0
        %v2377 = vadd.f32 0.0, %v2376
        %v2378 = vpop.f32.mrb[0].mxu0
        %v2379 = vpop.f32.mrb[0].mxu0
        %v2380 = vadd.f32 0.0, %v2379
        %v2381 = vpop.f32.mrb[0].mxu0
        %2382 = vmatprep.mubr.bf16.mxu0 0
        %2383 = vmatmul.mubr.bf16.gmra.mrb[0].mxu0 %v2240
        %v2384 = vpop.f32.mrb[0].mxu0
        %v2385 = vadd.f32 0.0, %v2384
        %v2386 = vpop.f32.mrb[0].mxu0
        %v2387 = vpop.f32.mrb[0].mxu0
        %v2388 = vadd.f32 0.0, %v2387
        %v2389 = vpop.f32.mrb[0].mxu0
        %2390 = vmatprep.mubr.bf16.mxu0 0
        %2391 = vmatmul.mubr.bf16.gmra.mrb[0].mxu0 %v2243
        %v2392 = vpop.f32.mrb[0].mxu0
        %v2393 = vadd.f32 0.0, %v2392
        %v2394 = vpop.f32.mrb[0].mxu0
        %v2395 = vpop.f32.mrb[0].mxu0
        %v2396 = vadd.f32 0.0, %v2395
        %v2397 = vpop.f32.mrb[0].mxu0
        %2398 = vmatprep.mubr.bf16.mxu0 0
        %2399 = vmatmul.mubr.bf16.gmra.mrb[0].mxu0 %v2246
        %v2400 = vpop.f32.mrb[0].mxu0
        %v2401 = vadd.f32 0.0, %v2400
        %v2402 = vpop.f32.mrb[0].mxu0
        %v2403 = vpop.f32.mrb[0].mxu0
        %v2404 = vadd.f32 0.0, %v2403
        %v2405 = vpop.f32.mrb[0].mxu0
        %2406 = vmatprep.mubr.bf16.mxu0 0
        %2407 = vmatmul.mubr.bf16.gmra.mrb[0].mxu0 %v2249
        %v2408 = vpop.f32.mrb[0].mxu0
        %v2409 = vadd.f32 0.0, %v2408
        %v2410 = vpop.f32.mrb[0].mxu0
        %v2411 = vpop.f32.mrb[0].mxu0
        %v2412 = vadd.f32 0.0, %v2411
        %v2413 = vpop.f32.mrb[0].mxu0
        %2414 = vdwg.mxu0
        %v2415 = vadd.f32 %v2120, %v2289
        %v2416 = vadd.f32 %v2121, %v2292
        %v2417 = vadd.f32 %v2122, %v2297
        %v2418 = vadd.f32 %v2123, %v2300
        %v2419 = vadd.f32 %v2124, %v2305
        %v2420 = vadd.f32 %v2125, %v2308
        %v2421 = vadd.f32 %v2126, %v2313
        %v2422 = vadd.f32 %v2127, %v2316
        %v2423 = vadd.f32 %v2128, %v2321
        %v2424 = vadd.f32 %v2129, %v2324
        %v2425 = vadd.f32 %v2130, %v2329
        %v2426 = vadd.f32 %v2131, %v2332
        %v2427 = vadd.f32 %v2132, %v2337
        %v2428 = vadd.f32 %v2133, %v2340
        %v2429 = vadd.f32 %v2134, %v2345
        %v2430 = vadd.f32 %v2135, %v2348
        %v2431 = vadd.f32 %v2136, %v2353
        %v2432 = vadd.f32 %v2137, %v2356
        %v2433 = vadd.f32 %v2138, %v2361
        %v2434 = vadd.f32 %v2139, %v2364
        %v2435 = vadd.f32 %v2140, %v2369
        %v2436 = vadd.f32 %v2141, %v2372
        %v2437 = vadd.f32 %v2142, %v2377
        %v2438 = vadd.f32 %v2143, %v2380
        %v2439 = vadd.f32 %v2144, %v2385
        %v2440 = vadd.f32 %v2145, %v2388
        %v2441 = vadd.f32 %v2146, %v2393
        %v2442 = vadd.f32 %v2147, %v2396
        %v2443 = vadd.f32 %v2148, %v2401
        %v2444 = vadd.f32 %v2149, %v2404
        %v2445 = vadd.f32 %v2150, %v2409
        %v2446 = vadd.f32 %v2151, %v2412
        %v2447 = vld [vmem:[%s2152 + $0x1] sm:$0xff]
        %v2448 = vld [vmem:[%s2152 + $0x9] sm:$0xff]
        %v2449 = vld [vmem:[%s2152 + $0x19] sm:$0xff]
        %v2450 = vld [vmem:[%s2152 + $0x21] sm:$0xff]
        %v2451 = vld [vmem:[%s2152 + $0x31] sm:$0xff]
        %v2452 = vld [vmem:[%s2152 + $0x39] sm:$0xff]
        %v2453 = vld [vmem:[%s2152 + $0x49] sm:$0xff]
        %v2454 = vld [vmem:[%s2152 + $0x51] sm:$0xff]
        %v2455 = vld [vmem:[%s2152 + $0x61] sm:$0xff]
        %v2456 = vld [vmem:[%s2152 + $0x69] sm:$0xff]
        %v2457 = vld [vmem:[%s2152 + $0x79] sm:$0xff]
        %v2458 = vld [vmem:[%s2152 + $0x81] sm:$0xff]
        %v2459 = vld [vmem:[%s2152 + $0x91] sm:$0xff]
        %v2460 = vld [vmem:[%s2152 + $0x99] sm:$0xff]
        %v2461 = vld [vmem:[%s2152 + $0xa9] sm:$0xff]
        %v2462 = vld [vmem:[%s2152 + $0xb1] sm:$0xff]
        %v2463 = vld [vmem:[%s2152 + $0xc1] sm:$0xff]
        %v2464 = vld [vmem:[%s2152 + $0xc9] sm:$0xff]
        %v2465 = vld [vmem:[%s2152 + $0xd9] sm:$0xff]
        %v2466 = vld [vmem:[%s2152 + $0xe1] sm:$0xff]
        %v2467 = vld [vmem:[%s2152 + $0xf1] sm:$0xff]
        %v2468 = vld [vmem:[%s2152 + $0xf9] sm:$0xff]
        %v2469 = vld [vmem:[%s2152 + $0x109] sm:$0xff]
        %v2470 = vld [vmem:[%s2152 + $0x111] sm:$0xff]
        %v2471 = vld [vmem:[%s2152 + $0x121] sm:$0xff]
        %v2472 = vld [vmem:[%s2152 + $0x129] sm:$0xff]
        %v2473 = vld [vmem:[%s2152 + $0x139] sm:$0xff]
        %v2474 = vld [vmem:[%s2152 + $0x141] sm:$0xff]
        %v2475 = vld [vmem:[%s2152 + $0x151] sm:$0xff]
        %v2476 = vld [vmem:[%s2152 + $0x159] sm:$0xff]
        %v2477 = vld [vmem:[%s2152 + $0x169] sm:$0xff]
        %v2478 = vld [vmem:[%s2152 + $0x171] sm:$0xff]
        %v2479 = vpack.c.bf16 %v2448, %v2447
        %v2480 = vpack.c.bf16 %v2450, %v2449
        %v2481 = vpack.c.bf16 %v2452, %v2451
        %v2482 = vpack.c.bf16 %v2454, %v2453
        %v2483 = vpack.c.bf16 %v2456, %v2455
        %v2484 = vpack.c.bf16 %v2458, %v2457
        %v2485 = vpack.c.bf16 %v2460, %v2459
        %v2486 = vpack.c.bf16 %v2462, %v2461
        %v2487 = vpack.c.bf16 %v2464, %v2463
        %v2488 = vpack.c.bf16 %v2466, %v2465
        %v2489 = vpack.c.bf16 %v2468, %v2467
        %v2490 = vpack.c.bf16 %v2470, %v2469
        %v2491 = vpack.c.bf16 %v2472, %v2471
        %v2492 = vpack.c.bf16 %v2474, %v2473
        %v2493 = vpack.c.bf16 %v2476, %v2475
        %v2494 = vpack.c.bf16 %v2478, %v2477
        %s2495 = scalar_lea.vmem %s1, 14
        %v2496 = vld [vmem:[%s2495] sm:$0x3]
        %v2498 = vsel %vm363, %v2479, 0
        %v2501 = vsel %vm363, %v2480, 0
        %v2504 = vsel %vm363, %v2481, 0
        %v2507 = vsel %vm363, %v2482, 0
        %v2510 = vsel %vm363, %v2483, 0
        %v2513 = vsel %vm363, %v2484, 0
        %v2516 = vsel %vm363, %v2485, 0
        %v2519 = vsel %vm363, %v2486, 0
        %v2522 = vsel %vm363, %v2487, 0
        %v2525 = vsel %vm363, %v2488, 0
        %v2528 = vsel %vm363, %v2489, 0
        %v2531 = vsel %vm363, %v2490, 0
        %v2534 = vsel %vm363, %v2491, 0
        %v2537 = vsel %vm363, %v2492, 0
        %v2540 = vsel %vm363, %v2493, 0
        %v2543 = vsel %vm363, %v2494, 0
        %v2546 = vsel %vm599, %v2496, 0
        %2548 = vmatprep.subr.bf16.mxu0 0
        %2549 = vmatpush1.bf16.msra.mxu0 %v2546
        %2550 = vmatprep.subr.bf16.mxu0 0
        %2551 = vmatpush1.bf16.msra.mxu0 0
        %2552 = vmatprep.subr.bf16.mxu0 0
        %2553 = vmatpush1.bf16.msra.mxu0 0
        %2554 = vmatprep.subr.bf16.mxu0 0
        %2555 = vmatpush1.bf16.msra.mxu0 0
        %2556 = vmatprep.subr.bf16.mxu0 0
        %2557 = vmatpush1.bf16.msra.mxu0 0
        %2558 = vmatprep.subr.bf16.mxu0 0
        %2559 = vmatpush1.bf16.msra.mxu0 0
        %2560 = vmatprep.subr.bf16.mxu0 0
        %2561 = vmatpush1.bf16.msra.mxu0 0
        %2562 = vmatprep.subr.bf16.mxu0 0
        %2563 = vmatpush1.bf16.msra.mxu0 0
        %2564 = vmatprep.subr.bf16.mxu0 0
        %2565 = vmatpush1.bf16.msra.mxu0 0
        %2566 = vmatprep.subr.bf16.mxu0 0
        %2567 = vmatpush1.bf16.msra.mxu0 0
        %2568 = vmatprep.subr.bf16.mxu0 0
        %2569 = vmatpush1.bf16.msra.mxu0 0
        %2570 = vmatprep.subr.bf16.mxu0 0
        %2571 = vmatpush1.bf16.msra.mxu0 0
        %2572 = vmatprep.subr.bf16.mxu0 0
        %2573 = vmatpush1.bf16.msra.mxu0 0
        %2574 = vmatprep.subr.bf16.mxu0 0
        %2575 = vmatpush1.bf16.msra.mxu0 0
        %2576 = vmatprep.subr.bf16.mxu0 0
        %2577 = vmatpush1.bf16.msra.mxu0 0
        %2578 = vmatprep.subr.bf16.mxu0 0
        %2579 = vmatpush1.bf16.msra.mxu0 0
        %2580 = vmatprep.mubr.bf16.mxu0 0
        %2581 = vmatmul.mubr.bf16.gmra.mrb[0].mxu0 %v2498
        %v2582 = vpop.f32.mrb[0].mxu0
        %v2583 = vadd.f32 0.0, %v2582
        %v2584 = vpop.f32.mrb[0].mxu0
        %v2585 = vpop.f32.mrb[0].mxu0
        %v2586 = vadd.f32 0.0, %v2585
        %v2587 = vpop.f32.mrb[0].mxu0
        %2588 = vmatprep.mubr.bf16.mxu0 0
        %2589 = vmatmul.mubr.bf16.gmra.mrb[0].mxu0 %v2501
        %v2590 = vpop.f32.mrb[0].mxu0
        %v2591 = vadd.f32 0.0, %v2590
        %v2592 = vpop.f32.mrb[0].mxu0
        %v2593 = vpop.f32.mrb[0].mxu0
        %v2594 = vadd.f32 0.0, %v2593
        %v2595 = vpop.f32.mrb[0].mxu0
        %2596 = vmatprep.mubr.bf16.mxu0 0
        %2597 = vmatmul.mubr.bf16.gmra.mrb[0].mxu0 %v2504
        %v2598 = vpop.f32.mrb[0].mxu0
        %v2599 = vadd.f32 0.0, %v2598
        %v2600 = vpop.f32.mrb[0].mxu0
        %v2601 = vpop.f32.mrb[0].mxu0
        %v2602 = vadd.f32 0.0, %v2601
        %v2603 = vpop.f32.mrb[0].mxu0
        %2604 = vmatprep.mubr.bf16.mxu0 0
        %2605 = vmatmul.mubr.bf16.gmra.mrb[0].mxu0 %v2507
        %v2606 = vpop.f32.mrb[0].mxu0
        %v2607 = vadd.f32 0.0, %v2606
        %v2608 = vpop.f32.mrb[0].mxu0
        %v2609 = vpop.f32.mrb[0].mxu0
        %v2610 = vadd.f32 0.0, %v2609
        %v2611 = vpop.f32.mrb[0].mxu0
        %2612 = vmatprep.mubr.bf16.mxu0 0
        %2613 = vmatmul.mubr.bf16.gmra.mrb[0].mxu0 %v2510
        %v2614 = vpop.f32.mrb[0].mxu0
        %v2615 = vadd.f32 0.0, %v2614
        %v2616 = vpop.f32.mrb[0].mxu0
        %v2617 = vpop.f32.mrb[0].mxu0
        %v2618 = vadd.f32 0.0, %v2617
        %v2619 = vpop.f32.mrb[0].mxu0
        %2620 = vmatprep.mubr.bf16.mxu0 0
        %2621 = vmatmul.mubr.bf16.gmra.mrb[0].mxu0 %v2513
        %v2622 = vpop.f32.mrb[0].mxu0
        %v2623 = vadd.f32 0.0, %v2622
        %v2624 = vpop.f32.mrb[0].mxu0
        %v2625 = vpop.f32.mrb[0].mxu0
        %v2626 = vadd.f32 0.0, %v2625
        %v2627 = vpop.f32.mrb[0].mxu0
        %2628 = vmatprep.mubr.bf16.mxu0 0
        %2629 = vmatmul.mubr.bf16.gmra.mrb[0].mxu0 %v2516
        %v2630 = vpop.f32.mrb[0].mxu0
        %v2631 = vadd.f32 0.0, %v2630
        %v2632 = vpop.f32.mrb[0].mxu0
        %v2633 = vpop.f32.mrb[0].mxu0
        %v2634 = vadd.f32 0.0, %v2633
        %v2635 = vpop.f32.mrb[0].mxu0
        %2636 = vmatprep.mubr.bf16.mxu0 0
        %2637 = vmatmul.mubr.bf16.gmra.mrb[0].mxu0 %v2519
        %v2638 = vpop.f32.mrb[0].mxu0
        %v2639 = vadd.f32 0.0, %v2638
        %v2640 = vpop.f32.mrb[0].mxu0
        %v2641 = vpop.f32.mrb[0].mxu0
        %v2642 = vadd.f32 0.0, %v2641
        %v2643 = vpop.f32.mrb[0].mxu0
        %2644 = vmatprep.mubr.bf16.mxu0 0
        %2645 = vmatmul.mubr.bf16.gmra.mrb[0].mxu0 %v2522
        %v2646 = vpop.f32.mrb[0].mxu0
        %v2647 = vadd.f32 0.0, %v2646
        %v2648 = vpop.f32.mrb[0].mxu0
        %v2649 = vpop.f32.mrb[0].mxu0
        %v2650 = vadd.f32 0.0, %v2649
        %v2651 = vpop.f32.mrb[0].mxu0
        %2652 = vmatprep.mubr.bf16.mxu0 0
        %2653 = vmatmul.mubr.bf16.gmra.mrb[0].mxu0 %v2525
        %v2654 = vpop.f32.mrb[0].mxu0
        %v2655 = vadd.f32 0.0, %v2654
        %v2656 = vpop.f32.mrb[0].mxu0
        %v2657 = vpop.f32.mrb[0].mxu0
        %v2658 = vadd.f32 0.0, %v2657
        %v2659 = vpop.f32.mrb[0].mxu0
        %2660 = vmatprep.mubr.bf16.mxu0 0
        %2661 = vmatmul.mubr.bf16.gmra.mrb[0].mxu0 %v2528
        %v2662 = vpop.f32.mrb[0].mxu0
        %v2663 = vadd.f32 0.0, %v2662
        %v2664 = vpop.f32.mrb[0].mxu0
        %v2665 = vpop.f32.mrb[0].mxu0
        %v2666 = vadd.f32 0.0, %v2665
        %v2667 = vpop.f32.mrb[0].mxu0
        %2668 = vmatprep.mubr.bf16.mxu0 0
        %2669 = vmatmul.mubr.bf16.gmra.mrb[0].mxu0 %v2531
        %v2670 = vpop.f32.mrb[0].mxu0
        %v2671 = vadd.f32 0.0, %v2670
        %v2672 = vpop.f32.mrb[0].mxu0
        %v2673 = vpop.f32.mrb[0].mxu0
        %v2674 = vadd.f32 0.0, %v2673
        %v2675 = vpop.f32.mrb[0].mxu0
        %2676 = vmatprep.mubr.bf16.mxu0 0
        %2677 = vmatmul.mubr.bf16.gmra.mrb[0].mxu0 %v2534
        %v2678 = vpop.f32.mrb[0].mxu0
        %v2679 = vadd.f32 0.0, %v2678
        %v2680 = vpop.f32.mrb[0].mxu0
        %v2681 = vpop.f32.mrb[0].mxu0
        %v2682 = vadd.f32 0.0, %v2681
        %v2683 = vpop.f32.mrb[0].mxu0
        %2684 = vmatprep.mubr.bf16.mxu0 0
        %2685 = vmatmul.mubr.bf16.gmra.mrb[0].mxu0 %v2537
        %v2686 = vpop.f32.mrb[0].mxu0
        %v2687 = vadd.f32 0.0, %v2686
        %v2688 = vpop.f32.mrb[0].mxu0
        %v2689 = vpop.f32.mrb[0].mxu0
        %v2690 = vadd.f32 0.0, %v2689
        %v2691 = vpop.f32.mrb[0].mxu0
        %2692 = vmatprep.mubr.bf16.mxu0 0
        %2693 = vmatmul.mubr.bf16.gmra.mrb[0].mxu0 %v2540
        %v2694 = vpop.f32.mrb[0].mxu0
        %v2695 = vadd.f32 0.0, %v2694
        %v2696 = vpop.f32.mrb[0].mxu0
        %v2697 = vpop.f32.mrb[0].mxu0
        %v2698 = vadd.f32 0.0, %v2697
        %v2699 = vpop.f32.mrb[0].mxu0
        %2700 = vmatprep.mubr.bf16.mxu0 0
        %2701 = vmatmul.mubr.bf16.gmra.mrb[0].mxu0 %v2543
        %v2702 = vpop.f32.mrb[0].mxu0
        %v2703 = vadd.f32 0.0, %v2702
        %v2704 = vpop.f32.mrb[0].mxu0
        %v2705 = vpop.f32.mrb[0].mxu0
        %v2706 = vadd.f32 0.0, %v2705
        %v2707 = vpop.f32.mrb[0].mxu0
        %2708 = vdwg.mxu0
        %v2709 = vadd.f32 %v2415, %v2583
        %v2710 = vadd.f32 %v2416, %v2586
        %v2711 = vadd.f32 %v2417, %v2591
        %v2712 = vadd.f32 %v2418, %v2594
        %v2713 = vadd.f32 %v2419, %v2599
        %v2714 = vadd.f32 %v2420, %v2602
        %v2715 = vadd.f32 %v2421, %v2607
        %v2716 = vadd.f32 %v2422, %v2610
        %v2717 = vadd.f32 %v2423, %v2615
        %v2718 = vadd.f32 %v2424, %v2618
        %v2719 = vadd.f32 %v2425, %v2623
        %v2720 = vadd.f32 %v2426, %v2626
        %v2721 = vadd.f32 %v2427, %v2631
        %v2722 = vadd.f32 %v2428, %v2634
        %v2723 = vadd.f32 %v2429, %v2639
        %v2724 = vadd.f32 %v2430, %v2642
        %v2725 = vadd.f32 %v2431, %v2647
        %v2726 = vadd.f32 %v2432, %v2650
        %v2727 = vadd.f32 %v2433, %v2655
        %v2728 = vadd.f32 %v2434, %v2658
        %v2729 = vadd.f32 %v2435, %v2663
        %v2730 = vadd.f32 %v2436, %v2666
        %v2731 = vadd.f32 %v2437, %v2671
        %v2732 = vadd.f32 %v2438, %v2674
        %v2733 = vadd.f32 %v2439, %v2679
        %v2734 = vadd.f32 %v2440, %v2682
        %v2735 = vadd.f32 %v2441, %v2687
        %v2736 = vadd.f32 %v2442, %v2690
        %v2737 = vadd.f32 %v2443, %v2695
        %v2738 = vadd.f32 %v2444, %v2698
        %v2739 = vadd.f32 %v2445, %v2703
        %v2740 = vadd.f32 %v2446, %v2706
        %v2741 = vld [vmem:[%s2152 + $0x2] sm:$0xff]
        %v2742 = vld [vmem:[%s2152 + $0xa] sm:$0xff]
        %v2743 = vld [vmem:[%s2152 + $0x1a] sm:$0xff]
        %v2744 = vld [vmem:[%s2152 + $0x22] sm:$0xff]
        %v2745 = vld [vmem:[%s2152 + $0x32] sm:$0xff]
        %v2746 = vld [vmem:[%s2152 + $0x3a] sm:$0xff]
        %v2747 = vld [vmem:[%s2152 + $0x4a] sm:$0xff]
        %v2748 = vld [vmem:[%s2152 + $0x52] sm:$0xff]
        %v2749 = vld [vmem:[%s2152 + $0x62] sm:$0xff]
        %v2750 = vld [vmem:[%s2152 + $0x6a] sm:$0xff]
        %v2751 = vld [vmem:[%s2152 + $0x7a] sm:$0xff]
        %v2752 = vld [vmem:[%s2152 + $0x82] sm:$0xff]
        %v2753 = vld [vmem:[%s2152 + $0x92] sm:$0xff]
        %v2754 = vld [vmem:[%s2152 + $0x9a] sm:$0xff]
        %v2755 = vld [vmem:[%s2152 + $0xaa] sm:$0xff]
        %v2756 = vld [vmem:[%s2152 + $0xb2] sm:$0xff]
        %v2757 = vld [vmem:[%s2152 + $0xc2] sm:$0xff]
        %v2758 = vld [vmem:[%s2152 + $0xca] sm:$0xff]
        %v2759 = vld [vmem:[%s2152 + $0xda] sm:$0xff]
        %v2760 = vld [vmem:[%s2152 + $0xe2] sm:$0xff]
        %v2761 = vld [vmem:[%s2152 + $0xf2] sm:$0xff]
        %v2762 = vld [vmem:[%s2152 + $0xfa] sm:$0xff]
        %v2763 = vld [vmem:[%s2152 + $0x10a] sm:$0xff]
        %v2764 = vld [vmem:[%s2152 + $0x112] sm:$0xff]
        %v2765 = vld [vmem:[%s2152 + $0x122] sm:$0xff]
        %v2766 = vld [vmem:[%s2152 + $0x12a] sm:$0xff]
        %v2767 = vld [vmem:[%s2152 + $0x13a] sm:$0xff]
        %v2768 = vld [vmem:[%s2152 + $0x142] sm:$0xff]
        %v2769 = vld [vmem:[%s2152 + $0x152] sm:$0xff]
        %v2770 = vld [vmem:[%s2152 + $0x15a] sm:$0xff]
        %v2771 = vld [vmem:[%s2152 + $0x16a] sm:$0xff]
        %v2772 = vld [vmem:[%s2152 + $0x172] sm:$0xff]
        %v2773 = vpack.c.bf16 %v2742, %v2741
        %v2774 = vpack.c.bf16 %v2744, %v2743
        %v2775 = vpack.c.bf16 %v2746, %v2745
        %v2776 = vpack.c.bf16 %v2748, %v2747
        %v2777 = vpack.c.bf16 %v2750, %v2749
        %v2778 = vpack.c.bf16 %v2752, %v2751
        %v2779 = vpack.c.bf16 %v2754, %v2753
        %v2780 = vpack.c.bf16 %v2756, %v2755
        %v2781 = vpack.c.bf16 %v2758, %v2757
        %v2782 = vpack.c.bf16 %v2760, %v2759
        %v2783 = vpack.c.bf16 %v2762, %v2761
        %v2784 = vpack.c.bf16 %v2764, %v2763
        %v2785 = vpack.c.bf16 %v2766, %v2765
        %v2786 = vpack.c.bf16 %v2768, %v2767
        %v2787 = vpack.c.bf16 %v2770, %v2769
        %v2788 = vpack.c.bf16 %v2772, %v2771
        %s2789 = scalar_lea.vmem %s1, 16
        %v2790 = vld [vmem:[%s2789] sm:$0x3]
        %v2792 = vsel %vm363, %v2773, 0
        %v2795 = vsel %vm363, %v2774, 0
        %v2798 = vsel %vm363, %v2775, 0
        %v2801 = vsel %vm363, %v2776, 0
        %v2804 = vsel %vm363, %v2777, 0
        %v2807 = vsel %vm363, %v2778, 0
        %v2810 = vsel %vm363, %v2779, 0
        %v2813 = vsel %vm363, %v2780, 0
        %v2816 = vsel %vm363, %v2781, 0
        %v2819 = vsel %vm363, %v2782, 0
        %v2822 = vsel %vm363, %v2783, 0
        %v2825 = vsel %vm363, %v2784, 0
        %v2828 = vsel %vm363, %v2785, 0
        %v2831 = vsel %vm363, %v2786, 0
        %v2834 = vsel %vm363, %v2787, 0
        %v2837 = vsel %vm363, %v2788, 0
        %v2840 = vsel %vm599, %v2790, 0
        %2842 = vmatprep.subr.bf16.mxu0 0
        %2843 = vmatpush1.bf16.msra.mxu0 %v2840
        %2844 = vmatprep.subr.bf16.mxu0 0
        %2845 = vmatpush1.bf16.msra.mxu0 0
        %2846 = vmatprep.subr.bf16.mxu0 0
        %2847 = vmatpush1.bf16.msra.mxu0 0
        %2848 = vmatprep.subr.bf16.mxu0 0
        %2849 = vmatpush1.bf16.msra.mxu0 0
        %2850 = vmatprep.subr.bf16.mxu0 0
        %2851 = vmatpush1.bf16.msra.mxu0 0
        %2852 = vmatprep.subr.bf16.mxu0 0
        %2853 = vmatpush1.bf16.msra.mxu0 0
        %2854 = vmatprep.subr.bf16.mxu0 0
        %2855 = vmatpush1.bf16.msra.mxu0 0
        %2856 = vmatprep.subr.bf16.mxu0 0
        %2857 = vmatpush1.bf16.msra.mxu0 0
        %2858 = vmatprep.subr.bf16.mxu0 0
        %2859 = vmatpush1.bf16.msra.mxu0 0
        %2860 = vmatprep.subr.bf16.mxu0 0
        %2861 = vmatpush1.bf16.msra.mxu0 0
        %2862 = vmatprep.subr.bf16.mxu0 0
        %2863 = vmatpush1.bf16.msra.mxu0 0
        %2864 = vmatprep.subr.bf16.mxu0 0
        %2865 = vmatpush1.bf16.msra.mxu0 0
        %2866 = vmatprep.subr.bf16.mxu0 0
        %2867 = vmatpush1.bf16.msra.mxu0 0
        %2868 = vmatprep.subr.bf16.mxu0 0
        %2869 = vmatpush1.bf16.msra.mxu0 0
        %2870 = vmatprep.subr.bf16.mxu0 0
        %2871 = vmatpush1.bf16.msra.mxu0 0
        %2872 = vmatprep.subr.bf16.mxu0 0
        %2873 = vmatpush1.bf16.msra.mxu0 0
        %2874 = vmatprep.mubr.bf16.mxu0 0
        %2875 = vmatmul.mubr.bf16.gmra.mrb[0].mxu0 %v2792
        %v2876 = vpop.f32.mrb[0].mxu0
        %v2877 = vadd.f32 0.0, %v2876
        %v2878 = vpop.f32.mrb[0].mxu0
        %v2879 = vpop.f32.mrb[0].mxu0
        %v2880 = vadd.f32 0.0, %v2879
        %v2881 = vpop.f32.mrb[0].mxu0
        %2882 = vmatprep.mubr.bf16.mxu0 0
        %2883 = vmatmul.mubr.bf16.gmra.mrb[0].mxu0 %v2795
        %v2884 = vpop.f32.mrb[0].mxu0
        %v2885 = vadd.f32 0.0, %v2884
        %v2886 = vpop.f32.mrb[0].mxu0
        %v2887 = vpop.f32.mrb[0].mxu0
        %v2888 = vadd.f32 0.0, %v2887
        %v2889 = vpop.f32.mrb[0].mxu0
        %2890 = vmatprep.mubr.bf16.mxu0 0
        %2891 = vmatmul.mubr.bf16.gmra.mrb[0].mxu0 %v2798
        %v2892 = vpop.f32.mrb[0].mxu0
        %v2893 = vadd.f32 0.0, %v2892
        %v2894 = vpop.f32.mrb[0].mxu0
        %v2895 = vpop.f32.mrb[0].mxu0
        %v2896 = vadd.f32 0.0, %v2895
        %v2897 = vpop.f32.mrb[0].mxu0
        %2898 = vmatprep.mubr.bf16.mxu0 0
        %2899 = vmatmul.mubr.bf16.gmra.mrb[0].mxu0 %v2801
        %v2900 = vpop.f32.mrb[0].mxu0
        %v2901 = vadd.f32 0.0, %v2900
        %v2902 = vpop.f32.mrb[0].mxu0
        %v2903 = vpop.f32.mrb[0].mxu0
        %v2904 = vadd.f32 0.0, %v2903
        %v2905 = vpop.f32.mrb[0].mxu0
        %2906 = vmatprep.mubr.bf16.mxu0 0
        %2907 = vmatmul.mubr.bf16.gmra.mrb[0].mxu0 %v2804
        %v2908 = vpop.f32.mrb[0].mxu0
        %v2909 = vadd.f32 0.0, %v2908
        %v2910 = vpop.f32.mrb[0].mxu0
        %v2911 = vpop.f32.mrb[0].mxu0
        %v2912 = vadd.f32 0.0, %v2911
        %v2913 = vpop.f32.mrb[0].mxu0
        %2914 = vmatprep.mubr.bf16.mxu0 0
        %2915 = vmatmul.mubr.bf16.gmra.mrb[0].mxu0 %v2807
        %v2916 = vpop.f32.mrb[0].mxu0
        %v2917 = vadd.f32 0.0, %v2916
        %v2918 = vpop.f32.mrb[0].mxu0
        %v2919 = vpop.f32.mrb[0].mxu0
        %v2920 = vadd.f32 0.0, %v2919
        %v2921 = vpop.f32.mrb[0].mxu0
        %2922 = vmatprep.mubr.bf16.mxu0 0
        %2923 = vmatmul.mubr.bf16.gmra.mrb[0].mxu0 %v2810
        %v2924 = vpop.f32.mrb[0].mxu0
        %v2925 = vadd.f32 0.0, %v2924
        %v2926 = vpop.f32.mrb[0].mxu0
        %v2927 = vpop.f32.mrb[0].mxu0
        %v2928 = vadd.f32 0.0, %v2927
        %v2929 = vpop.f32.mrb[0].mxu0
        %2930 = vmatprep.mubr.bf16.mxu0 0
        %2931 = vmatmul.mubr.bf16.gmra.mrb[0].mxu0 %v2813
        %v2932 = vpop.f32.mrb[0].mxu0
        %v2933 = vadd.f32 0.0, %v2932
        %v2934 = vpop.f32.mrb[0].mxu0
        %v2935 = vpop.f32.mrb[0].mxu0
        %v2936 = vadd.f32 0.0, %v2935
        %v2937 = vpop.f32.mrb[0].mxu0
        %2938 = vmatprep.mubr.bf16.mxu0 0
        %2939 = vmatmul.mubr.bf16.gmra.mrb[0].mxu0 %v2816
        %v2940 = vpop.f32.mrb[0].mxu0
        %v2941 = vadd.f32 0.0, %v2940
        %v2942 = vpop.f32.mrb[0].mxu0
        %v2943 = vpop.f32.mrb[0].mxu0
        %v2944 = vadd.f32 0.0, %v2943
        %v2945 = vpop.f32.mrb[0].mxu0
        %2946 = vmatprep.mubr.bf16.mxu0 0
        %2947 = vmatmul.mubr.bf16.gmra.mrb[0].mxu0 %v2819
        %v2948 = vpop.f32.mrb[0].mxu0
        %v2949 = vadd.f32 0.0, %v2948
        %v2950 = vpop.f32.mrb[0].mxu0
        %v2951 = vpop.f32.mrb[0].mxu0
        %v2952 = vadd.f32 0.0, %v2951
        %v2953 = vpop.f32.mrb[0].mxu0
        %2954 = vmatprep.mubr.bf16.mxu0 0
        %2955 = vmatmul.mubr.bf16.gmra.mrb[0].mxu0 %v2822
        %v2956 = vpop.f32.mrb[0].mxu0
        %v2957 = vadd.f32 0.0, %v2956
        %v2958 = vpop.f32.mrb[0].mxu0
        %v2959 = vpop.f32.mrb[0].mxu0
        %v2960 = vadd.f32 0.0, %v2959
        %v2961 = vpop.f32.mrb[0].mxu0
        %2962 = vmatprep.mubr.bf16.mxu0 0
        %2963 = vmatmul.mubr.bf16.gmra.mrb[0].mxu0 %v2825
        %v2964 = vpop.f32.mrb[0].mxu0
        %v2965 = vadd.f32 0.0, %v2964
        %v2966 = vpop.f32.mrb[0].mxu0
        %v2967 = vpop.f32.mrb[0].mxu0
        %v2968 = vadd.f32 0.0, %v2967
        %v2969 = vpop.f32.mrb[0].mxu0
        %2970 = vmatprep.mubr.bf16.mxu0 0
        %2971 = vmatmul.mubr.bf16.gmra.mrb[0].mxu0 %v2828
        %v2972 = vpop.f32.mrb[0].mxu0
        %v2973 = vadd.f32 0.0, %v2972
        %v2974 = vpop.f32.mrb[0].mxu0
        %v2975 = vpop.f32.mrb[0].mxu0
        %v2976 = vadd.f32 0.0, %v2975
        %v2977 = vpop.f32.mrb[0].mxu0
        %2978 = vmatprep.mubr.bf16.mxu0 0
        %2979 = vmatmul.mubr.bf16.gmra.mrb[0].mxu0 %v2831
        %v2980 = vpop.f32.mrb[0].mxu0
        %v2981 = vadd.f32 0.0, %v2980
        %v2982 = vpop.f32.mrb[0].mxu0
        %v2983 = vpop.f32.mrb[0].mxu0
        %v2984 = vadd.f32 0.0, %v2983
        %v2985 = vpop.f32.mrb[0].mxu0
        %2986 = vmatprep.mubr.bf16.mxu0 0
        %2987 = vmatmul.mubr.bf16.gmra.mrb[0].mxu0 %v2834
        %v2988 = vpop.f32.mrb[0].mxu0
        %v2989 = vadd.f32 0.0, %v2988
        %v2990 = vpop.f32.mrb[0].mxu0
        %v2991 = vpop.f32.mrb[0].mxu0
        %v2992 = vadd.f32 0.0, %v2991
        %v2993 = vpop.f32.mrb[0].mxu0
        %2994 = vmatprep.mubr.bf16.mxu0 0
        %2995 = vmatmul.mubr.bf16.gmra.mrb[0].mxu0 %v2837
        %v2996 = vpop.f32.mrb[0].mxu0
        %v2997 = vadd.f32 0.0, %v2996
        %v2998 = vpop.f32.mrb[0].mxu0
        %v2999 = vpop.f32.mrb[0].mxu0
        %v3000 = vadd.f32 0.0, %v2999
        %v3001 = vpop.f32.mrb[0].mxu0
        %3002 = vdwg.mxu0
        %v3003 = vadd.f32 %v2709, %v2877
        %v3004 = vadd.f32 %v2710, %v2880
        %v3005 = vadd.f32 %v2711, %v2885
        %v3006 = vadd.f32 %v2712, %v2888
        %v3007 = vadd.f32 %v2713, %v2893
        %v3008 = vadd.f32 %v2714, %v2896
        %v3009 = vadd.f32 %v2715, %v2901
        %v3010 = vadd.f32 %v2716, %v2904
        %v3011 = vadd.f32 %v2717, %v2909
        %v3012 = vadd.f32 %v2718, %v2912
        %v3013 = vadd.f32 %v2719, %v2917
        %v3014 = vadd.f32 %v2720, %v2920
        %v3015 = vadd.f32 %v2721, %v2925
        %v3016 = vadd.f32 %v2722, %v2928
        %v3017 = vadd.f32 %v2723, %v2933
        %v3018 = vadd.f32 %v2724, %v2936
        %v3019 = vadd.f32 %v2725, %v2941
        %v3020 = vadd.f32 %v2726, %v2944
        %v3021 = vadd.f32 %v2727, %v2949
        %v3022 = vadd.f32 %v2728, %v2952
        %v3023 = vadd.f32 %v2729, %v2957
        %v3024 = vadd.f32 %v2730, %v2960
        %v3025 = vadd.f32 %v2731, %v2965
        %v3026 = vadd.f32 %v2732, %v2968
        %v3027 = vadd.f32 %v2733, %v2973
        %v3028 = vadd.f32 %v2734, %v2976
        %v3029 = vadd.f32 %v2735, %v2981
        %v3030 = vadd.f32 %v2736, %v2984
        %v3031 = vadd.f32 %v2737, %v2989
        %v3032 = vadd.f32 %v2738, %v2992
        %v3033 = vadd.f32 %v2739, %v2997
        %v3034 = vadd.f32 %v2740, %v3000
        %vm3035 = vcmask 261120
        %v3036 = vsel %vm3035, %v3003, 0.0
        %v3037 = vsel %vm3035, %v3004, 0.0
        %v3038 = vadd.f32 %v3036, %v3037
        %v3039 = vsel %vm3035, %v3005, 0.0
        %v3040 = vadd.f32 %v3038, %v3039
        %v3041 = vsel %vm3035, %v3006, 0.0
        %v3042 = vadd.f32 %v3040, %v3041
        %v3043 = vsel %vm3035, %v3007, 0.0
        %v3044 = vadd.f32 %v3042, %v3043
        %v3045 = vsel %vm3035, %v3008, 0.0
        %v3046 = vadd.f32 %v3044, %v3045
        %v3047 = vsel %vm3035, %v3009, 0.0
        %v3048 = vadd.f32 %v3046, %v3047
        %v3049 = vsel %vm3035, %v3010, 0.0
        %v3050 = vadd.f32 %v3048, %v3049
        %v3051 = vsel %vm3035, %v3011, 0.0
        %v3052 = vadd.f32 %v3050, %v3051
        %v3053 = vsel %vm3035, %v3012, 0.0
        %v3054 = vadd.f32 %v3052, %v3053
        %v3055 = vsel %vm3035, %v3013, 0.0
        %v3056 = vadd.f32 %v3054, %v3055
        %v3057 = vsel %vm3035, %v3014, 0.0
        %v3058 = vadd.f32 %v3056, %v3057
        %v3059 = vsel %vm3035, %v3015, 0.0
        %v3060 = vadd.f32 %v3058, %v3059
        %v3061 = vsel %vm3035, %v3016, 0.0
        %v3062 = vadd.f32 %v3060, %v3061
        %v3063 = vsel %vm3035, %v3017, 0.0
        %v3064 = vadd.f32 %v3062, %v3063
        %v3065 = vsel %vm3035, %v3018, 0.0
        %v3066 = vadd.f32 %v3064, %v3065
        %v3067 = vsel %vm3035, %v3019, 0.0
        %v3068 = vadd.f32 %v3066, %v3067
        %v3069 = vsel %vm3035, %v3020, 0.0
        %v3070 = vadd.f32 %v3068, %v3069
        %v3071 = vsel %vm3035, %v3021, 0.0
        %v3072 = vadd.f32 %v3070, %v3071
        %v3073 = vsel %vm3035, %v3022, 0.0
        %v3074 = vadd.f32 %v3072, %v3073
        %v3075 = vsel %vm3035, %v3023, 0.0
        %v3076 = vadd.f32 %v3074, %v3075
        %v3077 = vsel %vm3035, %v3024, 0.0
        %v3078 = vadd.f32 %v3076, %v3077
        %v3079 = vsel %vm3035, %v3025, 0.0
        %v3080 = vadd.f32 %v3078, %v3079
        %v3081 = vsel %vm3035, %v3026, 0.0
        %v3082 = vadd.f32 %v3080, %v3081
        %v3083 = vsel %vm3035, %v3027, 0.0
        %v3084 = vadd.f32 %v3082, %v3083
        %v3085 = vsel %vm3035, %v3028, 0.0
        %v3086 = vadd.f32 %v3084, %v3085
        %v3087 = vsel %vm3035, %v3029, 0.0
        %v3088 = vadd.f32 %v3086, %v3087
        %v3089 = vsel %vm3035, %v3030, 0.0
        %v3090 = vadd.f32 %v3088, %v3089
        %v3091 = vsel %vm3035, %v3031, 0.0
        %v3092 = vadd.f32 %v3090, %v3091
        %v3093 = vsel %vm3035, %v3032, 0.0
        %v3094 = vadd.f32 %v3092, %v3093
        %v3095 = vsel %vm3035, %v3033, 0.0
        %v3096 = vadd.f32 %v3094, %v3095
        %v3097 = vsel %vm3035, %v3034, 0.0
        %v3098 = vadd.f32 %v3096, %v3097
        %v3099 = vrot.slane %v3098, 4
        %v3100 = vadd.f32 %v3098, %v3099
        %v3101 = vrot.slane %v3100, 2
        %v3102 = vadd.f32 %v3100, %v3101
        %v3103 = vrot.slane %v3102, 1
        %v3104 = vadd.f32 %v3102, %v3103
        %vm3105 = vcmask 253952
        %3106 = vst.msk [vmem:[%s281] sm:$0x1] %vm3105, %v3104
        %v3107 = vmul.f32 %v3003, %v3003
        %v3108 = vmul.f32 %v3004, %v3004
        %v3109 = vmul.f32 %v3005, %v3005
        %v3110 = vmul.f32 %v3006, %v3006
        %v3111 = vmul.f32 %v3007, %v3007
        %v3112 = vmul.f32 %v3008, %v3008
        %v3113 = vmul.f32 %v3009, %v3009
        %v3114 = vmul.f32 %v3010, %v3010
        %v3115 = vmul.f32 %v3011, %v3011
        %v3116 = vmul.f32 %v3012, %v3012
        %v3117 = vmul.f32 %v3013, %v3013
        %v3118 = vmul.f32 %v3014, %v3014
        %v3119 = vmul.f32 %v3015, %v3015
        %v3120 = vmul.f32 %v3016, %v3016
        %v3121 = vmul.f32 %v3017, %v3017
        %v3122 = vmul.f32 %v3018, %v3018
        %v3123 = vmul.f32 %v3019, %v3019
        %v3124 = vmul.f32 %v3020, %v3020
        %v3125 = vmul.f32 %v3021, %v3021
        %v3126 = vmul.f32 %v3022, %v3022
        %v3127 = vmul.f32 %v3023, %v3023
        %v3128 = vmul.f32 %v3024, %v3024
        %v3129 = vmul.f32 %v3025, %v3025
        %v3130 = vmul.f32 %v3026, %v3026
        %v3131 = vmul.f32 %v3027, %v3027
        %v3132 = vmul.f32 %v3028, %v3028
        %v3133 = vmul.f32 %v3029, %v3029
        %v3134 = vmul.f32 %v3030, %v3030
        %v3135 = vmul.f32 %v3031, %v3031
        %v3136 = vmul.f32 %v3032, %v3032
        %v3137 = vmul.f32 %v3033, %v3033
        %v3138 = vmul.f32 %v3034, %v3034
        %v3139 = vsel %vm3035, %v3107, 0.0
        %v3140 = vsel %vm3035, %v3108, 0.0
        %v3141 = vadd.f32 %v3139, %v3140
        %v3142 = vsel %vm3035, %v3109, 0.0
        %v3143 = vadd.f32 %v3141, %v3142
        %v3144 = vsel %vm3035, %v3110, 0.0
        %v3145 = vadd.f32 %v3143, %v3144
        %v3146 = vsel %vm3035, %v3111, 0.0
        %v3147 = vadd.f32 %v3145, %v3146
        %v3148 = vsel %vm3035, %v3112, 0.0
        %v3149 = vadd.f32 %v3147, %v3148
        %v3150 = vsel %vm3035, %v3113, 0.0
        %v3151 = vadd.f32 %v3149, %v3150
        %v3152 = vsel %vm3035, %v3114, 0.0
        %v3153 = vadd.f32 %v3151, %v3152
        %v3154 = vsel %vm3035, %v3115, 0.0
        %v3155 = vadd.f32 %v3153, %v3154
        %v3156 = vsel %vm3035, %v3116, 0.0
        %v3157 = vadd.f32 %v3155, %v3156
        %v3158 = vsel %vm3035, %v3117, 0.0
        %v3159 = vadd.f32 %v3157, %v3158
        %v3160 = vsel %vm3035, %v3118, 0.0
        %v3161 = vadd.f32 %v3159, %v3160
        %v3162 = vsel %vm3035, %v3119, 0.0
        %v3163 = vadd.f32 %v3161, %v3162
        %v3164 = vsel %vm3035, %v3120, 0.0
        %v3165 = vadd.f32 %v3163, %v3164
        %v3166 = vsel %vm3035, %v3121, 0.0
        %v3167 = vadd.f32 %v3165, %v3166
        %v3168 = vsel %vm3035, %v3122, 0.0
        %v3169 = vadd.f32 %v3167, %v3168
        %v3170 = vsel %vm3035, %v3123, 0.0
        %v3171 = vadd.f32 %v3169, %v3170
        %v3172 = vsel %vm3035, %v3124, 0.0
        %v3173 = vadd.f32 %v3171, %v3172
        %v3174 = vsel %vm3035, %v3125, 0.0
        %v3175 = vadd.f32 %v3173, %v3174
        %v3176 = vsel %vm3035, %v3126, 0.0
        %v3177 = vadd.f32 %v3175, %v3176
        %v3178 = vsel %vm3035, %v3127, 0.0
        %v3179 = vadd.f32 %v3177, %v3178
        %v3180 = vsel %vm3035, %v3128, 0.0
        %v3181 = vadd.f32 %v3179, %v3180
        %v3182 = vsel %vm3035, %v3129, 0.0
        %v3183 = vadd.f32 %v3181, %v3182
        %v3184 = vsel %vm3035, %v3130, 0.0
        %v3185 = vadd.f32 %v3183, %v3184
        %v3186 = vsel %vm3035, %v3131, 0.0
        %v3187 = vadd.f32 %v3185, %v3186
        %v3188 = vsel %vm3035, %v3132, 0.0
        %v3189 = vadd.f32 %v3187, %v3188
        %v3190 = vsel %vm3035, %v3133, 0.0
        %v3191 = vadd.f32 %v3189, %v3190
        %v3192 = vsel %vm3035, %v3134, 0.0
        %v3193 = vadd.f32 %v3191, %v3192
        %v3194 = vsel %vm3035, %v3135, 0.0
        %v3195 = vadd.f32 %v3193, %v3194
        %v3196 = vsel %vm3035, %v3136, 0.0
        %v3197 = vadd.f32 %v3195, %v3196
        %v3198 = vsel %vm3035, %v3137, 0.0
        %v3199 = vadd.f32 %v3197, %v3198
        %v3200 = vsel %vm3035, %v3138, 0.0
        %v3201 = vadd.f32 %v3199, %v3200
        %v3202 = vrot.slane %v3201, 4
        %v3203 = vadd.f32 %v3201, %v3202
        %v3204 = vrot.slane %v3203, 2
        %v3205 = vadd.f32 %v3203, %v3204
        %v3206 = vrot.slane %v3205, 1
        %v3207 = vadd.f32 %v3205, %v3206
        %3208 = vst.msk [vmem:[%s287] sm:$0x1] %vm3105, %v3207
        %v3209 = vpack.c.bf16 %v3004, %v3003
        %v3210 = vpack.c.bf16 %v3006, %v3005
        %v3211 = vpack.c.bf16 %v3008, %v3007
        %v3212 = vpack.c.bf16 %v3010, %v3009
        %v3213 = vpack.c.bf16 %v3012, %v3011
        %v3214 = vpack.c.bf16 %v3014, %v3013
        %v3215 = vpack.c.bf16 %v3016, %v3015
        %v3216 = vpack.c.bf16 %v3018, %v3017
        %v3217 = vpack.c.bf16 %v3020, %v3019
        %v3218 = vpack.c.bf16 %v3022, %v3021
        %v3219 = vpack.c.bf16 %v3024, %v3023
        %v3220 = vpack.c.bf16 %v3026, %v3025
        %v3221 = vpack.c.bf16 %v3028, %v3027
        %v3222 = vpack.c.bf16 %v3030, %v3029
        %v3223 = vpack.c.bf16 %v3032, %v3031
        %v3224 = vpack.c.bf16 %v3034, %v3033
        %v3241 = vunpack.c.l.b16 %v3209
        %v3242 = vunpack.c.h.b16 %v3209
        %v3243 = vunpack.c.l.b16 %v3210
        %v3244 = vunpack.c.h.b16 %v3210
        %v3245 = vunpack.c.l.b16 %v3211
        %v3246 = vunpack.c.h.b16 %v3211
        %v3247 = vunpack.c.l.b16 %v3212
        %v3248 = vunpack.c.h.b16 %v3212
        %v3249 = vunpack.c.l.b16 %v3213
        %v3250 = vunpack.c.h.b16 %v3213
        %v3251 = vunpack.c.l.b16 %v3214
        %v3252 = vunpack.c.h.b16 %v3214
        %v3253 = vunpack.c.l.b16 %v3215
        %v3254 = vunpack.c.h.b16 %v3215
        %v3255 = vunpack.c.l.b16 %v3216
        %v3256 = vunpack.c.h.b16 %v3216
        %v3257 = vunpack.c.l.b16 %v3217
        %v3258 = vunpack.c.h.b16 %v3217
        %v3259 = vunpack.c.l.b16 %v3218
        %v3260 = vunpack.c.h.b16 %v3218
        %v3261 = vunpack.c.l.b16 %v3219
        %v3262 = vunpack.c.h.b16 %v3219
        %v3263 = vunpack.c.l.b16 %v3220
        %v3264 = vunpack.c.h.b16 %v3220
        %v3265 = vunpack.c.l.b16 %v3221
        %v3266 = vunpack.c.h.b16 %v3221
        %v3267 = vunpack.c.l.b16 %v3222
        %v3268 = vunpack.c.h.b16 %v3222
        %v3269 = vunpack.c.l.b16 %v3223
        %v3270 = vunpack.c.h.b16 %v3223
        %v3271 = vunpack.c.l.b16 %v3224
        %v3272 = vunpack.c.h.b16 %v3224
        %v3273 = vpack.c.b16 %v3241, %v3241
        %v3274 = vpack.c.b16 %v3242, %v3242
        %v3275 = vpack.c.b16 %v3243, %v3243
        %v3276 = vpack.c.b16 %v3244, %v3244
        %v3277 = vpack.c.b16 %v3245, %v3245
        %v3278 = vpack.c.b16 %v3246, %v3246
        %v3279 = vpack.c.b16 %v3247, %v3247
        %v3280 = vpack.c.b16 %v3248, %v3248
        %v3281 = vpack.c.b16 %v3249, %v3249
        %v3282 = vpack.c.b16 %v3250, %v3250
        %v3283 = vpack.c.b16 %v3251, %v3251
        %v3284 = vpack.c.b16 %v3252, %v3252
        %v3285 = vpack.c.b16 %v3253, %v3253
        %v3286 = vpack.c.b16 %v3254, %v3254
        %v3287 = vpack.c.b16 %v3255, %v3255
        %v3288 = vpack.c.b16 %v3256, %v3256
        %v3289 = vpack.c.b16 %v3257, %v3257
        %v3290 = vpack.c.b16 %v3258, %v3258
        %v3291 = vpack.c.b16 %v3259, %v3259
        %v3292 = vpack.c.b16 %v3260, %v3260
        %v3293 = vpack.c.b16 %v3261, %v3261
        %v3294 = vpack.c.b16 %v3262, %v3262
        %v3295 = vpack.c.b16 %v3263, %v3263
        %v3296 = vpack.c.b16 %v3264, %v3264
        %v3297 = vpack.c.b16 %v3265, %v3265
        %v3298 = vpack.c.b16 %v3266, %v3266
        %v3299 = vpack.c.b16 %v3267, %v3267
        %v3300 = vpack.c.b16 %v3268, %v3268
        %v3301 = vpack.c.b16 %v3269, %v3269
        %v3302 = vpack.c.b16 %v3270, %v3270
        %v3303 = vpack.c.b16 %v3271, %v3271
        %v3304 = vpack.c.b16 %v3272, %v3272
        %vm3337 = vcmask 257024
        %3338 = vst.msk [vmem:[%s297] sm:$0xf] %vm3337, %v3273
        %3339 = vst.msk [vmem:[%s297 + $0x4] sm:$0xf] %vm3337, %v3274
        %3340 = vst.msk [vmem:[%s297 + $0x8] sm:$0xf] %vm3337, %v3275
        %3341 = vst.msk [vmem:[%s297 + $0xc] sm:$0xf] %vm3337, %v3276
        %3342 = vst.msk [vmem:[%s297 + $0x10] sm:$0xf] %vm3337, %v3277
        %3343 = vst.msk [vmem:[%s297 + $0x14] sm:$0xf] %vm3337, %v3278
        %3344 = vst.msk [vmem:[%s297 + $0x18] sm:$0xf] %vm3337, %v3279
        %3345 = vst.msk [vmem:[%s297 + $0x1c] sm:$0xf] %vm3337, %v3280
        %3346 = vst.msk [vmem:[%s297 + $0x20] sm:$0xf] %vm3337, %v3281
        %3347 = vst.msk [vmem:[%s297 + $0x24] sm:$0xf] %vm3337, %v3282
        %3348 = vst.msk [vmem:[%s297 + $0x28] sm:$0xf] %vm3337, %v3283
        %3349 = vst.msk [vmem:[%s297 + $0x2c] sm:$0xf] %vm3337, %v3284
        %3350 = vst.msk [vmem:[%s297 + $0x30] sm:$0xf] %vm3337, %v3285
        %3351 = vst.msk [vmem:[%s297 + $0x34] sm:$0xf] %vm3337, %v3286
        %3352 = vst.msk [vmem:[%s297 + $0x38] sm:$0xf] %vm3337, %v3287
        %3353 = vst.msk [vmem:[%s297 + $0x3c] sm:$0xf] %vm3337, %v3288
        %3354 = vst.msk [vmem:[%s297 + $0x40] sm:$0xf] %vm3337, %v3289
        %3355 = vst.msk [vmem:[%s297 + $0x44] sm:$0xf] %vm3337, %v3290
        %3356 = vst.msk [vmem:[%s297 + $0x48] sm:$0xf] %vm3337, %v3291
        %3357 = vst.msk [vmem:[%s297 + $0x4c] sm:$0xf] %vm3337, %v3292
        %3358 = vst.msk [vmem:[%s297 + $0x50] sm:$0xf] %vm3337, %v3293
        %3359 = vst.msk [vmem:[%s297 + $0x54] sm:$0xf] %vm3337, %v3294
        %3360 = vst.msk [vmem:[%s297 + $0x58] sm:$0xf] %vm3337, %v3295
        %3361 = vst.msk [vmem:[%s297 + $0x5c] sm:$0xf] %vm3337, %v3296
        %3362 = vst.msk [vmem:[%s297 + $0x60] sm:$0xf] %vm3337, %v3297
        %3363 = vst.msk [vmem:[%s297 + $0x64] sm:$0xf] %vm3337, %v3298
        %3364 = vst.msk [vmem:[%s297 + $0x68] sm:$0xf] %vm3337, %v3299
        %3365 = vst.msk [vmem:[%s297 + $0x6c] sm:$0xf] %vm3337, %v3300
        %3366 = vst.msk [vmem:[%s297 + $0x70] sm:$0xf] %vm3337, %v3301
        %3367 = vst.msk [vmem:[%s297 + $0x74] sm:$0xf] %vm3337, %v3302
        %3368 = vst.msk [vmem:[%s297 + $0x78] sm:$0xf] %vm3337, %v3303
        %3369 = vst.msk [vmem:[%s297 + $0x7c] sm:$0xf] %vm3337, %v3304
        %p3370 = scmp.lt.s32.totalorder %s25, 1
        %s3371 = scalar_select %p3370, %s25, 1
        %s3372 = smul.addr %s3371, 32
        %s3373 = smul.addr %s3372, 4
        %s3374 = scalar_lea.vmem %s5, %s3373
        %s3375 = sand.u32 %s169, 1
        %s3376 = scalar_lea.sflag [#allocation4], %s3375
        %s3377 = sand.u32 %s169, 1
        %s3378 = scalar_lea.vmem [#allocation3], %s3377
        %s3379 = sand.u32 %s195, 1
        %s3380 = scalar_lea.sflag [#allocation6], %s3379
        %s3381 = sand.u32 %s195, 1
        %s3382 = scalar_lea.vmem [#allocation5], %s3381
        // Predicated region
        $region41: #{tpu_custom_call.1} parent=39 // pred_check
          %p3383 = pneg %p153
        $region42: #{tpu_custom_call.1} parent=39 // pred_check_branch
          %3385 = sbr.rel (%p3383) target = $region44
        $region43: #{tpu_custom_call.1} parent=39 // pred_region
          _
        $region44: #{tpu_custom_call.1} parent=39 // pred_fallthru
          _
        // Predicated region
        $region45: #{tpu_custom_call.1} parent=39 // pred_check
          %p3386 = pneg %p179
        $region46: #{tpu_custom_call.1} parent=39 // pred_check_branch
          %3388 = sbr.rel (%p3386) target = $region48
        $region47: #{tpu_custom_call.1} parent=39 // pred_region
          %s3390 = ssub.s32 16, 16
          %3391 = vsyncadd %s3376, %s3390
          %s3392 = smul.addr %s25, 16
          %s3393 = scalar_lea.hbm %s6, %s3392
          %s3395 = sshll.u32 %s3378, 4
          %s3396 = int_to_ptr.vmem [resolvable:$true] %s3395
          %3398 = dma.vmem_to_hbm [thread:$0]  %s3396, 16, %s3393, %s3376
        $region48: #{tpu_custom_call.1} parent=39 // pred_fallthru
          _
        // Predicated region
        $region49: #{tpu_custom_call.1} parent=39 // pred_check
          %p3399 = pneg %p205
        $region50: #{tpu_custom_call.1} parent=39 // pred_check_branch
          %3401 = sbr.rel (%p3399) target = $region52
        $region51: #{tpu_custom_call.1} parent=39 // pred_region
          %s3403 = ssub.s32 16, 16
          %3404 = vsyncadd %s3380, %s3403
          %s3405 = smul.addr %s25, 16
          %s3406 = scalar_lea.hbm %s7, %s3405
          %s3408 = sshll.u32 %s3382, 4
          %s3409 = int_to_ptr.vmem [resolvable:$true] %s3408
          %3411 = dma.vmem_to_hbm [thread:$0]  %s3409, 16, %s3406, %s3380
        $region52: #{tpu_custom_call.1} parent=39 // pred_fallthru
          _
      $region40: #{tpu_custom_call.1} parent=5 // pred_fallthru
        _
      %p3412 = scmp.le.s32.totalorder 2, %s20
      // Predicated region
      $region53: #{tpu_custom_call.1} parent=5 // pred_check
        %p3413 = pneg %p3412
      $region54: #{tpu_custom_call.1} parent=5 // pred_check_branch
        %3415 = sbr.rel (%p3413) target = $region56
      $region55: #{tpu_custom_call.1} parent=5 // pred_region
        %s3416 = ssub.s32 %s20, 2
        // Predicated region
        $region57: #{tpu_custom_call.1} parent=55 // pred_check
          %p3417 = pneg %p159
        $region58: #{tpu_custom_call.1} parent=55 // pred_check_branch
          %3419 = sbr.rel (%p3417) target = $region60
        $region59: #{tpu_custom_call.1} parent=55 // pred_region
          %p3420 = scmp.lt.s32.totalorder %s26, 1
          %s3421 = scalar_select %p3420, %s26, 1
          %s3422 = smul.addr %s3421, 32
          %s3423 = smul.addr %s3422, 4
          %s3424 = scalar_lea.vmem %s5, %s3423
        $region60: #{tpu_custom_call.1} parent=55 // pred_fallthru
          _
        // Predicated region
        $region61: #{tpu_custom_call.1} parent=55 // pred_check
          %p3425 = pneg %p185
        $region62: #{tpu_custom_call.1} parent=55 // pred_check_branch
          %3427 = sbr.rel (%p3425) target = $region64
        $region63: #{tpu_custom_call.1} parent=55 // pred_region
          %s3428 = sand.u32 %s170, 1
          %s3429 = scalar_lea.sflag [#allocation4], %s3428
          %s3430 = sand.u32 %s170, 1
          %s3431 = scalar_lea.vmem [#allocation3], %s3430
          %3432 = dma.done %s3429, 16
        $region64: #{tpu_custom_call.1} parent=55 // pred_fallthru
          _
        // Predicated region
        $region65: #{tpu_custom_call.1} parent=55 // pred_check
          %p3433 = pneg %p211
        $region66: #{tpu_custom_call.1} parent=55 // pred_check_branch
          %3435 = sbr.rel (%p3433) target = $region68
        $region67: #{tpu_custom_call.1} parent=55 // pred_region
          %s3436 = sand.u32 %s196, 1
          %s3437 = scalar_lea.sflag [#allocation6], %s3436
          %s3438 = sand.u32 %s196, 1
          %s3439 = scalar_lea.vmem [#allocation5], %s3438
          %3440 = dma.done %s3437, 16
        $region68: #{tpu_custom_call.1} parent=55 // pred_fallthru
          _
      $region56: #{tpu_custom_call.1} parent=5 // pred_fallthru
        _
    $region6: #{tpu_custom_call.1} parent=1 // loop_footer
      %s24 = sadd.s32 1, %s20
    $region7: #{tpu_custom_call.1} parent=1 // loop_footer_branch
      %19 = sbr.rel target = $region3
    $region8: #{tpu_custom_call.1} parent=1 // loop_exit
      _
    %3441 = vsyncpa [#allocation4], 1
    %s3442 = scalar_lea.sflag [#allocation4], 1
    %3443 = vsyncpa %s3442, 1
    %3444 = vsyncpa [#allocation6], 1
    %s3445 = scalar_lea.sflag [#allocation6], 1
    %3446 = vsyncpa %s3445, 1

</llo_original>
